<compile_context>
chip_gen: v7x
topology: tpu7x:2x2x1
jax: 0.10.0
libtpu: 0.0.40
codegen_flags: <defaults>
</compile_context>

<pallas_src>
import functools

import jax
import jax.numpy as jnp
from jax import lax
from jax.experimental import pallas as pl
from jax.experimental.pallas import tpu as pltpu


def _pick_row_tile(H):
    if H <= 16:
        return H
    for t in (16, 8):
        if H % t == 0:
            return t
    return H


def _pick_cout_tile(Cout):
    if Cout >= 256 and Cout % 256 == 0:
        return 256
    if Cout >= 128 and Cout % 128 == 0:
        return 128
    return Cout


def _upsample_conv_kernel(x_ref, w_ref, b_ref, o_ref, *, TH, W):
    # x_ref : (1, 1, TH+2, W+2, C)   padded input row-tile (halo rows included)
    # w_ref : (2, 2, 2, 2, C, TCo)   folded weights [py, px, uy, ux, c, o]
    # b_ref : (1, TCo)               bias, already f32
    # o_ref : (1, 4, TH, W, TCo)     parity planes, plane index p = 2*py + px
    bias = b_ref[0][None, None, :]                      # (1, 1, TCo) f32

    xt = x_ref[0, 0]                                    # (TH+2, W+2, C)
    # Three column-shifted slabs (sx offsets 0/1/2); each parity uses two.
    xcol = [xt[:, ox:ox + W, :] for ox in range(3)]

    for py in range(2):
        for px in range(2):
            acc = None
            for uy in range(2):
                for ux in range(2):
                    patch = xcol[px + ux][py + uy:py + uy + TH]   # (TH, W, C)
                    wt = w_ref[py, px, uy, ux]                    # (C, TCo)
                    contrib = lax.dot_general(
                        patch, wt,
                        dimension_numbers=(((2,), (0,)), ((), ())),
                        preferred_element_type=jnp.float32)
                    acc = contrib if acc is None else acc + contrib
            o_ref[0, 2 * py + px] = (acc + bias).astype(o_ref.dtype)


def upsample_forward(x_nchw, w_oihw, bias, *, use_conv=True, compute_dtype=None):
    """Forward of `Upsample(channels, use_conv, dims=2)`.

    x_nchw : (B, C, H, W) -> (B, Cout, 2H, 2W), matching PyTorch.
    w_oihw : (Cout, C, 3, 3), bias: (Cout,).
    compute_dtype: e.g. jnp.bfloat16 to feed the MXU bf16 (f32 accumulation).
    """
    B, C, H, W = x_nchw.shape
    if not use_conv:
        # nearest 2x upsample only (pure data movement, no compute hot path)
        return jnp.repeat(jnp.repeat(x_nchw, 2, axis=2), 2, axis=3)

    Cout = w_oihw.shape[0]
    out_dtype = x_nchw.dtype
    cdt = compute_dtype or x_nchw.dtype

    # ---- wrapper-side layout & weight prep (pure glue) ----
    x_nhwc = jnp.transpose(x_nchw, (0, 2, 3, 1))                       # (B,H,W,C)
    x_pad = jnp.pad(x_nhwc, ((0, 0), (1, 1), (1, 1), (0, 0))).astype(cdt)

    th = _pick_row_tile(H)
    nH = H // th
    if nH == 1:
        x_blk = x_pad[:, None]                                          # (B,1,H+2,W+2,C)
    else:
        # replicate the 2 halo rows per row-block so BlockSpec tiles are disjoint
        x_blk = jnp.stack(
            [x_pad[:, t * th:t * th + th + 2] for t in range(nH)], axis=1)

    tco = _pick_cout_tile(Cout)
    nCo = Cout // tco

    # Fold the 9 conv taps down to 4 per parity: F[p, u, d] selects which taps d
    # share source shift u for parity p (exact, no numerics change).
    w_kern = jnp.transpose(w_oihw, (2, 3, 1, 0))                        # (3,3,C,Cout)
    F = jnp.array([[[1., 0., 0.], [0., 1., 1.]],
                   [[1., 1., 0.], [0., 0., 1.]]], dtype=w_kern.dtype)   # (2,2,3)
    w_fold = jnp.einsum('ayd,bxe,deco->abyxco', F, F, w_kern).astype(cdt)
    b_kern = bias.astype(jnp.float32).reshape(1, Cout)

    kernel = functools.partial(_upsample_conv_kernel, TH=th, W=W)

    planes = pl.pallas_call(
        kernel,
        out_shape=jax.ShapeDtypeStruct((B, 4, H, W, Cout), out_dtype),
        grid_spec=pltpu.PrefetchScalarGridSpec(
            num_scalar_prefetch=0,
            grid=(B, nCo, nH),
            in_specs=[
                pl.BlockSpec((1, 1, th + 2, W + 2, C),
                             lambda b, co, t: (b, t, 0, 0, 0)),
                pl.BlockSpec((2, 2, 2, 2, C, tco),
                             lambda b, co, t: (0, 0, 0, 0, 0, co)),
                pl.BlockSpec((1, tco), lambda b, co, t: (0, co)),
            ],
            out_specs=pl.BlockSpec((1, 4, th, W, tco),
                                   lambda b, co, t: (b, 0, t, 0, co)),
        ),
        compiler_params=pltpu.CompilerParams(
            dimension_semantics=("parallel", "parallel", "parallel"),
            vmem_limit_bytes=32 * 1024 * 1024),
    )(x_blk, w_fold, b_kern)

    # Single fused glue transpose: parity interleave + NHWC -> NCHW.
    # out[b, c, 2i+py, 2j+px] = planes[b, py, px, i, j, c]
    planes = planes.reshape(B, 2, 2, H, W, Cout)
    out = jnp.transpose(planes, (0, 5, 3, 1, 4, 2)).reshape(B, Cout, 2 * H, 2 * W)
    return out


def upsample_forward_ref(x_nchw, w_oihw, bias):
    """Pure-JAX reference: F.interpolate(nearest, x2) + conv2d(3x3, pad=1)."""
    xu = jnp.repeat(jnp.repeat(x_nchw, 2, axis=2), 2, axis=3)
    y = lax.conv_general_dilated(
        xu, w_oihw, window_strides=(1, 1), padding=((1, 1), (1, 1)),
        dimension_numbers=("NCHW", "OIHW", "NCHW"))
    return y + bias[None, :, None, None]


if __name__ == "__main__":
    key = jax.random.PRNGKey(0)
    keys = jax.random.split(key, 6)

    # Case 1: required small shapes (B=2, C=4, 16x16), out_channels = channels.
    B, C, H, W = 2, 4, 16, 16
    Cout = C
    x = jax.random.normal(keys[0], (B, C, H, W), dtype=jnp.float32)
    w = jax.random.normal(keys[1], (Cout, C, 3, 3), dtype=jnp.float32) * 0.1
    b = jax.random.normal(keys[2], (Cout,), dtype=jnp.float32) * 0.1
    out = jax.block_until_ready(upsample_forward(x, w, b, use_conv=True))
    ref = upsample_forward_ref(x, w, b)
    assert out.shape == (B, Cout, 2 * H, 2 * W), out.shape
    assert jnp.allclose(out, ref, atol=1e-4, rtol=1e-4), float(
        jnp.max(jnp.abs(out - ref)))

    # Case 2: exercises the row-tiled path (nH=2) and out_channels != channels.
    B2, C2, H2, W2, Cout2 = 1, 4, 32, 32, 6
    x2 = jax.random.normal(keys[3], (B2, C2, H2, W2), dtype=jnp.float32)
    w2 = jax.random.normal(keys[4], (Cout2, C2, 3, 3), dtype=jnp.float32) * 0.1
    b2 = jax.random.normal(keys[5], (Cout2,), dtype=jnp.float32) * 0.1
    out2 = jax.block_until_ready(upsample_forward(x2, w2, b2, use_conv=True))
    ref2 = upsample_forward_ref(x2, w2, b2)
    assert out2.shape == (B2, Cout2, 2 * H2, 2 * W2), out2.shape
    assert jnp.allclose(out2, ref2, atol=1e-4, rtol=1e-4), float(
        jnp.max(jnp.abs(out2 - ref2)))

    print("KERNEL_OK")
</pallas_src>

<mosaic_0001>
module attributes {stable_mosaic.version = 11 : i64} {
  func.func @_upsample_conv_kernel(%arg0: i32, %arg1: i32, %arg2: i32, %arg3: memref<1x1x18x18x4xf32, #tpu.memory_space<vmem>>, %arg4: memref<2x2x2x2x4x4xf32, #tpu.memory_space<vmem>>, %arg5: memref<1x4xf32, #tpu.memory_space<vmem>>, %arg6: memref<1x4x16x16x4xf32, #tpu.memory_space<vmem>>) attributes {dimension_semantics = [#tpu.dimension_semantics<parallel>, #tpu.dimension_semantics<parallel>, #tpu.dimension_semantics<parallel>], iteration_bounds = array<i64: 2, 1, 1>, scalar_prefetch = 0 : i64, scratch_operands = 0 : i64, tpu.core_type = #tpu.core_type<tc>, window_params = [{transform_indices = @transform_0, window_bounds = array<i64: 1, 1, 18, 18, 4>}, {transform_indices = @transform_1, window_bounds = array<i64: 2, 2, 2, 2, 4, 4>}, {transform_indices = @transform_2, window_bounds = array<i64: 1, 4>}, {transform_indices = @transform_3, window_bounds = array<i64: 1, 4, 16, 16, 4>}]} {
    %c0 = arith.constant 0 : index
    %c0_0 = arith.constant 0 : index
    %0 = vector.load %arg5[%c0, %c0_0] : memref<1x4xf32, #tpu.memory_space<vmem>>, vector<1x4xf32>
    %1 = vector.shape_cast %0 : vector<1x4xf32> to vector<4xf32>
    %2 = vector.shape_cast %1 : vector<4xf32> to vector<1x1x4xf32>
    %c0_1 = arith.constant 0 : index
    %c0_2 = arith.constant 0 : index
    %c0_3 = arith.constant 0 : index
    %c0_4 = arith.constant 0 : index
    %c0_5 = arith.constant 0 : index
    %3 = vector.load %arg3[%c0_1, %c0_2, %c0_3, %c0_4, %c0_5] : memref<1x1x18x18x4xf32, #tpu.memory_space<vmem>>, vector<1x1x18x18x4xf32>
    %4 = vector.shape_cast %3 : vector<1x1x18x18x4xf32> to vector<18x18x4xf32>
    %5 = vector.extract_strided_slice %4 {offsets = [0, 0, 0], sizes = [18, 16, 4], strides = [1, 1, 1]} : vector<18x18x4xf32> to vector<18x16x4xf32>
    %6 = vector.extract_strided_slice %4 {offsets = [0, 1, 0], sizes = [18, 16, 4], strides = [1, 1, 1]} : vector<18x18x4xf32> to vector<18x16x4xf32>
    %7 = vector.extract_strided_slice %4 {offsets = [0, 2, 0], sizes = [18, 16, 4], strides = [1, 1, 1]} : vector<18x18x4xf32> to vector<18x16x4xf32>
    %8 = vector.extract_strided_slice %5 {offsets = [0, 0, 0], sizes = [16, 16, 4], strides = [1, 1, 1]} : vector<18x16x4xf32> to vector<16x16x4xf32>
    %c0_6 = arith.constant 0 : index
    %c0_7 = arith.constant 0 : index
    %c0_8 = arith.constant 0 : index
    %c0_9 = arith.constant 0 : index
    %c0_10 = arith.constant 0 : index
    %c0_11 = arith.constant 0 : index
    %9 = vector.load %arg4[%c0_6, %c0_7, %c0_8, %c0_9, %c0_10, %c0_11] : memref<2x2x2x2x4x4xf32, #tpu.memory_space<vmem>>, vector<1x1x1x1x4x4xf32>
    %10 = vector.shape_cast %9 : vector<1x1x1x1x4x4xf32> to vector<4x4xf32>
    %cst = arith.constant dense<0.000000e+00> : vector<16x16x4xf32>
    %11 = tpu.matmul %8, %10, %cst {dimension_numbers = #tpu.dot_dimension_numbers<[2], [0], [0, 1], [1], [0, 0, 0, 1, 1, 1], [], []>} : vector<16x16x4xf32>, vector<4x4xf32>, vector<16x16x4xf32> -> vector<16x16x4xf32>
    %12 = vector.extract_strided_slice %6 {offsets = [0, 0, 0], sizes = [16, 16, 4], strides = [1, 1, 1]} : vector<18x16x4xf32> to vector<16x16x4xf32>
    %c0_12 = arith.constant 0 : index
    %c0_13 = arith.constant 0 : index
    %c0_14 = arith.constant 0 : index
    %c1 = arith.constant 1 : index
    %c0_15 = arith.constant 0 : index
    %c0_16 = arith.constant 0 : index
    %13 = vector.load %arg4[%c0_12, %c0_13, %c0_14, %c1, %c0_15, %c0_16] : memref<2x2x2x2x4x4xf32, #tpu.memory_space<vmem>>, vector<1x1x1x1x4x4xf32>
    %14 = vector.shape_cast %13 : vector<1x1x1x1x4x4xf32> to vector<4x4xf32>
    %cst_17 = arith.constant dense<0.000000e+00> : vector<16x16x4xf32>
    %15 = tpu.matmul %12, %14, %cst_17 {dimension_numbers = #tpu.dot_dimension_numbers<[2], [0], [0, 1], [1], [0, 0, 0, 1, 1, 1], [], []>} : vector<16x16x4xf32>, vector<4x4xf32>, vector<16x16x4xf32> -> vector<16x16x4xf32>
    %16 = arith.addf %11, %15 : vector<16x16x4xf32>
    %17 = vector.extract_strided_slice %5 {offsets = [1, 0, 0], sizes = [16, 16, 4], strides = [1, 1, 1]} : vector<18x16x4xf32> to vector<16x16x4xf32>
    %c0_18 = arith.constant 0 : index
    %c0_19 = arith.constant 0 : index
    %c1_20 = arith.constant 1 : index
    %c0_21 = arith.constant 0 : index
    %c0_22 = arith.constant 0 : index
    %c0_23 = arith.constant 0 : index
    %18 = vector.load %arg4[%c0_18, %c0_19, %c1_20, %c0_21, %c0_22, %c0_23] : memref<2x2x2x2x4x4xf32, #tpu.memory_space<vmem>>, vector<1x1x1x1x4x4xf32>
    %19 = vector.shape_cast %18 : vector<1x1x1x1x4x4xf32> to vector<4x4xf32>
    %cst_24 = arith.constant dense<0.000000e+00> : vector<16x16x4xf32>
    %20 = tpu.matmul %17, %19, %cst_24 {dimension_numbers = #tpu.dot_dimension_numbers<[2], [0], [0, 1], [1], [0, 0, 0, 1, 1, 1], [], []>} : vector<16x16x4xf32>, vector<4x4xf32>, vector<16x16x4xf32> -> vector<16x16x4xf32>
    %21 = arith.addf %16, %20 : vector<16x16x4xf32>
    %22 = vector.extract_strided_slice %6 {offsets = [1, 0, 0], sizes = [16, 16, 4], strides = [1, 1, 1]} : vector<18x16x4xf32> to vector<16x16x4xf32>
    %c0_25 = arith.constant 0 : index
    %c0_26 = arith.constant 0 : index
    %c1_27 = arith.constant 1 : index
    %c1_28 = arith.constant 1 : index
    %c0_29 = arith.constant 0 : index
    %c0_30 = arith.constant 0 : index
    %23 = vector.load %arg4[%c0_25, %c0_26, %c1_27, %c1_28, %c0_29, %c0_30] : memref<2x2x2x2x4x4xf32, #tpu.memory_space<vmem>>, vector<1x1x1x1x4x4xf32>
    %24 = vector.shape_cast %23 : vector<1x1x1x1x4x4xf32> to vector<4x4xf32>
    %cst_31 = arith.constant dense<0.000000e+00> : vector<16x16x4xf32>
    %25 = tpu.matmul %22, %24, %cst_31 {dimension_numbers = #tpu.dot_dimension_numbers<[2], [0], [0, 1], [1], [0, 0, 0, 1, 1, 1], [], []>} : vector<16x16x4xf32>, vector<4x4xf32>, vector<16x16x4xf32> -> vector<16x16x4xf32>
    %26 = arith.addf %21, %25 : vector<16x16x4xf32>
    %27 = vector.broadcast %2 : vector<1x1x4xf32> to vector<16x16x4xf32>
    %28 = arith.addf %26, %27 : vector<16x16x4xf32>
    %c0_32 = arith.constant 0 : index
    %c0_33 = arith.constant 0 : index
    %c0_34 = arith.constant 0 : index
    %c0_35 = arith.constant 0 : index
    %c0_36 = arith.constant 0 : index
    %29 = vector.load %arg6[%c0_32, %c0_33, %c0_34, %c0_35, %c0_36] : memref<1x4x16x16x4xf32, #tpu.memory_space<vmem>>, vector<1x1x16x16x4xf32>
    %30 = vector.shape_cast %29 : vector<1x1x16x16x4xf32> to vector<16x16x4xf32>
    %31 = vector.shape_cast %28 : vector<16x16x4xf32> to vector<1x1x16x16x4xf32>
    tpu.vector_store %arg6[%c0_32, %c0_33, %c0_34, %c0_35, %c0_36], %31 {strides = array<i32>} : memref<1x4x16x16x4xf32, #tpu.memory_space<vmem>>, vector<1x1x16x16x4xf32>,
    %32 = vector.extract_strided_slice %6 {offsets = [0, 0, 0], sizes = [16, 16, 4], strides = [1, 1, 1]} : vector<18x16x4xf32> to vector<16x16x4xf32>
    %c0_37 = arith.constant 0 : index
    %c1_38 = arith.constant 1 : index
    %c0_39 = arith.constant 0 : index
    %c0_40 = arith.constant 0 : index
    %c0_41 = arith.constant 0 : index
    %c0_42 = arith.constant 0 : index
    %33 = vector.load %arg4[%c0_37, %c1_38, %c0_39, %c0_40, %c0_41, %c0_42] : memref<2x2x2x2x4x4xf32, #tpu.memory_space<vmem>>, vector<1x1x1x1x4x4xf32>
    %34 = vector.shape_cast %33 : vector<1x1x1x1x4x4xf32> to vector<4x4xf32>
    %cst_43 = arith.constant dense<0.000000e+00> : vector<16x16x4xf32>
    %35 = tpu.matmul %32, %34, %cst_43 {dimension_numbers = #tpu.dot_dimension_numbers<[2], [0], [0, 1], [1], [0, 0, 0, 1, 1, 1], [], []>} : vector<16x16x4xf32>, vector<4x4xf32>, vector<16x16x4xf32> -> vector<16x16x4xf32>
    %36 = vector.extract_strided_slice %7 {offsets = [0, 0, 0], sizes = [16, 16, 4], strides = [1, 1, 1]} : vector<18x16x4xf32> to vector<16x16x4xf32>
    %c0_44 = arith.constant 0 : index
    %c1_45 = arith.constant 1 : index
    %c0_46 = arith.constant 0 : index
    %c1_47 = arith.constant 1 : index
    %c0_48 = arith.constant 0 : index
    %c0_49 = arith.constant 0 : index
    %37 = vector.load %arg4[%c0_44, %c1_45, %c0_46, %c1_47, %c0_48, %c0_49] : memref<2x2x2x2x4x4xf32, #tpu.memory_space<vmem>>, vector<1x1x1x1x4x4xf32>
    %38 = vector.shape_cast %37 : vector<1x1x1x1x4x4xf32> to vector<4x4xf32>
    %cst_50 = arith.constant dense<0.000000e+00> : vector<16x16x4xf32>
    %39 = tpu.matmul %36, %38, %cst_50 {dimension_numbers = #tpu.dot_dimension_numbers<[2], [0], [0, 1], [1], [0, 0, 0, 1, 1, 1], [], []>} : vector<16x16x4xf32>, vector<4x4xf32>, vector<16x16x4xf32> -> vector<16x16x4xf32>
    %40 = arith.addf %35, %39 : vector<16x16x4xf32>
    %41 = vector.extract_strided_slice %6 {offsets = [1, 0, 0], sizes = [16, 16, 4], strides = [1, 1, 1]} : vector<18x16x4xf32> to vector<16x16x4xf32>
    %c0_51 = arith.constant 0 : index
    %c1_52 = arith.constant 1 : index
    %c1_53 = arith.constant 1 : index
    %c0_54 = arith.constant 0 : index
    %c0_55 = arith.constant 0 : index
    %c0_56 = arith.constant 0 : index
    %42 = vector.load %arg4[%c0_51, %c1_52, %c1_53, %c0_54, %c0_55, %c0_56] : memref<2x2x2x2x4x4xf32, #tpu.memory_space<vmem>>, vector<1x1x1x1x4x4xf32>
    %43 = vector.shape_cast %42 : vector<1x1x1x1x4x4xf32> to vector<4x4xf32>
    %cst_57 = arith.constant dense<0.000000e+00> : vector<16x16x4xf32>
    %44 = tpu.matmul %41, %43, %cst_57 {dimension_numbers = #tpu.dot_dimension_numbers<[2], [0], [0, 1], [1], [0, 0, 0, 1, 1, 1], [], []>} : vector<16x16x4xf32>, vector<4x4xf32>, vector<16x16x4xf32> -> vector<16x16x4xf32>
    %45 = arith.addf %40, %44 : vector<16x16x4xf32>
    %46 = vector.extract_strided_slice %7 {offsets = [1, 0, 0], sizes = [16, 16, 4], strides = [1, 1, 1]} : vector<18x16x4xf32> to vector<16x16x4xf32>
    %c0_58 = arith.constant 0 : index
    %c1_59 = arith.constant 1 : index
    %c1_60 = arith.constant 1 : index
    %c1_61 = arith.constant 1 : index
    %c0_62 = arith.constant 0 : index
    %c0_63 = arith.constant 0 : index
    %47 = vector.load %arg4[%c0_58, %c1_59, %c1_60, %c1_61, %c0_62, %c0_63] : memref<2x2x2x2x4x4xf32, #tpu.memory_space<vmem>>, vector<1x1x1x1x4x4xf32>
    %48 = vector.shape_cast %47 : vector<1x1x1x1x4x4xf32> to vector<4x4xf32>
    %cst_64 = arith.constant dense<0.000000e+00> : vector<16x16x4xf32>
    %49 = tpu.matmul %46, %48, %cst_64 {dimension_numbers = #tpu.dot_dimension_numbers<[2], [0], [0, 1], [1], [0, 0, 0, 1, 1, 1], [], []>} : vector<16x16x4xf32>, vector<4x4xf32>, vector<16x16x4xf32> -> vector<16x16x4xf32>
    %50 = arith.addf %45, %49 : vector<16x16x4xf32>
    %51 = vector.broadcast %2 : vector<1x1x4xf32> to vector<16x16x4xf32>
    %52 = arith.addf %50, %51 : vector<16x16x4xf32>
    %c0_65 = arith.constant 0 : index
    %c1_66 = arith.constant 1 : index
    %c0_67 = arith.constant 0 : index
    %c0_68 = arith.constant 0 : index
    %c0_69 = arith.constant 0 : index
    %53 = vector.load %arg6[%c0_65, %c1_66, %c0_67, %c0_68, %c0_69] : memref<1x4x16x16x4xf32, #tpu.memory_space<vmem>>, vector<1x1x16x16x4xf32>
    %54 = vector.shape_cast %53 : vector<1x1x16x16x4xf32> to vector<16x16x4xf32>
    %55 = vector.shape_cast %52 : vector<16x16x4xf32> to vector<1x1x16x16x4xf32>
    tpu.vector_store %arg6[%c0_65, %c1_66, %c0_67, %c0_68, %c0_69], %55 {strides = array<i32>} : memref<1x4x16x16x4xf32, #tpu.memory_space<vmem>>, vector<1x1x16x16x4xf32>,
    %56 = vector.extract_strided_slice %5 {offsets = [1, 0, 0], sizes = [16, 16, 4], strides = [1, 1, 1]} : vector<18x16x4xf32> to vector<16x16x4xf32>
    %c1_70 = arith.constant 1 : index
    %c0_71 = arith.constant 0 : index
    %c0_72 = arith.constant 0 : index
    %c0_73 = arith.constant 0 : index
    %c0_74 = arith.constant 0 : index
    %c0_75 = arith.constant 0 : index
    %57 = vector.load %arg4[%c1_70, %c0_71, %c0_72, %c0_73, %c0_74, %c0_75] : memref<2x2x2x2x4x4xf32, #tpu.memory_space<vmem>>, vector<1x1x1x1x4x4xf32>
    %58 = vector.shape_cast %57 : vector<1x1x1x1x4x4xf32> to vector<4x4xf32>
    %cst_76 = arith.constant dense<0.000000e+00> : vector<16x16x4xf32>
    %59 = tpu.matmul %56, %58, %cst_76 {dimension_numbers = #tpu.dot_dimension_numbers<[2], [0], [0, 1], [1], [0, 0, 0, 1, 1, 1], [], []>} : vector<16x16x4xf32>, vector<4x4xf32>, vector<16x16x4xf32> -> vector<16x16x4xf32>
    %60 = vector.extract_strided_slice %6 {offsets = [1, 0, 0], sizes = [16, 16, 4], strides = [1, 1, 1]} : vector<18x16x4xf32> to vector<16x16x4xf32>
    %c1_77 = arith.constant 1 : index
    %c0_78 = arith.constant 0 : index
    %c0_79 = arith.constant 0 : index
    %c1_80 = arith.constant 1 : index
    %c0_81 = arith.constant 0 : index
    %c0_82 = arith.constant 0 : index
    %61 = vector.load %arg4[%c1_77, %c0_78, %c0_79, %c1_80, %c0_81, %c0_82] : memref<2x2x2x2x4x4xf32, #tpu.memory_space<vmem>>, vector<1x1x1x1x4x4xf32>
    %62 = vector.shape_cast %61 : vector<1x1x1x1x4x4xf32> to vector<4x4xf32>
    %cst_83 = arith.constant dense<0.000000e+00> : vector<16x16x4xf32>
    %63 = tpu.matmul %60, %62, %cst_83 {dimension_numbers = #tpu.dot_dimension_numbers<[2], [0], [0, 1], [1], [0, 0, 0, 1, 1, 1], [], []>} : vector<16x16x4xf32>, vector<4x4xf32>, vector<16x16x4xf32> -> vector<16x16x4xf32>
    %64 = arith.addf %59, %63 : vector<16x16x4xf32>
    %65 = vector.extract_strided_slice %5 {offsets = [2, 0, 0], sizes = [16, 16, 4], strides = [1, 1, 1]} : vector<18x16x4xf32> to vector<16x16x4xf32>
    %c1_84 = arith.constant 1 : index
    %c0_85 = arith.constant 0 : index
    %c1_86 = arith.constant 1 : index
    %c0_87 = arith.constant 0 : index
    %c0_88 = arith.constant 0 : index
    %c0_89 = arith.constant 0 : index
    %66 = vector.load %arg4[%c1_84, %c0_85, %c1_86, %c0_87, %c0_88, %c0_89] : memref<2x2x2x2x4x4xf32, #tpu.memory_space<vmem>>, vector<1x1x1x1x4x4xf32>
    %67 = vector.shape_cast %66 : vector<1x1x1x1x4x4xf32> to vector<4x4xf32>
    %cst_90 = arith.constant dense<0.000000e+00> : vector<16x16x4xf32>
    %68 = tpu.matmul %65, %67, %cst_90 {dimension_numbers = #tpu.dot_dimension_numbers<[2], [0], [0, 1], [1], [0, 0, 0, 1, 1, 1], [], []>} : vector<16x16x4xf32>, vector<4x4xf32>, vector<16x16x4xf32> -> vector<16x16x4xf32>
    %69 = arith.addf %64, %68 : vector<16x16x4xf32>
    %70 = vector.extract_strided_slice %6 {offsets = [2, 0, 0], sizes = [16, 16, 4], strides = [1, 1, 1]} : vector<18x16x4xf32> to vector<16x16x4xf32>
    %c1_91 = arith.constant 1 : index
    %c0_92 = arith.constant 0 : index
    %c1_93 = arith.constant 1 : index
    %c1_94 = arith.constant 1 : index
    %c0_95 = arith.constant 0 : index
    %c0_96 = arith.constant 0 : index
    %71 = vector.load %arg4[%c1_91, %c0_92, %c1_93, %c1_94, %c0_95, %c0_96] : memref<2x2x2x2x4x4xf32, #tpu.memory_space<vmem>>, vector<1x1x1x1x4x4xf32>
    %72 = vector.shape_cast %71 : vector<1x1x1x1x4x4xf32> to vector<4x4xf32>
    %cst_97 = arith.constant dense<0.000000e+00> : vector<16x16x4xf32>
    %73 = tpu.matmul %70, %72, %cst_97 {dimension_numbers = #tpu.dot_dimension_numbers<[2], [0], [0, 1], [1], [0, 0, 0, 1, 1, 1], [], []>} : vector<16x16x4xf32>, vector<4x4xf32>, vector<16x16x4xf32> -> vector<16x16x4xf32>
    %74 = arith.addf %69, %73 : vector<16x16x4xf32>
    %75 = vector.broadcast %2 : vector<1x1x4xf32> to vector<16x16x4xf32>
    %76 = arith.addf %74, %75 : vector<16x16x4xf32>
    %c0_98 = arith.constant 0 : index
    %c2 = arith.constant 2 : index
    %c0_99 = arith.constant 0 : index
    %c0_100 = arith.constant 0 : index
    %c0_101 = arith.constant 0 : index
    %77 = vector.load %arg6[%c0_98, %c2, %c0_99, %c0_100, %c0_101] : memref<1x4x16x16x4xf32, #tpu.memory_space<vmem>>, vector<1x1x16x16x4xf32>
    %78 = vector.shape_cast %77 : vector<1x1x16x16x4xf32> to vector<16x16x4xf32>
    %79 = vector.shape_cast %76 : vector<16x16x4xf32> to vector<1x1x16x16x4xf32>
    tpu.vector_store %arg6[%c0_98, %c2, %c0_99, %c0_100, %c0_101], %79 {strides = array<i32>} : memref<1x4x16x16x4xf32, #tpu.memory_space<vmem>>, vector<1x1x16x16x4xf32>,
    %80 = vector.extract_strided_slice %6 {offsets = [1, 0, 0], sizes = [16, 16, 4], strides = [1, 1, 1]} : vector<18x16x4xf32> to vector<16x16x4xf32>
    %c1_102 = arith.constant 1 : index
    %c1_103 = arith.constant 1 : index
    %c0_104 = arith.constant 0 : index
    %c0_105 = arith.constant 0 : index
    %c0_106 = arith.constant 0 : index
    %c0_107 = arith.constant 0 : index
    %81 = vector.load %arg4[%c1_102, %c1_103, %c0_104, %c0_105, %c0_106, %c0_107] : memref<2x2x2x2x4x4xf32, #tpu.memory_space<vmem>>, vector<1x1x1x1x4x4xf32>
    %82 = vector.shape_cast %81 : vector<1x1x1x1x4x4xf32> to vector<4x4xf32>
    %cst_108 = arith.constant dense<0.000000e+00> : vector<16x16x4xf32>
    %83 = tpu.matmul %80, %82, %cst_108 {dimension_numbers = #tpu.dot_dimension_numbers<[2], [0], [0, 1], [1], [0, 0, 0, 1, 1, 1], [], []>} : vector<16x16x4xf32>, vector<4x4xf32>, vector<16x16x4xf32> -> vector<16x16x4xf32>
    %84 = vector.extract_strided_slice %7 {offsets = [1, 0, 0], sizes = [16, 16, 4], strides = [1, 1, 1]} : vector<18x16x4xf32> to vector<16x16x4xf32>
    %c1_109 = arith.constant 1 : index
    %c1_110 = arith.constant 1 : index
    %c0_111 = arith.constant 0 : index
    %c1_112 = arith.constant 1 : index
    %c0_113 = arith.constant 0 : index
    %c0_114 = arith.constant 0 : index
    %85 = vector.load %arg4[%c1_109, %c1_110, %c0_111, %c1_112, %c0_113, %c0_114] : memref<2x2x2x2x4x4xf32, #tpu.memory_space<vmem>>, vector<1x1x1x1x4x4xf32>
    %86 = vector.shape_cast %85 : vector<1x1x1x1x4x4xf32> to vector<4x4xf32>
    %cst_115 = arith.constant dense<0.000000e+00> : vector<16x16x4xf32>
    %87 = tpu.matmul %84, %86, %cst_115 {dimension_numbers = #tpu.dot_dimension_numbers<[2], [0], [0, 1], [1], [0, 0, 0, 1, 1, 1], [], []>} : vector<16x16x4xf32>, vector<4x4xf32>, vector<16x16x4xf32> -> vector<16x16x4xf32>
    %88 = arith.addf %83, %87 : vector<16x16x4xf32>
    %89 = vector.extract_strided_slice %6 {offsets = [2, 0, 0], sizes = [16, 16, 4], strides = [1, 1, 1]} : vector<18x16x4xf32> to vector<16x16x4xf32>
    %c1_116 = arith.constant 1 : index
    %c1_117 = arith.constant 1 : index
    %c1_118 = arith.constant 1 : index
    %c0_119 = arith.constant 0 : index
    %c0_120 = arith.constant 0 : index
    %c0_121 = arith.constant 0 : index
    %90 = vector.load %arg4[%c1_116, %c1_117, %c1_118, %c0_119, %c0_120, %c0_121] : memref<2x2x2x2x4x4xf32, #tpu.memory_space<vmem>>, vector<1x1x1x1x4x4xf32>
    %91 = vector.shape_cast %90 : vector<1x1x1x1x4x4xf32> to vector<4x4xf32>
    %cst_122 = arith.constant dense<0.000000e+00> : vector<16x16x4xf32>
    %92 = tpu.matmul %89, %91, %cst_122 {dimension_numbers = #tpu.dot_dimension_numbers<[2], [0], [0, 1], [1], [0, 0, 0, 1, 1, 1], [], []>} : vector<16x16x4xf32>, vector<4x4xf32>, vector<16x16x4xf32> -> vector<16x16x4xf32>
    %93 = arith.addf %88, %92 : vector<16x16x4xf32>
    %94 = vector.extract_strided_slice %7 {offsets = [2, 0, 0], sizes = [16, 16, 4], strides = [1, 1, 1]} : vector<18x16x4xf32> to vector<16x16x4xf32>
    %c1_123 = arith.constant 1 : index
    %c1_124 = arith.constant 1 : index
    %c1_125 = arith.constant 1 : index
    %c1_126 = arith.constant 1 : index
    %c0_127 = arith.constant 0 : index
    %c0_128 = arith.constant 0 : index
    %95 = vector.load %arg4[%c1_123, %c1_124, %c1_125, %c1_126, %c0_127, %c0_128] : memref<2x2x2x2x4x4xf32, #tpu.memory_space<vmem>>, vector<1x1x1x1x4x4xf32>
    %96 = vector.shape_cast %95 : vector<1x1x1x1x4x4xf32> to vector<4x4xf32>
    %cst_129 = arith.constant dense<0.000000e+00> : vector<16x16x4xf32>
    %97 = tpu.matmul %94, %96, %cst_129 {dimension_numbers = #tpu.dot_dimension_numbers<[2], [0], [0, 1], [1], [0, 0, 0, 1, 1, 1], [], []>} : vector<16x16x4xf32>, vector<4x4xf32>, vector<16x16x4xf32> -> vector<16x16x4xf32>
    %98 = arith.addf %93, %97 : vector<16x16x4xf32>
    %99 = vector.broadcast %2 : vector<1x1x4xf32> to vector<16x16x4xf32>
    %100 = arith.addf %98, %99 : vector<16x16x4xf32>
    %c0_130 = arith.constant 0 : index
    %c3 = arith.constant 3 : index
    %c0_131 = arith.constant 0 : index
    %c0_132 = arith.constant 0 : index
    %c0_133 = arith.constant 0 : index
    %101 = vector.load %arg6[%c0_130, %c3, %c0_131, %c0_132, %c0_133] : memref<1x4x16x16x4xf32, #tpu.memory_space<vmem>>, vector<1x1x16x16x4xf32>
    %102 = vector.shape_cast %101 : vector<1x1x16x16x4xf32> to vector<16x16x4xf32>
    %103 = vector.shape_cast %100 : vector<16x16x4xf32> to vector<1x1x16x16x4xf32>
    tpu.vector_store %arg6[%c0_130, %c3, %c0_131, %c0_132, %c0_133], %103 {strides = array<i32>} : memref<1x4x16x16x4xf32, #tpu.memory_space<vmem>>, vector<1x1x16x16x4xf32>,
    return
  }
  func.func @transform_0(%arg0: i32, %arg1: i32, %arg2: i32) -> (i32, i32, i32, i32, i32) {
    %c0_i32 = arith.constant 0 : i32
    %c0_i32_0 = arith.constant 0 : i32
    %c0_i32_1 = arith.constant 0 : i32
    %c0_i32_2 = arith.constant 0 : i32
    return %arg0, %arg2, %c0_i32, %c0_i32_0, %c0_i32_1 : i32, i32, i32, i32, i32
  }
  func.func @transform_1(%arg0: i32, %arg1: i32, %arg2: i32) -> (i32, i32, i32, i32, i32, i32) {
    %c0_i32 = arith.constant 0 : i32
    %c0_i32_0 = arith.constant 0 : i32
    %c0_i32_1 = arith.constant 0 : i32
    %c0_i32_2 = arith.constant 0 : i32
    %c0_i32_3 = arith.constant 0 : i32
    %c0_i32_4 = arith.constant 0 : i32
    return %c0_i32, %c0_i32_0, %c0_i32_1, %c0_i32_2, %c0_i32_3, %arg1 : i32, i32, i32, i32, i32, i32
  }
  func.func @transform_2(%arg0: i32, %arg1: i32, %arg2: i32) -> (i32, i32) {
    %c0_i32 = arith.constant 0 : i32
    %c0_i32_0 = arith.constant 0 : i32
    return %c0_i32, %arg1 : i32, i32
  }
  func.func @transform_3(%arg0: i32, %arg1: i32, %arg2: i32) -> (i32, i32, i32, i32, i32) {
    %c0_i32 = arith.constant 0 : i32
    %c0_i32_0 = arith.constant 0 : i32
    %c0_i32_1 = arith.constant 0 : i32
    return %arg0, %c0_i32, %arg2, %c0_i32_0, %arg1 : i32, i32, i32, i32, i32
  }
}

</mosaic_0001>

<llo_original>
// kernel: tpu_custom_call.1
$region0: #{tpu_custom_call.1}
  #allocation0 [shape = 'u32[]', space=smem, size = 0x4, offset = 0x4, fixed_abs, tag = 'smem constant byte address 0x4 - core index']
  #allocation1 [shape = 'u32[144,128]{1,0:T(1,128)}', space=vmem, size = 0x12000, scoped, tag = 'internal scratch']
  %s0 = inlined_call_operand.vmem [shape: f32[2,1,18,18,4], index: 0, kind: input, shape index: {}]
  %s1 = inlined_call_operand.vmem [shape: f32[2,2,2,2,4,4], index: 1, kind: input, shape index: {}]
  %s2 = inlined_call_operand.vmem [shape: f32[1,4], index: 2, kind: input, shape index: {}]
  %s3 = inlined_call_operand.vmem [shape: f32[2,4,16,16,4], index: 3, kind: output, shape index: {}]
  %s4 = sld [smem:[#allocation0]]
  $region45: #{tpu_custom_call.1} parent=0
    _
  %s6 = ssub.s32 1, %s4
  %s7 = scalar_select 0, %s6, %s4
  loop: start=0, step=1, limit=4
  $region2: #{tpu_custom_call.1} parent=0 // loop_pre_header
    _
  $region3: #{tpu_custom_call.1} parent=0 // loop_header
    %s9 = sphi 0, %s13
    %p10 = scmp.ge.s32.totalorder %s9, 4
    %s16 = sphi 0, %s35
    %s17 = sphi 0, %s31
    %s18 = sphi 0, %s27
    %s19 = sphi 0, %s16
    %s20 = sphi 0, %s17
    %s21 = sphi 0, %s18
    %s22 = sphi 0, %s19
    %s23 = sphi 0, %s20
    %s24 = sphi 0, %s21
    %s40 = sphi 0, %s42
    %s43 = sphi 0, %s40
    %s44 = sphi 0, %s43
    %s60 = sphi 0, %s44
    %s66 = sphi 0, %s68
    %s69 = sphi 0, %s66
    %s70 = sphi 0, %s69
    %s86 = sphi 0, %s70
    %s92 = sphi 0, %s94
    %s95 = sphi 0, %s92
    %s96 = sphi 0, %s95
    %s112 = sphi 0, %s96
    %s122 = sphi 0, %s124
    %s125 = sphi 0, %s122
    %s126 = sphi 0, %s125
    %s142 = sphi 0, %s126
  $region4: #{tpu_custom_call.1} parent=0 // loop_header_branch
    %12 = sbr.rel (%p10) target = $region8
  $region5: #{tpu_custom_call.1} parent=0 // loop_body
    %s14 = ssub.s32 %s9, 1
    %s15 = ssub.s32 %s9, 2
    %s25 = sadd.s32 1, %s18
    %p26 = scmp.ge.s32.totalorder %s25, 1
    %s27 = scalar_select %p26, 0, %s25
    %s28 = sadd.s32 1, %s17
    %s29 = scalar_select %p26, %s28, %s17
    %p30 = scmp.ge.s32.totalorder %s29, 1
    %s31 = scalar_select %p30, 0, %s29
    %s32 = sadd.s32 1, %s16
    %s33 = scalar_select %p30, %s32, %s16
    %p34 = scmp.ge.s32.totalorder %s33, 2
    %s35 = scalar_select %p34, 0, %s33
    %s36 = ssub.s32 %s16, %s35
    %s37 = ssub.s32 %s18, %s27
    %s38 = sor.u32 %s36, %s37
    %p39 = scmp.eq.s32.totalorder %s38, 0
    %s41 = sadd.s32 %s40, 1
    %s42 = scalar_select %p39, %s40, %s41
    %p45 = pneg %p39
    %p46 = scmp.eq.s32.totalorder %s9, 1
    %p47 = por %p45, %p46
    %p48 = scmp.ne.s32.totalorder %s40, %s43
    %p49 = scmp.eq.s32.totalorder %s9, 0
    %p50 = por %p48, %p49
    %p51 = scmp.ne.s32.totalorder %s40, %s43
    %p52 = scmp.eq.s32.totalorder %s14, 1
    %p53 = por %p51, %p52
    %p54 = scmp.ne.s32.totalorder %s43, %s44
    %p55 = scmp.eq.s32.totalorder %s14, 0
    %p56 = por %p54, %p55
    %p57 = scmp.ne.s32.totalorder %s43, %s44
    %p58 = scmp.eq.s32.totalorder %s15, 1
    %p59 = por %p57, %p58
    %p61 = scmp.ne.s32.totalorder %s44, %s60
    %p62 = scmp.eq.s32.totalorder %s15, 0
    %p63 = por %p61, %p62
    %s64 = ssub.s32 %s17, %s31
    %p65 = scmp.eq.s32.totalorder %s64, 0
    %s67 = sadd.s32 %s66, 1
    %s68 = scalar_select %p65, %s66, %s67
    %p71 = pneg %p65
    %p72 = scmp.eq.s32.totalorder %s9, 1
    %p73 = por %p71, %p72
    %p74 = scmp.ne.s32.totalorder %s66, %s69
    %p75 = scmp.eq.s32.totalorder %s9, 0
    %p76 = por %p74, %p75
    %p77 = scmp.ne.s32.totalorder %s66, %s69
    %p78 = scmp.eq.s32.totalorder %s14, 1
    %p79 = por %p77, %p78
    %p80 = scmp.ne.s32.totalorder %s69, %s70
    %p81 = scmp.eq.s32.totalorder %s14, 0
    %p82 = por %p80, %p81
    %p83 = scmp.ne.s32.totalorder %s69, %s70
    %p84 = scmp.eq.s32.totalorder %s15, 1
    %p85 = por %p83, %p84
    %p87 = scmp.ne.s32.totalorder %s70, %s86
    %p88 = scmp.eq.s32.totalorder %s15, 0
    %p89 = por %p87, %p88
    %s90 = ssub.s32 %s17, %s31
    %p91 = scmp.eq.s32.totalorder %s90, 0
    %s93 = sadd.s32 %s92, 1
    %s94 = scalar_select %p91, %s92, %s93
    %p97 = pneg %p91
    %p98 = scmp.eq.s32.totalorder %s9, 1
    %p99 = por %p97, %p98
    %p100 = scmp.ne.s32.totalorder %s92, %s95
    %p101 = scmp.eq.s32.totalorder %s9, 0
    %p102 = por %p100, %p101
    %p103 = scmp.ne.s32.totalorder %s92, %s95
    %p104 = scmp.eq.s32.totalorder %s14, 1
    %p105 = por %p103, %p104
    %p106 = scmp.ne.s32.totalorder %s95, %s96
    %p107 = scmp.eq.s32.totalorder %s14, 0
    %p108 = por %p106, %p107
    %p109 = scmp.ne.s32.totalorder %s95, %s96
    %p110 = scmp.eq.s32.totalorder %s15, 1
    %p111 = por %p109, %p110
    %p113 = scmp.ne.s32.totalorder %s96, %s112
    %p114 = scmp.eq.s32.totalorder %s15, 0
    %p115 = por %p113, %p114
    %s116 = ssub.s32 %s16, %s35
    %s117 = ssub.s32 %s18, %s27
    %s118 = sor.u32 %s116, %s117
    %s119 = ssub.s32 %s17, %s31
    %s120 = sor.u32 %s118, %s119
    %p121 = scmp.eq.s32.totalorder %s120, 0
    %s123 = sadd.s32 %s122, 1
    %s124 = scalar_select %p121, %s122, %s123
    %p127 = pneg %p121
    %p128 = scmp.eq.s32.totalorder %s9, 1
    %p129 = por %p127, %p128
    %p130 = scmp.ne.s32.totalorder %s122, %s125
    %p131 = scmp.eq.s32.totalorder %s9, 0
    %p132 = por %p130, %p131
    %p133 = scmp.ne.s32.totalorder %s122, %s125
    %p134 = scmp.eq.s32.totalorder %s14, 1
    %p135 = por %p133, %p134
    %p136 = scmp.ne.s32.totalorder %s125, %s126
    %p137 = scmp.eq.s32.totalorder %s14, 0
    %p138 = por %p136, %p137
    %p139 = scmp.ne.s32.totalorder %s125, %s126
    %p140 = scmp.eq.s32.totalorder %s15, 1
    %p141 = por %p139, %p140
    %p143 = scmp.ne.s32.totalorder %s126, %s142
    %p144 = scmp.eq.s32.totalorder %s15, 0
    %p145 = por %p143, %p144
    %p146 = scmp.le.s32.totalorder 1, %s9
    %p147 = scmp.lt.s32.totalorder %s9, 3
    %p148 = pnand %p146, %p147
    %p149 = pneg %p148
    // Predicated region
    $region9: #{tpu_custom_call.1} parent=5 // pred_check
      _
    $region10: #{tpu_custom_call.1} parent=5 // pred_check_branch
      %151 = sbr.rel (%p148) target = $region12
    $region11: #{tpu_custom_call.1} parent=5 // pred_region
      %s152 = ssub.s32 %s9, 1
      // Predicated region
      $region13: #{tpu_custom_call.1} parent=11 // pred_check
        %p153 = pneg %p82
      $region14: #{tpu_custom_call.1} parent=11 // pred_check_branch
        %155 = sbr.rel (%p153) target = $region16
      $region15: #{tpu_custom_call.1} parent=11 // pred_region
        %p156 = scmp.lt.s32.totalorder %s20, 0
        %s157 = scalar_select %p156, %s20, 0
        %s158 = smul.addr %s157, 4
        %s159 = scalar_lea.vmem %s1, %s158
      $region16: #{tpu_custom_call.1} parent=11 // pred_fallthru
        _
      // Predicated region
      $region17: #{tpu_custom_call.1} parent=11 // pred_check
        %p160 = pneg %p108
      $region18: #{tpu_custom_call.1} parent=11 // pred_check_branch
        %162 = sbr.rel (%p160) target = $region20
      $region19: #{tpu_custom_call.1} parent=11 // pred_region
        %p163 = scmp.lt.s32.totalorder %s20, 0
        %s164 = scalar_select %p163, %s20, 0
        %s165 = scalar_lea.vmem %s2, %s164
      $region20: #{tpu_custom_call.1} parent=11 // pred_fallthru
        _
    $region12: #{tpu_custom_call.1} parent=5 // pred_fallthru
      _
    %p166 = scmp.lt.s32.totalorder %s9, 2
    // Predicated region
    $region21: #{tpu_custom_call.1} parent=5 // pred_check
      %p167 = pneg %p166
    $region22: #{tpu_custom_call.1} parent=5 // pred_check_branch
      %169 = sbr.rel (%p167) target = $region24
    $region23: #{tpu_custom_call.1} parent=5 // pred_region
      // Predicated region
      $region25: #{tpu_custom_call.1} parent=23 // pred_check
        %p170 = pneg %p50
      $region26: #{tpu_custom_call.1} parent=23 // pred_check_branch
        %172 = sbr.rel (%p170) target = $region28
      $region27: #{tpu_custom_call.1} parent=23 // pred_region
        %p173 = scmp.lt.s32.totalorder %s16, 1
        %s174 = scalar_select %p173, %s16, 1
        %p175 = scmp.lt.s32.totalorder %s18, 0
        %s176 = scalar_select %p175, %s18, 0
        %s177 = smul.addr %s176, 54
        %s178 = smul.addr %s174, 54
        %s179 = sadd.s32 %s177, %s178
        %s180 = smul.addr %s179, 8
        %s181 = scalar_lea.vmem %s0, %s180
      $region28: #{tpu_custom_call.1} parent=23 // pred_fallthru
        _
    $region24: #{tpu_custom_call.1} parent=5 // pred_fallthru
      _
    %p182 = scmp.le.s32.totalorder 1, %s9
    %p183 = scmp.lt.s32.totalorder %s9, 3
    %p184 = pnand %p182, %p183
    %p185 = pneg %p184
    // Predicated region
    $region29: #{tpu_custom_call.1} parent=5 // pred_check
      _
    $region30: #{tpu_custom_call.1} parent=5 // pred_check_branch
      %187 = sbr.rel (%p184) target = $region32
    $region31: #{tpu_custom_call.1} parent=5 // pred_region
      %s188 = ssub.s32 %s9, 1
      %p189 = scmp.lt.s32.totalorder %s19, 1
      %s190 = scalar_select %p189, %s19, 1
      %p191 = scmp.lt.s32.totalorder %s21, 0
      %s192 = scalar_select %p191, %s21, 0
      %s193 = smul.addr %s192, 54
      %s194 = smul.addr %s190, 54
      %s195 = sadd.s32 %s193, %s194
      %s196 = smul.addr %s195, 8
      %s197 = scalar_lea.vmem %s0, %s196
      %p198 = pneg %p56
      %p199 = pneg %p53
      %p200 = scmp.lt.s32.totalorder %s20, 0
      %s201 = scalar_select %p200, %s20, 0
      %s202 = smul.addr %s201, 4
      %s203 = scalar_lea.vmem %s1, %s202
      %p204 = pneg %p82
      %p205 = pneg %p79
      %p206 = scmp.lt.s32.totalorder %s20, 0
      %s207 = scalar_select %p206, %s20, 0
      %s208 = scalar_lea.vmem %s2, %s207
      %p209 = pneg %p108
      %p210 = pneg %p105
      %p211 = pneg %p138
      %p212 = pneg %p135
      %s213 = smul.u32 16, %s21
      %p214 = scmp.lt.s32.totalorder %s19, 1
      %s215 = scalar_select %p214, %s19, 1
      %p216 = scmp.lt.s32.totalorder %s213, 15
      %s217 = scalar_select %p216, %s213, 15
      %p218 = scmp.lt.s32.totalorder %s20, 0
      %s219 = scalar_select %p218, %s20, 0
      %s220 = smul.addr %s217, 2
      %s221 = sadd.s32 %s219, %s220
      %s222 = smul.addr %s215, 128
      %s223 = sadd.s32 %s221, %s222
      %s224 = smul.addr %s223, 8
      %s225 = scalar_lea.vmem %s3, %s224
      %p226 = scmp.lt.s32.totalorder %s19, 1
      %s227 = scalar_select %p226, %s19, 1
      %p228 = scmp.lt.s32.totalorder %s21, 0
      %s229 = scalar_select %p228, %s21, 0
      %s230 = smul.addr %s229, 54
      %s231 = smul.addr %s227, 54
      %s232 = sadd.s32 %s230, %s231
      %s233 = smul.addr %s232, 8
      %s234 = scalar_lea.vmem %s0, %s233
      %p235 = scmp.lt.s32.totalorder %s20, 0
      %s236 = scalar_select %p235, %s20, 0
      %s237 = smul.addr %s236, 4
      %s238 = scalar_lea.vmem %s1, %s237
      %p239 = scmp.lt.s32.totalorder %s20, 0
      %s240 = scalar_select %p239, %s20, 0
      %s241 = scalar_lea.vmem %s2, %s240
      %s242 = smul.u32 16, %s21
      %p243 = scmp.lt.s32.totalorder %s19, 1
      %s244 = scalar_select %p243, %s19, 1
      %p245 = scmp.lt.s32.totalorder %s242, 15
      %s246 = scalar_select %p245, %s242, 15
      %p247 = scmp.lt.s32.totalorder %s20, 0
      %s248 = scalar_select %p247, %s20, 0
      %s249 = smul.addr %s246, 2
      %s250 = sadd.s32 %s248, %s249
      %s251 = smul.addr %s244, 128
      %s252 = sadd.s32 %s250, %s251
      %s253 = smul.addr %s252, 8
      %s254 = scalar_lea.vmem %s3, %s253
      %s255 = smul.u32 16, %s21
      %v256 = vld [vmem:[%s241] sm:$0x1]
      %v257 = vld [vmem:[%s234] sm:$0xff]
      %v258 = vld [vmem:[%s234 + $0x8] sm:$0xff]
      %v259 = vld [vmem:[%s234 + $0x10] sm:$0x3]
      %v260 = vld [vmem:[%s234 + $0x18] sm:$0xff]
      %v261 = vld [vmem:[%s234 + $0x20] sm:$0xff]
      %v262 = vld [vmem:[%s234 + $0x28] sm:$0x3]
      %v263 = vld [vmem:[%s234 + $0x30] sm:$0xff]
      %v264 = vld [vmem:[%s234 + $0x38] sm:$0xff]
      %v265 = vld [vmem:[%s234 + $0x40] sm:$0x3]
      %v266 = vld [vmem:[%s234 + $0x48] sm:$0xff]
      %v267 = vld [vmem:[%s234 + $0x50] sm:$0xff]
      %v268 = vld [vmem:[%s234 + $0x58] sm:$0x3]
      %v269 = vld [vmem:[%s234 + $0x60] sm:$0xff]
      %v270 = vld [vmem:[%s234 + $0x68] sm:$0xff]
      %v271 = vld [vmem:[%s234 + $0x70] sm:$0x3]
      %v272 = vld [vmem:[%s234 + $0x78] sm:$0xff]
      %v273 = vld [vmem:[%s234 + $0x80] sm:$0xff]
      %v274 = vld [vmem:[%s234 + $0x88] sm:$0x3]
      %v275 = vld [vmem:[%s234 + $0x90] sm:$0xff]
      %v276 = vld [vmem:[%s234 + $0x98] sm:$0xff]
      %v277 = vld [vmem:[%s234 + $0xa0] sm:$0x3]
      %v278 = vld [vmem:[%s234 + $0xa8] sm:$0xff]
      %v279 = vld [vmem:[%s234 + $0xb0] sm:$0xff]
      %v280 = vld [vmem:[%s234 + $0xb8] sm:$0x3]
      %v281 = vld [vmem:[%s234 + $0xc0] sm:$0xff]
      %v282 = vld [vmem:[%s234 + $0xc8] sm:$0xff]
      %v283 = vld [vmem:[%s234 + $0xd0] sm:$0x3]
      %v284 = vld [vmem:[%s234 + $0xd8] sm:$0xff]
      %v285 = vld [vmem:[%s234 + $0xe0] sm:$0xff]
      %v286 = vld [vmem:[%s234 + $0xe8] sm:$0x3]
      %v287 = vld [vmem:[%s234 + $0xf0] sm:$0xff]
      %v288 = vld [vmem:[%s234 + $0xf8] sm:$0xff]
      %v289 = vld [vmem:[%s234 + $0x100] sm:$0x3]
      %v290 = vld [vmem:[%s234 + $0x108] sm:$0xff]
      %v291 = vld [vmem:[%s234 + $0x110] sm:$0xff]
      %v292 = vld [vmem:[%s234 + $0x118] sm:$0x3]
      %v293 = vld [vmem:[%s234 + $0x120] sm:$0xff]
      %v294 = vld [vmem:[%s234 + $0x128] sm:$0xff]
      %v295 = vld [vmem:[%s234 + $0x130] sm:$0x3]
      %v296 = vld [vmem:[%s234 + $0x138] sm:$0xff]
      %v297 = vld [vmem:[%s234 + $0x140] sm:$0xff]
      %v298 = vld [vmem:[%s234 + $0x148] sm:$0x3]
      %v299 = vld [vmem:[%s234 + $0x150] sm:$0xff]
      %v300 = vld [vmem:[%s234 + $0x158] sm:$0xff]
      %v301 = vld [vmem:[%s234 + $0x160] sm:$0x3]
      %v302 = vld [vmem:[%s234 + $0x168] sm:$0xff]
      %v303 = vld [vmem:[%s234 + $0x170] sm:$0xff]
      %v304 = vld [vmem:[%s234 + $0x178] sm:$0x3]
      %v305 = vld [vmem:[%s234 + $0x180] sm:$0xff]
      %v306 = vld [vmem:[%s234 + $0x188] sm:$0xff]
      %v307 = vld [vmem:[%s234 + $0x190] sm:$0x3]
      %v308 = vld [vmem:[%s234 + $0x198] sm:$0xff]
      %v309 = vld [vmem:[%s234 + $0x1a0] sm:$0xff]
      %v310 = vld [vmem:[%s234 + $0x1a8] sm:$0x3]
      %v311 = vld [vmem:[%s238] sm:$0xf]
      %s312 = scalar_lea.vmem %s238, 4
      %v313 = vld [vmem:[%s312] sm:$0xf]
      %vm362 = vcmask 1046528
      %v363 = vrot.slane %v257, 1
      %v364 = vrot.slane %v258, 1
      %v365 = vsel %vm362, %v363, %v364
      %v366 = vrot.slane %v259, 1
      %v367 = vsel %vm362, %v364, %v366
      %v368 = vrot.slane %v260, 1
      %v369 = vrot.slane %v261, 1
      %v370 = vsel %vm362, %v368, %v369
      %v371 = vrot.slane %v262, 1
      %v372 = vsel %vm362, %v369, %v371
      %v373 = vrot.slane %v263, 1
      %v374 = vrot.slane %v264, 1
      %v375 = vsel %vm362, %v373, %v374
      %v376 = vrot.slane %v265, 1
      %v377 = vsel %vm362, %v374, %v376
      %v378 = vrot.slane %v266, 1
      %v379 = vrot.slane %v267, 1
      %v380 = vsel %vm362, %v378, %v379
      %v381 = vrot.slane %v268, 1
      %v382 = vsel %vm362, %v379, %v381
      %v383 = vrot.slane %v269, 1
      %v384 = vrot.slane %v270, 1
      %v385 = vsel %vm362, %v383, %v384
      %v386 = vrot.slane %v271, 1
      %v387 = vsel %vm362, %v384, %v386
      %v388 = vrot.slane %v272, 1
      %v389 = vrot.slane %v273, 1
      %v390 = vsel %vm362, %v388, %v389
      %v391 = vrot.slane %v274, 1
      %v392 = vsel %vm362, %v389, %v391
      %v393 = vrot.slane %v275, 1
      %v394 = vrot.slane %v276, 1
      %v395 = vsel %vm362, %v393, %v394
      %v396 = vrot.slane %v277, 1
      %v397 = vsel %vm362, %v394, %v396
      %v398 = vrot.slane %v278, 1
      %v399 = vrot.slane %v279, 1
      %v400 = vsel %vm362, %v398, %v399
      %v401 = vrot.slane %v280, 1
      %v402 = vsel %vm362, %v399, %v401
      %v403 = vrot.slane %v281, 1
      %v404 = vrot.slane %v282, 1
      %v405 = vsel %vm362, %v403, %v404
      %v406 = vrot.slane %v283, 1
      %v407 = vsel %vm362, %v404, %v406
      %v408 = vrot.slane %v284, 1
      %v409 = vrot.slane %v285, 1
      %v410 = vsel %vm362, %v408, %v409
      %v411 = vrot.slane %v286, 1
      %v412 = vsel %vm362, %v409, %v411
      %v413 = vrot.slane %v287, 1
      %v414 = vrot.slane %v288, 1
      %v415 = vsel %vm362, %v413, %v414
      %v416 = vrot.slane %v289, 1
      %v417 = vsel %vm362, %v414, %v416
      %v418 = vrot.slane %v290, 1
      %v419 = vrot.slane %v291, 1
      %v420 = vsel %vm362, %v418, %v419
      %v421 = vrot.slane %v292, 1
      %v422 = vsel %vm362, %v419, %v421
      %v423 = vrot.slane %v293, 1
      %v424 = vrot.slane %v294, 1
      %v425 = vsel %vm362, %v423, %v424
      %v426 = vrot.slane %v295, 1
      %v427 = vsel %vm362, %v424, %v426
      %v428 = vrot.slane %v296, 1
      %v429 = vrot.slane %v297, 1
      %v430 = vsel %vm362, %v428, %v429
      %v431 = vrot.slane %v298, 1
      %v432 = vsel %vm362, %v429, %v431
      %v433 = vrot.slane %v299, 1
      %v434 = vrot.slane %v300, 1
      %v435 = vsel %vm362, %v433, %v434
      %v436 = vrot.slane %v301, 1
      %v437 = vsel %vm362, %v434, %v436
      %v438 = vrot.slane %v302, 1
      %v439 = vrot.slane %v303, 1
      %v440 = vsel %vm362, %v438, %v439
      %v441 = vrot.slane %v304, 1
      %v442 = vsel %vm362, %v439, %v441
      %vm443 = vcmask 31744
      %v444 = vsel %vm443, %v365, 0
      %v446 = vsel %vm443, %v367, 0
      %v448 = vsel %vm443, %v370, 0
      %v450 = vsel %vm443, %v372, 0
      %v452 = vsel %vm443, %v375, 0
      %v454 = vsel %vm443, %v377, 0
      %v456 = vsel %vm443, %v380, 0
      %v458 = vsel %vm443, %v382, 0
      %v460 = vsel %vm443, %v385, 0
      %v462 = vsel %vm443, %v387, 0
      %v464 = vsel %vm443, %v390, 0
      %v466 = vsel %vm443, %v392, 0
      %v468 = vsel %vm443, %v395, 0
      %v470 = vsel %vm443, %v397, 0
      %v472 = vsel %vm443, %v400, 0
      %v474 = vsel %vm443, %v402, 0
      %v476 = vsel %vm443, %v405, 0
      %v478 = vsel %vm443, %v407, 0
      %v480 = vsel %vm443, %v410, 0
      %v482 = vsel %vm443, %v412, 0
      %v484 = vsel %vm443, %v415, 0
      %v486 = vsel %vm443, %v417, 0
      %v488 = vsel %vm443, %v420, 0
      %v490 = vsel %vm443, %v422, 0
      %v492 = vsel %vm443, %v425, 0
      %v494 = vsel %vm443, %v427, 0
      %v496 = vsel %vm443, %v430, 0
      %v498 = vsel %vm443, %v432, 0
      %v500 = vsel %vm443, %v435, 0
      %v502 = vsel %vm443, %v437, 0
      %v504 = vsel %vm443, %v440, 0
      %v506 = vsel %vm443, %v442, 0
      %vm508 = vcmask 1043456
      %v510 = vsel %vm508, %v313, 0
      %512 = vmatprep.subr.mxu0 0.0
      %513 = vmatpush1.msra.mxu0 %v510
      %514 = vmatprep.subr.mxu0 0.0
      %515 = vmatpush1.msra.mxu0 0.0
      %516 = vmatprep.subr.mxu0 0.0
      %517 = vmatpush1.msra.mxu0 0.0
      %518 = vmatprep.subr.mxu0 0.0
      %519 = vmatpush1.msra.mxu0 0.0
      %520 = vmatprep.subr.mxu0 0.0
      %521 = vmatpush1.msra.mxu0 0.0
      %522 = vmatprep.subr.mxu0 0.0
      %523 = vmatpush1.msra.mxu0 0.0
      %524 = vmatprep.subr.mxu0 0.0
      %525 = vmatpush1.msra.mxu0 0.0
      %526 = vmatprep.subr.mxu0 0.0
      %527 = vmatpush1.msra.mxu0 0.0
      %528 = vmatprep.subr.mxu0 0.0
      %529 = vmatpush1.msra.mxu0 0.0
      %530 = vmatprep.subr.mxu0 0.0
      %531 = vmatpush1.msra.mxu0 0.0
      %532 = vmatprep.subr.mxu0 0.0
      %533 = vmatpush1.msra.mxu0 0.0
      %534 = vmatprep.subr.mxu0 0.0
      %535 = vmatpush1.msra.mxu0 0.0
      %536 = vmatprep.subr.mxu0 0.0
      %537 = vmatpush1.msra.mxu0 0.0
      %538 = vmatprep.subr.mxu0 0.0
      %539 = vmatpush1.msra.mxu0 0.0
      %540 = vmatprep.subr.mxu0 0.0
      %541 = vmatpush1.msra.mxu0 0.0
      %542 = vmatprep.subr.mxu0 0.0
      %543 = vmatpush1.msra.mxu0 0.0
      %544 = vmatprep.subr.mxu0 0.0
      %545 = vmatpush1.msra.mxu0 0.0
      %546 = vmatprep.subr.mxu0 0.0
      %547 = vmatpush1.msra.mxu0 0.0
      %548 = vmatprep.subr.mxu0 0.0
      %549 = vmatpush1.msra.mxu0 0.0
      %550 = vmatprep.subr.mxu0 0.0
      %551 = vmatpush1.msra.mxu0 0.0
      %552 = vmatprep.subr.mxu0 0.0
      %553 = vmatpush1.msra.mxu0 0.0
      %554 = vmatprep.subr.mxu0 0.0
      %555 = vmatpush1.msra.mxu0 0.0
      %556 = vmatprep.subr.mxu0 0.0
      %557 = vmatpush1.msra.mxu0 0.0
      %558 = vmatprep.subr.mxu0 0.0
      %559 = vmatpush1.msra.mxu0 0.0
      %560 = vmatprep.subr.mxu0 0.0
      %561 = vmatpush1.msra.mxu0 0.0
      %562 = vmatprep.subr.mxu0 0.0
      %563 = vmatpush1.msra.mxu0 0.0
      %564 = vmatprep.subr.mxu0 0.0
      %565 = vmatpush1.msra.mxu0 0.0
      %566 = vmatprep.subr.mxu0 0.0
      %567 = vmatpush1.msra.mxu0 0.0
      %568 = vmatprep.subr.mxu0 0.0
      %569 = vmatpush1.msra.mxu0 0.0
      %570 = vmatprep.subr.mxu0 0.0
      %571 = vmatpush1.msra.mxu0 0.0
      %572 = vmatprep.subr.mxu0 0.0
      %573 = vmatpush1.msra.mxu0 0.0
      %574 = vmatprep.subr.mxu0 0.0
      %575 = vmatpush1.msra.mxu0 0.0
      %576 = vmatprep.mubr.f32.mxu0 0.0
      %577 = vmatmul.mubr.f32.gmra.mrb[0].mxu0 %v444
      %v578 = vpop.f32.mrb[0].mxu0
      %v579 = vadd.f32 0.0, %v578
      %v580 = vpop.f32.mrb[0].mxu0
      %581 = vmatprep.mubr.f32.mxu0 0.0
      %582 = vmatmul.mubr.f32.gmra.mrb[0].mxu0 %v446
      %v583 = vpop.f32.mrb[0].mxu0
      %v584 = vadd.f32 0.0, %v583
      %v585 = vpop.f32.mrb[0].mxu0
      %586 = vmatprep.mubr.f32.mxu0 0.0
      %587 = vmatmul.mubr.f32.gmra.mrb[0].mxu0 %v448
      %v588 = vpop.f32.mrb[0].mxu0
      %v589 = vadd.f32 0.0, %v588
      %v590 = vpop.f32.mrb[0].mxu0
      %591 = vmatprep.mubr.f32.mxu0 0.0
      %592 = vmatmul.mubr.f32.gmra.mrb[0].mxu0 %v450
      %v593 = vpop.f32.mrb[0].mxu0
      %v594 = vadd.f32 0.0, %v593
      %v595 = vpop.f32.mrb[0].mxu0
      %596 = vmatprep.mubr.f32.mxu0 0.0
      %597 = vmatmul.mubr.f32.gmra.mrb[0].mxu0 %v452
      %v598 = vpop.f32.mrb[0].mxu0
      %v599 = vadd.f32 0.0, %v598
      %v600 = vpop.f32.mrb[0].mxu0
      %601 = vmatprep.mubr.f32.mxu0 0.0
      %602 = vmatmul.mubr.f32.gmra.mrb[0].mxu0 %v454
      %v603 = vpop.f32.mrb[0].mxu0
      %v604 = vadd.f32 0.0, %v603
      %v605 = vpop.f32.mrb[0].mxu0
      %606 = vmatprep.mubr.f32.mxu0 0.0
      %607 = vmatmul.mubr.f32.gmra.mrb[0].mxu0 %v456
      %v608 = vpop.f32.mrb[0].mxu0
      %v609 = vadd.f32 0.0, %v608
      %v610 = vpop.f32.mrb[0].mxu0
      %611 = vmatprep.mubr.f32.mxu0 0.0
      %612 = vmatmul.mubr.f32.gmra.mrb[0].mxu0 %v458
      %v613 = vpop.f32.mrb[0].mxu0
      %v614 = vadd.f32 0.0, %v613
      %v615 = vpop.f32.mrb[0].mxu0
      %616 = vmatprep.mubr.f32.mxu0 0.0
      %617 = vmatmul.mubr.f32.gmra.mrb[0].mxu0 %v460
      %v618 = vpop.f32.mrb[0].mxu0
      %v619 = vadd.f32 0.0, %v618
      %v620 = vpop.f32.mrb[0].mxu0
      %621 = vmatprep.mubr.f32.mxu0 0.0
      %622 = vmatmul.mubr.f32.gmra.mrb[0].mxu0 %v462
      %v623 = vpop.f32.mrb[0].mxu0
      %v624 = vadd.f32 0.0, %v623
      %v625 = vpop.f32.mrb[0].mxu0
      %626 = vmatprep.mubr.f32.mxu0 0.0
      %627 = vmatmul.mubr.f32.gmra.mrb[0].mxu0 %v464
      %v628 = vpop.f32.mrb[0].mxu0
      %v629 = vadd.f32 0.0, %v628
      %v630 = vpop.f32.mrb[0].mxu0
      %631 = vmatprep.mubr.f32.mxu0 0.0
      %632 = vmatmul.mubr.f32.gmra.mrb[0].mxu0 %v466
      %v633 = vpop.f32.mrb[0].mxu0
      %v634 = vadd.f32 0.0, %v633
      %v635 = vpop.f32.mrb[0].mxu0
      %636 = vmatprep.mubr.f32.mxu0 0.0
      %637 = vmatmul.mubr.f32.gmra.mrb[0].mxu0 %v468
      %v638 = vpop.f32.mrb[0].mxu0
      %v639 = vadd.f32 0.0, %v638
      %v640 = vpop.f32.mrb[0].mxu0
      %641 = vmatprep.mubr.f32.mxu0 0.0
      %642 = vmatmul.mubr.f32.gmra.mrb[0].mxu0 %v470
      %v643 = vpop.f32.mrb[0].mxu0
      %v644 = vadd.f32 0.0, %v643
      %v645 = vpop.f32.mrb[0].mxu0
      %646 = vmatprep.mubr.f32.mxu0 0.0
      %647 = vmatmul.mubr.f32.gmra.mrb[0].mxu0 %v472
      %v648 = vpop.f32.mrb[0].mxu0
      %v649 = vadd.f32 0.0, %v648
      %v650 = vpop.f32.mrb[0].mxu0
      %651 = vmatprep.mubr.f32.mxu0 0.0
      %652 = vmatmul.mubr.f32.gmra.mrb[0].mxu0 %v474
      %v653 = vpop.f32.mrb[0].mxu0
      %v654 = vadd.f32 0.0, %v653
      %v655 = vpop.f32.mrb[0].mxu0
      %656 = vmatprep.mubr.f32.mxu0 0.0
      %657 = vmatmul.mubr.f32.gmra.mrb[0].mxu0 %v476
      %v658 = vpop.f32.mrb[0].mxu0
      %v659 = vadd.f32 0.0, %v658
      %v660 = vpop.f32.mrb[0].mxu0
      %661 = vmatprep.mubr.f32.mxu0 0.0
      %662 = vmatmul.mubr.f32.gmra.mrb[0].mxu0 %v478
      %v663 = vpop.f32.mrb[0].mxu0
      %v664 = vadd.f32 0.0, %v663
      %v665 = vpop.f32.mrb[0].mxu0
      %666 = vmatprep.mubr.f32.mxu0 0.0
      %667 = vmatmul.mubr.f32.gmra.mrb[0].mxu0 %v480
      %v668 = vpop.f32.mrb[0].mxu0
      %v669 = vadd.f32 0.0, %v668
      %v670 = vpop.f32.mrb[0].mxu0
      %671 = vmatprep.mubr.f32.mxu0 0.0
      %672 = vmatmul.mubr.f32.gmra.mrb[0].mxu0 %v482
      %v673 = vpop.f32.mrb[0].mxu0
      %v674 = vadd.f32 0.0, %v673
      %v675 = vpop.f32.mrb[0].mxu0
      %676 = vmatprep.mubr.f32.mxu0 0.0
      %677 = vmatmul.mubr.f32.gmra.mrb[0].mxu0 %v484
      %v678 = vpop.f32.mrb[0].mxu0
      %v679 = vadd.f32 0.0, %v678
      %v680 = vpop.f32.mrb[0].mxu0
      %681 = vmatprep.mubr.f32.mxu0 0.0
      %682 = vmatmul.mubr.f32.gmra.mrb[0].mxu0 %v486
      %v683 = vpop.f32.mrb[0].mxu0
      %v684 = vadd.f32 0.0, %v683
      %v685 = vpop.f32.mrb[0].mxu0
      %686 = vmatprep.mubr.f32.mxu0 0.0
      %687 = vmatmul.mubr.f32.gmra.mrb[0].mxu0 %v488
      %v688 = vpop.f32.mrb[0].mxu0
      %v689 = vadd.f32 0.0, %v688
      %v690 = vpop.f32.mrb[0].mxu0
      %691 = vmatprep.mubr.f32.mxu0 0.0
      %692 = vmatmul.mubr.f32.gmra.mrb[0].mxu0 %v490
      %v693 = vpop.f32.mrb[0].mxu0
      %v694 = vadd.f32 0.0, %v693
      %v695 = vpop.f32.mrb[0].mxu0
      %696 = vmatprep.mubr.f32.mxu0 0.0
      %697 = vmatmul.mubr.f32.gmra.mrb[0].mxu0 %v492
      %v698 = vpop.f32.mrb[0].mxu0
      %v699 = vadd.f32 0.0, %v698
      %v700 = vpop.f32.mrb[0].mxu0
      %701 = vmatprep.mubr.f32.mxu0 0.0
      %702 = vmatmul.mubr.f32.gmra.mrb[0].mxu0 %v494
      %v703 = vpop.f32.mrb[0].mxu0
      %v704 = vadd.f32 0.0, %v703
      %v705 = vpop.f32.mrb[0].mxu0
      %706 = vmatprep.mubr.f32.mxu0 0.0
      %707 = vmatmul.mubr.f32.gmra.mrb[0].mxu0 %v496
      %v708 = vpop.f32.mrb[0].mxu0
      %v709 = vadd.f32 0.0, %v708
      %v710 = vpop.f32.mrb[0].mxu0
      %711 = vmatprep.mubr.f32.mxu0 0.0
      %712 = vmatmul.mubr.f32.gmra.mrb[0].mxu0 %v498
      %v713 = vpop.f32.mrb[0].mxu0
      %v714 = vadd.f32 0.0, %v713
      %v715 = vpop.f32.mrb[0].mxu0
      %716 = vmatprep.mubr.f32.mxu0 0.0
      %717 = vmatmul.mubr.f32.gmra.mrb[0].mxu0 %v500
      %v718 = vpop.f32.mrb[0].mxu0
      %v719 = vadd.f32 0.0, %v718
      %v720 = vpop.f32.mrb[0].mxu0
      %721 = vmatprep.mubr.f32.mxu0 0.0
      %722 = vmatmul.mubr.f32.gmra.mrb[0].mxu0 %v502
      %v723 = vpop.f32.mrb[0].mxu0
      %v724 = vadd.f32 0.0, %v723
      %v725 = vpop.f32.mrb[0].mxu0
      %726 = vmatprep.mubr.f32.mxu0 0.0
      %727 = vmatmul.mubr.f32.gmra.mrb[0].mxu0 %v504
      %v728 = vpop.f32.mrb[0].mxu0
      %v729 = vadd.f32 0.0, %v728
      %v730 = vpop.f32.mrb[0].mxu0
      %731 = vmatprep.mubr.f32.mxu0 0.0
      %732 = vmatmul.mubr.f32.gmra.mrb[0].mxu0 %v506
      %v733 = vpop.f32.mrb[0].mxu0
      %v734 = vadd.f32 0.0, %v733
      %v735 = vpop.f32.mrb[0].mxu0
      %736 = vdwg.mxu0
      %v737 = vsel %vm443, %v257, 0
      %v739 = vsel %vm443, %v258, 0
      %v741 = vsel %vm443, %v260, 0
      %v743 = vsel %vm443, %v261, 0
      %v745 = vsel %vm443, %v263, 0
      %v747 = vsel %vm443, %v264, 0
      %v749 = vsel %vm443, %v266, 0
      %v751 = vsel %vm443, %v267, 0
      %v753 = vsel %vm443, %v269, 0
      %v755 = vsel %vm443, %v270, 0
      %v757 = vsel %vm443, %v272, 0
      %v759 = vsel %vm443, %v273, 0
      %v761 = vsel %vm443, %v275, 0
      %v763 = vsel %vm443, %v276, 0
      %v765 = vsel %vm443, %v278, 0
      %v767 = vsel %vm443, %v279, 0
      %v769 = vsel %vm443, %v281, 0
      %v771 = vsel %vm443, %v282, 0
      %v773 = vsel %vm443, %v284, 0
      %v775 = vsel %vm443, %v285, 0
      %v777 = vsel %vm443, %v287, 0
      %v779 = vsel %vm443, %v288, 0
      %v781 = vsel %vm443, %v290, 0
      %v783 = vsel %vm443, %v291, 0
      %v785 = vsel %vm443, %v293, 0
      %v787 = vsel %vm443, %v294, 0
      %v789 = vsel %vm443, %v296, 0
      %v791 = vsel %vm443, %v297, 0
      %v793 = vsel %vm443, %v299, 0
      %v795 = vsel %vm443, %v300, 0
      %v797 = vsel %vm443, %v302, 0
      %v799 = vsel %vm443, %v303, 0
      %v802 = vsel %vm508, %v311, 0
      %804 = vmatprep.subr.mxu0 0.0
      %805 = vmatpush1.msra.mxu0 %v802
      %806 = vmatprep.subr.mxu0 0.0
      %807 = vmatpush1.msra.mxu0 0.0
      %808 = vmatprep.subr.mxu0 0.0
      %809 = vmatpush1.msra.mxu0 0.0
      %810 = vmatprep.subr.mxu0 0.0
      %811 = vmatpush1.msra.mxu0 0.0
      %812 = vmatprep.subr.mxu0 0.0
      %813 = vmatpush1.msra.mxu0 0.0
      %814 = vmatprep.subr.mxu0 0.0
      %815 = vmatpush1.msra.mxu0 0.0
      %816 = vmatprep.subr.mxu0 0.0
      %817 = vmatpush1.msra.mxu0 0.0
      %818 = vmatprep.subr.mxu0 0.0
      %819 = vmatpush1.msra.mxu0 0.0
      %820 = vmatprep.subr.mxu0 0.0
      %821 = vmatpush1.msra.mxu0 0.0
      %822 = vmatprep.subr.mxu0 0.0
      %823 = vmatpush1.msra.mxu0 0.0
      %824 = vmatprep.subr.mxu0 0.0
      %825 = vmatpush1.msra.mxu0 0.0
      %826 = vmatprep.subr.mxu0 0.0
      %827 = vmatpush1.msra.mxu0 0.0
      %828 = vmatprep.subr.mxu0 0.0
      %829 = vmatpush1.msra.mxu0 0.0
      %830 = vmatprep.subr.mxu0 0.0
      %831 = vmatpush1.msra.mxu0 0.0
      %832 = vmatprep.subr.mxu0 0.0
      %833 = vmatpush1.msra.mxu0 0.0
      %834 = vmatprep.subr.mxu0 0.0
      %835 = vmatpush1.msra.mxu0 0.0
      %836 = vmatprep.subr.mxu0 0.0
      %837 = vmatpush1.msra.mxu0 0.0
      %838 = vmatprep.subr.mxu0 0.0
      %839 = vmatpush1.msra.mxu0 0.0
      %840 = vmatprep.subr.mxu0 0.0
      %841 = vmatpush1.msra.mxu0 0.0
      %842 = vmatprep.subr.mxu0 0.0
      %843 = vmatpush1.msra.mxu0 0.0
      %844 = vmatprep.subr.mxu0 0.0
      %845 = vmatpush1.msra.mxu0 0.0
      %846 = vmatprep.subr.mxu0 0.0
      %847 = vmatpush1.msra.mxu0 0.0
      %848 = vmatprep.subr.mxu0 0.0
      %849 = vmatpush1.msra.mxu0 0.0
      %850 = vmatprep.subr.mxu0 0.0
      %851 = vmatpush1.msra.mxu0 0.0
      %852 = vmatprep.subr.mxu0 0.0
      %853 = vmatpush1.msra.mxu0 0.0
      %854 = vmatprep.subr.mxu0 0.0
      %855 = vmatpush1.msra.mxu0 0.0
      %856 = vmatprep.subr.mxu0 0.0
      %857 = vmatpush1.msra.mxu0 0.0
      %858 = vmatprep.subr.mxu0 0.0
      %859 = vmatpush1.msra.mxu0 0.0
      %860 = vmatprep.subr.mxu0 0.0
      %861 = vmatpush1.msra.mxu0 0.0
      %862 = vmatprep.subr.mxu0 0.0
      %863 = vmatpush1.msra.mxu0 0.0
      %864 = vmatprep.subr.mxu0 0.0
      %865 = vmatpush1.msra.mxu0 0.0
      %866 = vmatprep.subr.mxu0 0.0
      %867 = vmatpush1.msra.mxu0 0.0
      %868 = vmatprep.mubr.f32.mxu0 0.0
      %869 = vmatmul.mubr.f32.gmra.mrb[0].mxu0 %v737
      %v870 = vpop.f32.mrb[0].mxu0
      %v871 = vadd.f32 %v579, %v870
      %v872 = vpop.f32.mrb[0].mxu0
      %873 = vmatprep.mubr.f32.mxu0 0.0
      %874 = vmatmul.mubr.f32.gmra.mrb[0].mxu0 %v739
      %v875 = vpop.f32.mrb[0].mxu0
      %v876 = vadd.f32 %v584, %v875
      %v877 = vpop.f32.mrb[0].mxu0
      %878 = vmatprep.mubr.f32.mxu0 0.0
      %879 = vmatmul.mubr.f32.gmra.mrb[0].mxu0 %v741
      %v880 = vpop.f32.mrb[0].mxu0
      %v881 = vadd.f32 %v589, %v880
      %v882 = vpop.f32.mrb[0].mxu0
      %883 = vmatprep.mubr.f32.mxu0 0.0
      %884 = vmatmul.mubr.f32.gmra.mrb[0].mxu0 %v743
      %v885 = vpop.f32.mrb[0].mxu0
      %v886 = vadd.f32 %v594, %v885
      %v887 = vpop.f32.mrb[0].mxu0
      %888 = vmatprep.mubr.f32.mxu0 0.0
      %889 = vmatmul.mubr.f32.gmra.mrb[0].mxu0 %v745
      %v890 = vpop.f32.mrb[0].mxu0
      %v891 = vadd.f32 %v599, %v890
      %v892 = vpop.f32.mrb[0].mxu0
      %893 = vmatprep.mubr.f32.mxu0 0.0
      %894 = vmatmul.mubr.f32.gmra.mrb[0].mxu0 %v747
      %v895 = vpop.f32.mrb[0].mxu0
      %v896 = vadd.f32 %v604, %v895
      %v897 = vpop.f32.mrb[0].mxu0
      %898 = vmatprep.mubr.f32.mxu0 0.0
      %899 = vmatmul.mubr.f32.gmra.mrb[0].mxu0 %v749
      %v900 = vpop.f32.mrb[0].mxu0
      %v901 = vadd.f32 %v609, %v900
      %v902 = vpop.f32.mrb[0].mxu0
      %903 = vmatprep.mubr.f32.mxu0 0.0
      %904 = vmatmul.mubr.f32.gmra.mrb[0].mxu0 %v751
      %v905 = vpop.f32.mrb[0].mxu0
      %v906 = vadd.f32 %v614, %v905
      %v907 = vpop.f32.mrb[0].mxu0
      %908 = vmatprep.mubr.f32.mxu0 0.0
      %909 = vmatmul.mubr.f32.gmra.mrb[0].mxu0 %v753
      %v910 = vpop.f32.mrb[0].mxu0
      %v911 = vadd.f32 %v619, %v910
      %v912 = vpop.f32.mrb[0].mxu0
      %913 = vmatprep.mubr.f32.mxu0 0.0
      %914 = vmatmul.mubr.f32.gmra.mrb[0].mxu0 %v755
      %v915 = vpop.f32.mrb[0].mxu0
      %v916 = vadd.f32 %v624, %v915
      %v917 = vpop.f32.mrb[0].mxu0
      %918 = vmatprep.mubr.f32.mxu0 0.0
      %919 = vmatmul.mubr.f32.gmra.mrb[0].mxu0 %v757
      %v920 = vpop.f32.mrb[0].mxu0
      %v921 = vadd.f32 %v629, %v920
      %v922 = vpop.f32.mrb[0].mxu0
      %923 = vmatprep.mubr.f32.mxu0 0.0
      %924 = vmatmul.mubr.f32.gmra.mrb[0].mxu0 %v759
      %v925 = vpop.f32.mrb[0].mxu0
      %v926 = vadd.f32 %v634, %v925
      %v927 = vpop.f32.mrb[0].mxu0
      %928 = vmatprep.mubr.f32.mxu0 0.0
      %929 = vmatmul.mubr.f32.gmra.mrb[0].mxu0 %v761
      %v930 = vpop.f32.mrb[0].mxu0
      %v931 = vadd.f32 %v639, %v930
      %v932 = vpop.f32.mrb[0].mxu0
      %933 = vmatprep.mubr.f32.mxu0 0.0
      %934 = vmatmul.mubr.f32.gmra.mrb[0].mxu0 %v763
      %v935 = vpop.f32.mrb[0].mxu0
      %v936 = vadd.f32 %v644, %v935
      %v937 = vpop.f32.mrb[0].mxu0
      %938 = vmatprep.mubr.f32.mxu0 0.0
      %939 = vmatmul.mubr.f32.gmra.mrb[0].mxu0 %v765
      %v940 = vpop.f32.mrb[0].mxu0
      %v941 = vadd.f32 %v649, %v940
      %v942 = vpop.f32.mrb[0].mxu0
      %943 = vmatprep.mubr.f32.mxu0 0.0
      %944 = vmatmul.mubr.f32.gmra.mrb[0].mxu0 %v767
      %v945 = vpop.f32.mrb[0].mxu0
      %v946 = vadd.f32 %v654, %v945
      %v947 = vpop.f32.mrb[0].mxu0
      %948 = vmatprep.mubr.f32.mxu0 0.0
      %949 = vmatmul.mubr.f32.gmra.mrb[0].mxu0 %v769
      %v950 = vpop.f32.mrb[0].mxu0
      %v951 = vadd.f32 %v659, %v950
      %v952 = vpop.f32.mrb[0].mxu0
      %953 = vmatprep.mubr.f32.mxu0 0.0
      %954 = vmatmul.mubr.f32.gmra.mrb[0].mxu0 %v771
      %v955 = vpop.f32.mrb[0].mxu0
      %v956 = vadd.f32 %v664, %v955
      %v957 = vpop.f32.mrb[0].mxu0
      %958 = vmatprep.mubr.f32.mxu0 0.0
      %959 = vmatmul.mubr.f32.gmra.mrb[0].mxu0 %v773
      %v960 = vpop.f32.mrb[0].mxu0
      %v961 = vadd.f32 %v669, %v960
      %v962 = vpop.f32.mrb[0].mxu0
      %963 = vmatprep.mubr.f32.mxu0 0.0
      %964 = vmatmul.mubr.f32.gmra.mrb[0].mxu0 %v775
      %v965 = vpop.f32.mrb[0].mxu0
      %v966 = vadd.f32 %v674, %v965
      %v967 = vpop.f32.mrb[0].mxu0
      %968 = vmatprep.mubr.f32.mxu0 0.0
      %969 = vmatmul.mubr.f32.gmra.mrb[0].mxu0 %v777
      %v970 = vpop.f32.mrb[0].mxu0
      %v971 = vadd.f32 %v679, %v970
      %v972 = vpop.f32.mrb[0].mxu0
      %973 = vmatprep.mubr.f32.mxu0 0.0
      %974 = vmatmul.mubr.f32.gmra.mrb[0].mxu0 %v779
      %v975 = vpop.f32.mrb[0].mxu0
      %v976 = vadd.f32 %v684, %v975
      %v977 = vpop.f32.mrb[0].mxu0
      %978 = vmatprep.mubr.f32.mxu0 0.0
      %979 = vmatmul.mubr.f32.gmra.mrb[0].mxu0 %v781
      %v980 = vpop.f32.mrb[0].mxu0
      %v981 = vadd.f32 %v689, %v980
      %v982 = vpop.f32.mrb[0].mxu0
      %983 = vmatprep.mubr.f32.mxu0 0.0
      %984 = vmatmul.mubr.f32.gmra.mrb[0].mxu0 %v783
      %v985 = vpop.f32.mrb[0].mxu0
      %v986 = vadd.f32 %v694, %v985
      %v987 = vpop.f32.mrb[0].mxu0
      %988 = vmatprep.mubr.f32.mxu0 0.0
      %989 = vmatmul.mubr.f32.gmra.mrb[0].mxu0 %v785
      %v990 = vpop.f32.mrb[0].mxu0
      %v991 = vadd.f32 %v699, %v990
      %v992 = vpop.f32.mrb[0].mxu0
      %993 = vmatprep.mubr.f32.mxu0 0.0
      %994 = vmatmul.mubr.f32.gmra.mrb[0].mxu0 %v787
      %v995 = vpop.f32.mrb[0].mxu0
      %v996 = vadd.f32 %v704, %v995
      %v997 = vpop.f32.mrb[0].mxu0
      %998 = vmatprep.mubr.f32.mxu0 0.0
      %999 = vmatmul.mubr.f32.gmra.mrb[0].mxu0 %v789
      %v1000 = vpop.f32.mrb[0].mxu0
      %v1001 = vadd.f32 %v709, %v1000
      %v1002 = vpop.f32.mrb[0].mxu0
      %1003 = vmatprep.mubr.f32.mxu0 0.0
      %1004 = vmatmul.mubr.f32.gmra.mrb[0].mxu0 %v791
      %v1005 = vpop.f32.mrb[0].mxu0
      %v1006 = vadd.f32 %v714, %v1005
      %v1007 = vpop.f32.mrb[0].mxu0
      %1008 = vmatprep.mubr.f32.mxu0 0.0
      %1009 = vmatmul.mubr.f32.gmra.mrb[0].mxu0 %v793
      %v1010 = vpop.f32.mrb[0].mxu0
      %v1011 = vadd.f32 %v719, %v1010
      %v1012 = vpop.f32.mrb[0].mxu0
      %1013 = vmatprep.mubr.f32.mxu0 0.0
      %1014 = vmatmul.mubr.f32.gmra.mrb[0].mxu0 %v795
      %v1015 = vpop.f32.mrb[0].mxu0
      %v1016 = vadd.f32 %v724, %v1015
      %v1017 = vpop.f32.mrb[0].mxu0
      %1018 = vmatprep.mubr.f32.mxu0 0.0
      %1019 = vmatmul.mubr.f32.gmra.mrb[0].mxu0 %v797
      %v1020 = vpop.f32.mrb[0].mxu0
      %v1021 = vadd.f32 %v729, %v1020
      %v1022 = vpop.f32.mrb[0].mxu0
      %1023 = vmatprep.mubr.f32.mxu0 0.0
      %1024 = vmatmul.mubr.f32.gmra.mrb[0].mxu0 %v799
      %v1025 = vpop.f32.mrb[0].mxu0
      %v1026 = vadd.f32 %v734, %v1025
      %v1027 = vpop.f32.mrb[0].mxu0
      %1028 = vdwg.mxu0
      %s1029 = scalar_lea.vmem %s238, 8
      %v1030 = vld [vmem:[%s1029] sm:$0xf]
      %v1032 = vsel %vm443, %v305, 0
      %v1035 = vsel %vm443, %v306, 0
      %v1038 = vsel %vm508, %v1030, 0
      %1040 = vmatprep.subr.mxu0 0.0
      %1041 = vmatpush1.msra.mxu0 %v1038
      %1042 = vmatprep.subr.mxu0 0.0
      %1043 = vmatpush1.msra.mxu0 0.0
      %1044 = vmatprep.subr.mxu0 0.0
      %1045 = vmatpush1.msra.mxu0 0.0
      %1046 = vmatprep.subr.mxu0 0.0
      %1047 = vmatpush1.msra.mxu0 0.0
      %1048 = vmatprep.subr.mxu0 0.0
      %1049 = vmatpush1.msra.mxu0 0.0
      %1050 = vmatprep.subr.mxu0 0.0
      %1051 = vmatpush1.msra.mxu0 0.0
      %1052 = vmatprep.subr.mxu0 0.0
      %1053 = vmatpush1.msra.mxu0 0.0
      %1054 = vmatprep.subr.mxu0 0.0
      %1055 = vmatpush1.msra.mxu0 0.0
      %1056 = vmatprep.subr.mxu0 0.0
      %1057 = vmatpush1.msra.mxu0 0.0
      %1058 = vmatprep.subr.mxu0 0.0
      %1059 = vmatpush1.msra.mxu0 0.0
      %1060 = vmatprep.subr.mxu0 0.0
      %1061 = vmatpush1.msra.mxu0 0.0
      %1062 = vmatprep.subr.mxu0 0.0
      %1063 = vmatpush1.msra.mxu0 0.0
      %1064 = vmatprep.subr.mxu0 0.0
      %1065 = vmatpush1.msra.mxu0 0.0
      %1066 = vmatprep.subr.mxu0 0.0
      %1067 = vmatpush1.msra.mxu0 0.0
      %1068 = vmatprep.subr.mxu0 0.0
      %1069 = vmatpush1.msra.mxu0 0.0
      %1070 = vmatprep.subr.mxu0 0.0
      %1071 = vmatpush1.msra.mxu0 0.0
      %1072 = vmatprep.subr.mxu0 0.0
      %1073 = vmatpush1.msra.mxu0 0.0
      %1074 = vmatprep.subr.mxu0 0.0
      %1075 = vmatpush1.msra.mxu0 0.0
      %1076 = vmatprep.subr.mxu0 0.0
      %1077 = vmatpush1.msra.mxu0 0.0
      %1078 = vmatprep.subr.mxu0 0.0
      %1079 = vmatpush1.msra.mxu0 0.0
      %1080 = vmatprep.subr.mxu0 0.0
      %1081 = vmatpush1.msra.mxu0 0.0
      %1082 = vmatprep.subr.mxu0 0.0
      %1083 = vmatpush1.msra.mxu0 0.0
      %1084 = vmatprep.subr.mxu0 0.0
      %1085 = vmatpush1.msra.mxu0 0.0
      %1086 = vmatprep.subr.mxu0 0.0
      %1087 = vmatpush1.msra.mxu0 0.0
      %1088 = vmatprep.subr.mxu0 0.0
      %1089 = vmatpush1.msra.mxu0 0.0
      %1090 = vmatprep.subr.mxu0 0.0
      %1091 = vmatpush1.msra.mxu0 0.0
      %1092 = vmatprep.subr.mxu0 0.0
      %1093 = vmatpush1.msra.mxu0 0.0
      %1094 = vmatprep.subr.mxu0 0.0
      %1095 = vmatpush1.msra.mxu0 0.0
      %1096 = vmatprep.subr.mxu0 0.0
      %1097 = vmatpush1.msra.mxu0 0.0
      %1098 = vmatprep.subr.mxu0 0.0
      %1099 = vmatpush1.msra.mxu0 0.0
      %1100 = vmatprep.subr.mxu0 0.0
      %1101 = vmatpush1.msra.mxu0 0.0
      %1102 = vmatprep.subr.mxu0 0.0
      %1103 = vmatpush1.msra.mxu0 0.0
      %1104 = vmatprep.mubr.f32.mxu0 0.0
      %1105 = vmatmul.mubr.f32.gmra.mrb[0].mxu0 %v741
      %v1106 = vpop.f32.mrb[0].mxu0
      %v1107 = vadd.f32 0.0, %v1106
      %v1108 = vpop.f32.mrb[0].mxu0
      %1109 = vmatprep.mubr.f32.mxu0 0.0
      %1110 = vmatmul.mubr.f32.gmra.mrb[0].mxu0 %v743
      %v1111 = vpop.f32.mrb[0].mxu0
      %v1112 = vadd.f32 0.0, %v1111
      %v1113 = vpop.f32.mrb[0].mxu0
      %1114 = vmatprep.mubr.f32.mxu0 0.0
      %1115 = vmatmul.mubr.f32.gmra.mrb[0].mxu0 %v745
      %v1116 = vpop.f32.mrb[0].mxu0
      %v1117 = vadd.f32 0.0, %v1116
      %v1118 = vpop.f32.mrb[0].mxu0
      %1119 = vmatprep.mubr.f32.mxu0 0.0
      %1120 = vmatmul.mubr.f32.gmra.mrb[0].mxu0 %v747
      %v1121 = vpop.f32.mrb[0].mxu0
      %v1122 = vadd.f32 0.0, %v1121
      %v1123 = vpop.f32.mrb[0].mxu0
      %1124 = vmatprep.mubr.f32.mxu0 0.0
      %1125 = vmatmul.mubr.f32.gmra.mrb[0].mxu0 %v749
      %v1126 = vpop.f32.mrb[0].mxu0
      %v1127 = vadd.f32 0.0, %v1126
      %v1128 = vpop.f32.mrb[0].mxu0
      %1129 = vmatprep.mubr.f32.mxu0 0.0
      %1130 = vmatmul.mubr.f32.gmra.mrb[0].mxu0 %v751
      %v1131 = vpop.f32.mrb[0].mxu0
      %v1132 = vadd.f32 0.0, %v1131
      %v1133 = vpop.f32.mrb[0].mxu0
      %1134 = vmatprep.mubr.f32.mxu0 0.0
      %1135 = vmatmul.mubr.f32.gmra.mrb[0].mxu0 %v753
      %v1136 = vpop.f32.mrb[0].mxu0
      %v1137 = vadd.f32 0.0, %v1136
      %v1138 = vpop.f32.mrb[0].mxu0
      %1139 = vmatprep.mubr.f32.mxu0 0.0
      %1140 = vmatmul.mubr.f32.gmra.mrb[0].mxu0 %v755
      %v1141 = vpop.f32.mrb[0].mxu0
      %v1142 = vadd.f32 0.0, %v1141
      %v1143 = vpop.f32.mrb[0].mxu0
      %1144 = vmatprep.mubr.f32.mxu0 0.0
      %1145 = vmatmul.mubr.f32.gmra.mrb[0].mxu0 %v757
      %v1146 = vpop.f32.mrb[0].mxu0
      %v1147 = vadd.f32 0.0, %v1146
      %v1148 = vpop.f32.mrb[0].mxu0
      %1149 = vmatprep.mubr.f32.mxu0 0.0
      %1150 = vmatmul.mubr.f32.gmra.mrb[0].mxu0 %v759
      %v1151 = vpop.f32.mrb[0].mxu0
      %v1152 = vadd.f32 0.0, %v1151
      %v1153 = vpop.f32.mrb[0].mxu0
      %1154 = vmatprep.mubr.f32.mxu0 0.0
      %1155 = vmatmul.mubr.f32.gmra.mrb[0].mxu0 %v761
      %v1156 = vpop.f32.mrb[0].mxu0
      %v1157 = vadd.f32 0.0, %v1156
      %v1158 = vpop.f32.mrb[0].mxu0
      %1159 = vmatprep.mubr.f32.mxu0 0.0
      %1160 = vmatmul.mubr.f32.gmra.mrb[0].mxu0 %v763
      %v1161 = vpop.f32.mrb[0].mxu0
      %v1162 = vadd.f32 0.0, %v1161
      %v1163 = vpop.f32.mrb[0].mxu0
      %1164 = vmatprep.mubr.f32.mxu0 0.0
      %1165 = vmatmul.mubr.f32.gmra.mrb[0].mxu0 %v765
      %v1166 = vpop.f32.mrb[0].mxu0
      %v1167 = vadd.f32 0.0, %v1166
      %v1168 = vpop.f32.mrb[0].mxu0
      %1169 = vmatprep.mubr.f32.mxu0 0.0
      %1170 = vmatmul.mubr.f32.gmra.mrb[0].mxu0 %v767
      %v1171 = vpop.f32.mrb[0].mxu0
      %v1172 = vadd.f32 0.0, %v1171
      %v1173 = vpop.f32.mrb[0].mxu0
      %1174 = vmatprep.mubr.f32.mxu0 0.0
      %1175 = vmatmul.mubr.f32.gmra.mrb[0].mxu0 %v769
      %v1176 = vpop.f32.mrb[0].mxu0
      %v1177 = vadd.f32 0.0, %v1176
      %v1178 = vpop.f32.mrb[0].mxu0
      %1179 = vmatprep.mubr.f32.mxu0 0.0
      %1180 = vmatmul.mubr.f32.gmra.mrb[0].mxu0 %v771
      %v1181 = vpop.f32.mrb[0].mxu0
      %v1182 = vadd.f32 0.0, %v1181
      %v1183 = vpop.f32.mrb[0].mxu0
      %1184 = vmatprep.mubr.f32.mxu0 0.0
      %1185 = vmatmul.mubr.f32.gmra.mrb[0].mxu0 %v773
      %v1186 = vpop.f32.mrb[0].mxu0
      %v1187 = vadd.f32 0.0, %v1186
      %v1188 = vpop.f32.mrb[0].mxu0
      %1189 = vmatprep.mubr.f32.mxu0 0.0
      %1190 = vmatmul.mubr.f32.gmra.mrb[0].mxu0 %v775
      %v1191 = vpop.f32.mrb[0].mxu0
      %v1192 = vadd.f32 0.0, %v1191
      %v1193 = vpop.f32.mrb[0].mxu0
      %1194 = vmatprep.mubr.f32.mxu0 0.0
      %1195 = vmatmul.mubr.f32.gmra.mrb[0].mxu0 %v777
      %v1196 = vpop.f32.mrb[0].mxu0
      %v1197 = vadd.f32 0.0, %v1196
      %v1198 = vpop.f32.mrb[0].mxu0
      %1199 = vmatprep.mubr.f32.mxu0 0.0
      %1200 = vmatmul.mubr.f32.gmra.mrb[0].mxu0 %v779
      %v1201 = vpop.f32.mrb[0].mxu0
      %v1202 = vadd.f32 0.0, %v1201
      %v1203 = vpop.f32.mrb[0].mxu0
      %1204 = vmatprep.mubr.f32.mxu0 0.0
      %1205 = vmatmul.mubr.f32.gmra.mrb[0].mxu0 %v781
      %v1206 = vpop.f32.mrb[0].mxu0
      %v1207 = vadd.f32 0.0, %v1206
      %v1208 = vpop.f32.mrb[0].mxu0
      %1209 = vmatprep.mubr.f32.mxu0 0.0
      %1210 = vmatmul.mubr.f32.gmra.mrb[0].mxu0 %v783
      %v1211 = vpop.f32.mrb[0].mxu0
      %v1212 = vadd.f32 0.0, %v1211
      %v1213 = vpop.f32.mrb[0].mxu0
      %1214 = vmatprep.mubr.f32.mxu0 0.0
      %1215 = vmatmul.mubr.f32.gmra.mrb[0].mxu0 %v785
      %v1216 = vpop.f32.mrb[0].mxu0
      %v1217 = vadd.f32 0.0, %v1216
      %v1218 = vpop.f32.mrb[0].mxu0
      %1219 = vmatprep.mubr.f32.mxu0 0.0
      %1220 = vmatmul.mubr.f32.gmra.mrb[0].mxu0 %v787
      %v1221 = vpop.f32.mrb[0].mxu0
      %v1222 = vadd.f32 0.0, %v1221
      %v1223 = vpop.f32.mrb[0].mxu0
      %1224 = vmatprep.mubr.f32.mxu0 0.0
      %1225 = vmatmul.mubr.f32.gmra.mrb[0].mxu0 %v789
      %v1226 = vpop.f32.mrb[0].mxu0
      %v1227 = vadd.f32 0.0, %v1226
      %v1228 = vpop.f32.mrb[0].mxu0
      %1229 = vmatprep.mubr.f32.mxu0 0.0
      %1230 = vmatmul.mubr.f32.gmra.mrb[0].mxu0 %v791
      %v1231 = vpop.f32.mrb[0].mxu0
      %v1232 = vadd.f32 0.0, %v1231
      %v1233 = vpop.f32.mrb[0].mxu0
      %1234 = vmatprep.mubr.f32.mxu0 0.0
      %1235 = vmatmul.mubr.f32.gmra.mrb[0].mxu0 %v793
      %v1236 = vpop.f32.mrb[0].mxu0
      %v1237 = vadd.f32 0.0, %v1236
      %v1238 = vpop.f32.mrb[0].mxu0
      %1239 = vmatprep.mubr.f32.mxu0 0.0
      %1240 = vmatmul.mubr.f32.gmra.mrb[0].mxu0 %v795
      %v1241 = vpop.f32.mrb[0].mxu0
      %v1242 = vadd.f32 0.0, %v1241
      %v1243 = vpop.f32.mrb[0].mxu0
      %1244 = vmatprep.mubr.f32.mxu0 0.0
      %1245 = vmatmul.mubr.f32.gmra.mrb[0].mxu0 %v797
      %v1246 = vpop.f32.mrb[0].mxu0
      %v1247 = vadd.f32 0.0, %v1246
      %v1248 = vpop.f32.mrb[0].mxu0
      %1249 = vmatprep.mubr.f32.mxu0 0.0
      %1250 = vmatmul.mubr.f32.gmra.mrb[0].mxu0 %v799
      %v1251 = vpop.f32.mrb[0].mxu0
      %v1252 = vadd.f32 0.0, %v1251
      %v1253 = vpop.f32.mrb[0].mxu0
      %1254 = vmatprep.mubr.f32.mxu0 0.0
      %1255 = vmatmul.mubr.f32.gmra.mrb[0].mxu0 %v1032
      %v1256 = vpop.f32.mrb[0].mxu0
      %v1257 = vadd.f32 0.0, %v1256
      %v1258 = vpop.f32.mrb[0].mxu0
      %1259 = vmatprep.mubr.f32.mxu0 0.0
      %1260 = vmatmul.mubr.f32.gmra.mrb[0].mxu0 %v1035
      %v1261 = vpop.f32.mrb[0].mxu0
      %v1262 = vadd.f32 0.0, %v1261
      %v1263 = vpop.f32.mrb[0].mxu0
      %1264 = vdwg.mxu0
      %v1265 = vadd.f32 %v871, %v1107
      %v1266 = vadd.f32 %v876, %v1112
      %v1267 = vadd.f32 %v881, %v1117
      %v1268 = vadd.f32 %v886, %v1122
      %v1269 = vadd.f32 %v891, %v1127
      %v1270 = vadd.f32 %v896, %v1132
      %v1271 = vadd.f32 %v901, %v1137
      %v1272 = vadd.f32 %v906, %v1142
      %v1273 = vadd.f32 %v911, %v1147
      %v1274 = vadd.f32 %v916, %v1152
      %v1275 = vadd.f32 %v921, %v1157
      %v1276 = vadd.f32 %v926, %v1162
      %v1277 = vadd.f32 %v931, %v1167
      %v1278 = vadd.f32 %v936, %v1172
      %v1279 = vadd.f32 %v941, %v1177
      %v1280 = vadd.f32 %v946, %v1182
      %v1281 = vadd.f32 %v951, %v1187
      %v1282 = vadd.f32 %v956, %v1192
      %v1283 = vadd.f32 %v961, %v1197
      %v1284 = vadd.f32 %v966, %v1202
      %v1285 = vadd.f32 %v971, %v1207
      %v1286 = vadd.f32 %v976, %v1212
      %v1287 = vadd.f32 %v981, %v1217
      %v1288 = vadd.f32 %v986, %v1222
      %v1289 = vadd.f32 %v991, %v1227
      %v1290 = vadd.f32 %v996, %v1232
      %v1291 = vadd.f32 %v1001, %v1237
      %v1292 = vadd.f32 %v1006, %v1242
      %v1293 = vadd.f32 %v1011, %v1247
      %v1294 = vadd.f32 %v1016, %v1252
      %v1295 = vadd.f32 %v1021, %v1257
      %v1296 = vadd.f32 %v1026, %v1262
      %s1297 = scalar_lea.vmem %s238, 12
      %v1298 = vld [vmem:[%s1297] sm:$0xf]
      %v1300 = vrot.slane %v305, 1
      %v1301 = vrot.slane %v306, 1
      %v1302 = vsel %vm362, %v1300, %v1301
      %v1303 = vrot.slane %v307, 1
      %v1304 = vsel %vm362, %v1301, %v1303
      %v1305 = vsel %vm443, %v1302, 0
      %v1307 = vsel %vm443, %v1304, 0
      %v1310 = vsel %vm508, %v1298, 0
      %1312 = vmatprep.subr.mxu0 0.0
      %1313 = vmatpush1.msra.mxu0 %v1310
      %1314 = vmatprep.subr.mxu0 0.0
      %1315 = vmatpush1.msra.mxu0 0.0
      %1316 = vmatprep.subr.mxu0 0.0
      %1317 = vmatpush1.msra.mxu0 0.0
      %1318 = vmatprep.subr.mxu0 0.0
      %1319 = vmatpush1.msra.mxu0 0.0
      %1320 = vmatprep.subr.mxu0 0.0
      %1321 = vmatpush1.msra.mxu0 0.0
      %1322 = vmatprep.subr.mxu0 0.0
      %1323 = vmatpush1.msra.mxu0 0.0
      %1324 = vmatprep.subr.mxu0 0.0
      %1325 = vmatpush1.msra.mxu0 0.0
      %1326 = vmatprep.subr.mxu0 0.0
      %1327 = vmatpush1.msra.mxu0 0.0
      %1328 = vmatprep.subr.mxu0 0.0
      %1329 = vmatpush1.msra.mxu0 0.0
      %1330 = vmatprep.subr.mxu0 0.0
      %1331 = vmatpush1.msra.mxu0 0.0
      %1332 = vmatprep.subr.mxu0 0.0
      %1333 = vmatpush1.msra.mxu0 0.0
      %1334 = vmatprep.subr.mxu0 0.0
      %1335 = vmatpush1.msra.mxu0 0.0
      %1336 = vmatprep.subr.mxu0 0.0
      %1337 = vmatpush1.msra.mxu0 0.0
      %1338 = vmatprep.subr.mxu0 0.0
      %1339 = vmatpush1.msra.mxu0 0.0
      %1340 = vmatprep.subr.mxu0 0.0
      %1341 = vmatpush1.msra.mxu0 0.0
      %1342 = vmatprep.subr.mxu0 0.0
      %1343 = vmatpush1.msra.mxu0 0.0
      %1344 = vmatprep.subr.mxu0 0.0
      %1345 = vmatpush1.msra.mxu0 0.0
      %1346 = vmatprep.subr.mxu0 0.0
      %1347 = vmatpush1.msra.mxu0 0.0
      %1348 = vmatprep.subr.mxu0 0.0
      %1349 = vmatpush1.msra.mxu0 0.0
      %1350 = vmatprep.subr.mxu0 0.0
      %1351 = vmatpush1.msra.mxu0 0.0
      %1352 = vmatprep.subr.mxu0 0.0
      %1353 = vmatpush1.msra.mxu0 0.0
      %1354 = vmatprep.subr.mxu0 0.0
      %1355 = vmatpush1.msra.mxu0 0.0
      %1356 = vmatprep.subr.mxu0 0.0
      %1357 = vmatpush1.msra.mxu0 0.0
      %1358 = vmatprep.subr.mxu0 0.0
      %1359 = vmatpush1.msra.mxu0 0.0
      %1360 = vmatprep.subr.mxu0 0.0
      %1361 = vmatpush1.msra.mxu0 0.0
      %1362 = vmatprep.subr.mxu0 0.0
      %1363 = vmatpush1.msra.mxu0 0.0
      %1364 = vmatprep.subr.mxu0 0.0
      %1365 = vmatpush1.msra.mxu0 0.0
      %1366 = vmatprep.subr.mxu0 0.0
      %1367 = vmatpush1.msra.mxu0 0.0
      %1368 = vmatprep.subr.mxu0 0.0
      %1369 = vmatpush1.msra.mxu0 0.0
      %1370 = vmatprep.subr.mxu0 0.0
      %1371 = vmatpush1.msra.mxu0 0.0
      %1372 = vmatprep.subr.mxu0 0.0
      %1373 = vmatpush1.msra.mxu0 0.0
      %1374 = vmatprep.subr.mxu0 0.0
      %1375 = vmatpush1.msra.mxu0 0.0
      %1376 = vmatprep.mubr.f32.mxu0 0.0
      %1377 = vmatmul.mubr.f32.gmra.mrb[0].mxu0 %v448
      %v1378 = vpop.f32.mrb[0].mxu0
      %v1379 = vadd.f32 0.0, %v1378
      %v1380 = vpop.f32.mrb[0].mxu0
      %1381 = vmatprep.mubr.f32.mxu0 0.0
      %1382 = vmatmul.mubr.f32.gmra.mrb[0].mxu0 %v450
      %v1383 = vpop.f32.mrb[0].mxu0
      %v1384 = vadd.f32 0.0, %v1383
      %v1385 = vpop.f32.mrb[0].mxu0
      %1386 = vmatprep.mubr.f32.mxu0 0.0
      %1387 = vmatmul.mubr.f32.gmra.mrb[0].mxu0 %v452
      %v1388 = vpop.f32.mrb[0].mxu0
      %v1389 = vadd.f32 0.0, %v1388
      %v1390 = vpop.f32.mrb[0].mxu0
      %1391 = vmatprep.mubr.f32.mxu0 0.0
      %1392 = vmatmul.mubr.f32.gmra.mrb[0].mxu0 %v454
      %v1393 = vpop.f32.mrb[0].mxu0
      %v1394 = vadd.f32 0.0, %v1393
      %v1395 = vpop.f32.mrb[0].mxu0
      %1396 = vmatprep.mubr.f32.mxu0 0.0
      %1397 = vmatmul.mubr.f32.gmra.mrb[0].mxu0 %v456
      %v1398 = vpop.f32.mrb[0].mxu0
      %v1399 = vadd.f32 0.0, %v1398
      %v1400 = vpop.f32.mrb[0].mxu0
      %1401 = vmatprep.mubr.f32.mxu0 0.0
      %1402 = vmatmul.mubr.f32.gmra.mrb[0].mxu0 %v458
      %v1403 = vpop.f32.mrb[0].mxu0
      %v1404 = vadd.f32 0.0, %v1403
      %v1405 = vpop.f32.mrb[0].mxu0
      %1406 = vmatprep.mubr.f32.mxu0 0.0
      %1407 = vmatmul.mubr.f32.gmra.mrb[0].mxu0 %v460
      %v1408 = vpop.f32.mrb[0].mxu0
      %v1409 = vadd.f32 0.0, %v1408
      %v1410 = vpop.f32.mrb[0].mxu0
      %1411 = vmatprep.mubr.f32.mxu0 0.0
      %1412 = vmatmul.mubr.f32.gmra.mrb[0].mxu0 %v462
      %v1413 = vpop.f32.mrb[0].mxu0
      %v1414 = vadd.f32 0.0, %v1413
      %v1415 = vpop.f32.mrb[0].mxu0
      %1416 = vmatprep.mubr.f32.mxu0 0.0
      %1417 = vmatmul.mubr.f32.gmra.mrb[0].mxu0 %v464
      %v1418 = vpop.f32.mrb[0].mxu0
      %v1419 = vadd.f32 0.0, %v1418
      %v1420 = vpop.f32.mrb[0].mxu0
      %1421 = vmatprep.mubr.f32.mxu0 0.0
      %1422 = vmatmul.mubr.f32.gmra.mrb[0].mxu0 %v466
      %v1423 = vpop.f32.mrb[0].mxu0
      %v1424 = vadd.f32 0.0, %v1423
      %v1425 = vpop.f32.mrb[0].mxu0
      %1426 = vmatprep.mubr.f32.mxu0 0.0
      %1427 = vmatmul.mubr.f32.gmra.mrb[0].mxu0 %v468
      %v1428 = vpop.f32.mrb[0].mxu0
      %v1429 = vadd.f32 0.0, %v1428
      %v1430 = vpop.f32.mrb[0].mxu0
      %1431 = vmatprep.mubr.f32.mxu0 0.0
      %1432 = vmatmul.mubr.f32.gmra.mrb[0].mxu0 %v470
      %v1433 = vpop.f32.mrb[0].mxu0
      %v1434 = vadd.f32 0.0, %v1433
      %v1435 = vpop.f32.mrb[0].mxu0
      %1436 = vmatprep.mubr.f32.mxu0 0.0
      %1437 = vmatmul.mubr.f32.gmra.mrb[0].mxu0 %v472
      %v1438 = vpop.f32.mrb[0].mxu0
      %v1439 = vadd.f32 0.0, %v1438
      %v1440 = vpop.f32.mrb[0].mxu0
      %1441 = vmatprep.mubr.f32.mxu0 0.0
      %1442 = vmatmul.mubr.f32.gmra.mrb[0].mxu0 %v474
      %v1443 = vpop.f32.mrb[0].mxu0
      %v1444 = vadd.f32 0.0, %v1443
      %v1445 = vpop.f32.mrb[0].mxu0
      %1446 = vmatprep.mubr.f32.mxu0 0.0
      %1447 = vmatmul.mubr.f32.gmra.mrb[0].mxu0 %v476
      %v1448 = vpop.f32.mrb[0].mxu0
      %v1449 = vadd.f32 0.0, %v1448
      %v1450 = vpop.f32.mrb[0].mxu0
      %1451 = vmatprep.mubr.f32.mxu0 0.0
      %1452 = vmatmul.mubr.f32.gmra.mrb[0].mxu0 %v478
      %v1453 = vpop.f32.mrb[0].mxu0
      %v1454 = vadd.f32 0.0, %v1453
      %v1455 = vpop.f32.mrb[0].mxu0
      %1456 = vmatprep.mubr.f32.mxu0 0.0
      %1457 = vmatmul.mubr.f32.gmra.mrb[0].mxu0 %v480
      %v1458 = vpop.f32.mrb[0].mxu0
      %v1459 = vadd.f32 0.0, %v1458
      %v1460 = vpop.f32.mrb[0].mxu0
      %1461 = vmatprep.mubr.f32.mxu0 0.0
      %1462 = vmatmul.mubr.f32.gmra.mrb[0].mxu0 %v482
      %v1463 = vpop.f32.mrb[0].mxu0
      %v1464 = vadd.f32 0.0, %v1463
      %v1465 = vpop.f32.mrb[0].mxu0
      %1466 = vmatprep.mubr.f32.mxu0 0.0
      %1467 = vmatmul.mubr.f32.gmra.mrb[0].mxu0 %v484
      %v1468 = vpop.f32.mrb[0].mxu0
      %v1469 = vadd.f32 0.0, %v1468
      %v1470 = vpop.f32.mrb[0].mxu0
      %1471 = vmatprep.mubr.f32.mxu0 0.0
      %1472 = vmatmul.mubr.f32.gmra.mrb[0].mxu0 %v486
      %v1473 = vpop.f32.mrb[0].mxu0
      %v1474 = vadd.f32 0.0, %v1473
      %v1475 = vpop.f32.mrb[0].mxu0
      %1476 = vmatprep.mubr.f32.mxu0 0.0
      %1477 = vmatmul.mubr.f32.gmra.mrb[0].mxu0 %v488
      %v1478 = vpop.f32.mrb[0].mxu0
      %v1479 = vadd.f32 0.0, %v1478
      %v1480 = vpop.f32.mrb[0].mxu0
      %1481 = vmatprep.mubr.f32.mxu0 0.0
      %1482 = vmatmul.mubr.f32.gmra.mrb[0].mxu0 %v490
      %v1483 = vpop.f32.mrb[0].mxu0
      %v1484 = vadd.f32 0.0, %v1483
      %v1485 = vpop.f32.mrb[0].mxu0
      %1486 = vmatprep.mubr.f32.mxu0 0.0
      %1487 = vmatmul.mubr.f32.gmra.mrb[0].mxu0 %v492
      %v1488 = vpop.f32.mrb[0].mxu0
      %v1489 = vadd.f32 0.0, %v1488
      %v1490 = vpop.f32.mrb[0].mxu0
      %1491 = vmatprep.mubr.f32.mxu0 0.0
      %1492 = vmatmul.mubr.f32.gmra.mrb[0].mxu0 %v494
      %v1493 = vpop.f32.mrb[0].mxu0
      %v1494 = vadd.f32 0.0, %v1493
      %v1495 = vpop.f32.mrb[0].mxu0
      %1496 = vmatprep.mubr.f32.mxu0 0.0
      %1497 = vmatmul.mubr.f32.gmra.mrb[0].mxu0 %v496
      %v1498 = vpop.f32.mrb[0].mxu0
      %v1499 = vadd.f32 0.0, %v1498
      %v1500 = vpop.f32.mrb[0].mxu0
      %1501 = vmatprep.mubr.f32.mxu0 0.0
      %1502 = vmatmul.mubr.f32.gmra.mrb[0].mxu0 %v498
      %v1503 = vpop.f32.mrb[0].mxu0
      %v1504 = vadd.f32 0.0, %v1503
      %v1505 = vpop.f32.mrb[0].mxu0
      %1506 = vmatprep.mubr.f32.mxu0 0.0
      %1507 = vmatmul.mubr.f32.gmra.mrb[0].mxu0 %v500
      %v1508 = vpop.f32.mrb[0].mxu0
      %v1509 = vadd.f32 0.0, %v1508
      %v1510 = vpop.f32.mrb[0].mxu0
      %1511 = vmatprep.mubr.f32.mxu0 0.0
      %1512 = vmatmul.mubr.f32.gmra.mrb[0].mxu0 %v502
      %v1513 = vpop.f32.mrb[0].mxu0
      %v1514 = vadd.f32 0.0, %v1513
      %v1515 = vpop.f32.mrb[0].mxu0
      %1516 = vmatprep.mubr.f32.mxu0 0.0
      %1517 = vmatmul.mubr.f32.gmra.mrb[0].mxu0 %v504
      %v1518 = vpop.f32.mrb[0].mxu0
      %v1519 = vadd.f32 0.0, %v1518
      %v1520 = vpop.f32.mrb[0].mxu0
      %1521 = vmatprep.mubr.f32.mxu0 0.0
      %1522 = vmatmul.mubr.f32.gmra.mrb[0].mxu0 %v506
      %v1523 = vpop.f32.mrb[0].mxu0
      %v1524 = vadd.f32 0.0, %v1523
      %v1525 = vpop.f32.mrb[0].mxu0
      %1526 = vmatprep.mubr.f32.mxu0 0.0
      %1527 = vmatmul.mubr.f32.gmra.mrb[0].mxu0 %v1305
      %v1528 = vpop.f32.mrb[0].mxu0
      %v1529 = vadd.f32 0.0, %v1528
      %v1530 = vpop.f32.mrb[0].mxu0
      %1531 = vmatprep.mubr.f32.mxu0 0.0
      %1532 = vmatmul.mubr.f32.gmra.mrb[0].mxu0 %v1307
      %v1533 = vpop.f32.mrb[0].mxu0
      %v1534 = vadd.f32 0.0, %v1533
      %v1535 = vpop.f32.mrb[0].mxu0
      %1536 = vdwg.mxu0
      %v1537 = vadd.f32 %v1265, %v1379
      %v1538 = vadd.f32 %v1266, %v1384
      %v1539 = vadd.f32 %v1267, %v1389
      %v1540 = vadd.f32 %v1268, %v1394
      %v1541 = vadd.f32 %v1269, %v1399
      %v1542 = vadd.f32 %v1270, %v1404
      %v1543 = vadd.f32 %v1271, %v1409
      %v1544 = vadd.f32 %v1272, %v1414
      %v1545 = vadd.f32 %v1273, %v1419
      %v1546 = vadd.f32 %v1274, %v1424
      %v1547 = vadd.f32 %v1275, %v1429
      %v1548 = vadd.f32 %v1276, %v1434
      %v1549 = vadd.f32 %v1277, %v1439
      %v1550 = vadd.f32 %v1278, %v1444
      %v1551 = vadd.f32 %v1279, %v1449
      %v1552 = vadd.f32 %v1280, %v1454
      %v1553 = vadd.f32 %v1281, %v1459
      %v1554 = vadd.f32 %v1282, %v1464
      %v1555 = vadd.f32 %v1283, %v1469
      %v1556 = vadd.f32 %v1284, %v1474
      %v1557 = vadd.f32 %v1285, %v1479
      %v1558 = vadd.f32 %v1286, %v1484
      %v1559 = vadd.f32 %v1287, %v1489
      %v1560 = vadd.f32 %v1288, %v1494
      %v1561 = vadd.f32 %v1289, %v1499
      %v1562 = vadd.f32 %v1290, %v1504
      %v1563 = vadd.f32 %v1291, %v1509
      %v1564 = vadd.f32 %v1292, %v1514
      %v1565 = vadd.f32 %v1293, %v1519
      %v1566 = vadd.f32 %v1294, %v1524
      %v1567 = vadd.f32 %v1295, %v1529
      %v1568 = vadd.f32 %v1296, %v1534
      %v1570 = vlaneseq
      %v1571 = vshrl.u32 %v1570, 7
      %v1572 = vsub.s32 0, %v1571
      %v1573 = vrot.slane %v256, %v1572
      %v1575 = vadd.f32 %v1537, %v1573
      %v1576 = vadd.f32 %v1538, %v1573
      %v1577 = vadd.f32 %v1539, %v1573
      %v1578 = vadd.f32 %v1540, %v1573
      %v1579 = vadd.f32 %v1541, %v1573
      %v1580 = vadd.f32 %v1542, %v1573
      %v1581 = vadd.f32 %v1543, %v1573
      %v1582 = vadd.f32 %v1544, %v1573
      %v1583 = vadd.f32 %v1545, %v1573
      %v1584 = vadd.f32 %v1546, %v1573
      %v1585 = vadd.f32 %v1547, %v1573
      %v1586 = vadd.f32 %v1548, %v1573
      %v1587 = vadd.f32 %v1549, %v1573
      %v1588 = vadd.f32 %v1550, %v1573
      %v1589 = vadd.f32 %v1551, %v1573
      %v1590 = vadd.f32 %v1552, %v1573
      %v1591 = vadd.f32 %v1553, %v1573
      %v1592 = vadd.f32 %v1554, %v1573
      %v1593 = vadd.f32 %v1555, %v1573
      %v1594 = vadd.f32 %v1556, %v1573
      %v1595 = vadd.f32 %v1557, %v1573
      %v1596 = vadd.f32 %v1558, %v1573
      %v1597 = vadd.f32 %v1559, %v1573
      %v1598 = vadd.f32 %v1560, %v1573
      %v1599 = vadd.f32 %v1561, %v1573
      %v1600 = vadd.f32 %v1562, %v1573
      %v1601 = vadd.f32 %v1563, %v1573
      %v1602 = vadd.f32 %v1564, %v1573
      %v1603 = vadd.f32 %v1565, %v1573
      %v1604 = vadd.f32 %v1566, %v1573
      %v1605 = vadd.f32 %v1567, %v1573
      %v1606 = vadd.f32 %v1568, %v1573
      %1607 = vst.msk [vmem:[%s254] sm:$0xff] %vm443, %v1575
      %1608 = vst.msk [vmem:[%s254 + $0x8] sm:$0xff] %vm443, %v1576
      %1609 = vst.msk [vmem:[%s254 + $0x10] sm:$0xff] %vm443, %v1577
      %1610 = vst.msk [vmem:[%s254 + $0x18] sm:$0xff] %vm443, %v1578
      %1611 = vst.msk [vmem:[%s254 + $0x20] sm:$0xff] %vm443, %v1579
      %1612 = vst.msk [vmem:[%s254 + $0x28] sm:$0xff] %vm443, %v1580
      %1613 = vst.msk [vmem:[%s254 + $0x30] sm:$0xff] %vm443, %v1581
      %1614 = vst.msk [vmem:[%s254 + $0x38] sm:$0xff] %vm443, %v1582
      %1615 = vst.msk [vmem:[%s254 + $0x40] sm:$0xff] %vm443, %v1583
      %1616 = vst.msk [vmem:[%s254 + $0x48] sm:$0xff] %vm443, %v1584
      %1617 = vst.msk [vmem:[%s254 + $0x50] sm:$0xff] %vm443, %v1585
      %1618 = vst.msk [vmem:[%s254 + $0x58] sm:$0xff] %vm443, %v1586
      %1619 = vst.msk [vmem:[%s254 + $0x60] sm:$0xff] %vm443, %v1587
      %1620 = vst.msk [vmem:[%s254 + $0x68] sm:$0xff] %vm443, %v1588
      %1621 = vst.msk [vmem:[%s254 + $0x70] sm:$0xff] %vm443, %v1589
      %1622 = vst.msk [vmem:[%s254 + $0x78] sm:$0xff] %vm443, %v1590
      %1623 = vst.msk [vmem:[%s254 + $0x80] sm:$0xff] %vm443, %v1591
      %1624 = vst.msk [vmem:[%s254 + $0x88] sm:$0xff] %vm443, %v1592
      %1625 = vst.msk [vmem:[%s254 + $0x90] sm:$0xff] %vm443, %v1593
      %1626 = vst.msk [vmem:[%s254 + $0x98] sm:$0xff] %vm443, %v1594
      %1627 = vst.msk [vmem:[%s254 + $0xa0] sm:$0xff] %vm443, %v1595
      %1628 = vst.msk [vmem:[%s254 + $0xa8] sm:$0xff] %vm443, %v1596
      %1629 = vst.msk [vmem:[%s254 + $0xb0] sm:$0xff] %vm443, %v1597
      %1630 = vst.msk [vmem:[%s254 + $0xb8] sm:$0xff] %vm443, %v1598
      %1631 = vst.msk [vmem:[%s254 + $0xc0] sm:$0xff] %vm443, %v1599
      %1632 = vst.msk [vmem:[%s254 + $0xc8] sm:$0xff] %vm443, %v1600
      %1633 = vst.msk [vmem:[%s254 + $0xd0] sm:$0xff] %vm443, %v1601
      %1634 = vst.msk [vmem:[%s254 + $0xd8] sm:$0xff] %vm443, %v1602
      %1635 = vst.msk [vmem:[%s254 + $0xe0] sm:$0xff] %vm443, %v1603
      %1636 = vst.msk [vmem:[%s254 + $0xe8] sm:$0xff] %vm443, %v1604
      %1637 = vst.msk [vmem:[%s254 + $0xf0] sm:$0xff] %vm443, %v1605
      %1638 = vst.msk [vmem:[%s254 + $0xf8] sm:$0xff] %vm443, %v1606
      %s1639 = scalar_lea.vmem %s238, 16
      %v1640 = vld [vmem:[%s1639] sm:$0xf]
      %s1641 = scalar_lea.vmem %s238, 20
      %v1642 = vld [vmem:[%s1641] sm:$0xf]
      %vm1643 = vcmask 1045504
      %v1644 = vrot.slane %v257, 2
      %v1645 = vrot.slane %v258, 2
      %v1646 = vsel %vm1643, %v1644, %v1645
      %v1647 = vrot.slane %v259, 2
      %v1648 = vsel %vm1643, %v1645, %v1647
      %v1649 = vrot.slane %v260, 2
      %v1650 = vrot.slane %v261, 2
      %v1651 = vsel %vm1643, %v1649, %v1650
      %v1652 = vrot.slane %v262, 2
      %v1653 = vsel %vm1643, %v1650, %v1652
      %v1654 = vrot.slane %v263, 2
      %v1655 = vrot.slane %v264, 2
      %v1656 = vsel %vm1643, %v1654, %v1655
      %v1657 = vrot.slane %v265, 2
      %v1658 = vsel %vm1643, %v1655, %v1657
      %v1659 = vrot.slane %v266, 2
      %v1660 = vrot.slane %v267, 2
      %v1661 = vsel %vm1643, %v1659, %v1660
      %v1662 = vrot.slane %v268, 2
      %v1663 = vsel %vm1643, %v1660, %v1662
      %v1664 = vrot.slane %v269, 2
      %v1665 = vrot.slane %v270, 2
      %v1666 = vsel %vm1643, %v1664, %v1665
      %v1667 = vrot.slane %v271, 2
      %v1668 = vsel %vm1643, %v1665, %v1667
      %v1669 = vrot.slane %v272, 2
      %v1670 = vrot.slane %v273, 2
      %v1671 = vsel %vm1643, %v1669, %v1670
      %v1672 = vrot.slane %v274, 2
      %v1673 = vsel %vm1643, %v1670, %v1672
      %v1674 = vrot.slane %v275, 2
      %v1675 = vrot.slane %v276, 2
      %v1676 = vsel %vm1643, %v1674, %v1675
      %v1677 = vrot.slane %v277, 2
      %v1678 = vsel %vm1643, %v1675, %v1677
      %v1679 = vrot.slane %v278, 2
      %v1680 = vrot.slane %v279, 2
      %v1681 = vsel %vm1643, %v1679, %v1680
      %v1682 = vrot.slane %v280, 2
      %v1683 = vsel %vm1643, %v1680, %v1682
      %v1684 = vrot.slane %v281, 2
      %v1685 = vrot.slane %v282, 2
      %v1686 = vsel %vm1643, %v1684, %v1685
      %v1687 = vrot.slane %v283, 2
      %v1688 = vsel %vm1643, %v1685, %v1687
      %v1689 = vrot.slane %v284, 2
      %v1690 = vrot.slane %v285, 2
      %v1691 = vsel %vm1643, %v1689, %v1690
      %v1692 = vrot.slane %v286, 2
      %v1693 = vsel %vm1643, %v1690, %v1692
      %v1694 = vrot.slane %v287, 2
      %v1695 = vrot.slane %v288, 2
      %v1696 = vsel %vm1643, %v1694, %v1695
      %v1697 = vrot.slane %v289, 2
      %v1698 = vsel %vm1643, %v1695, %v1697
      %v1699 = vrot.slane %v290, 2
      %v1700 = vrot.slane %v291, 2
      %v1701 = vsel %vm1643, %v1699, %v1700
      %v1702 = vrot.slane %v292, 2
      %v1703 = vsel %vm1643, %v1700, %v1702
      %v1704 = vrot.slane %v293, 2
      %v1705 = vrot.slane %v294, 2
      %v1706 = vsel %vm1643, %v1704, %v1705
      %v1707 = vrot.slane %v295, 2
      %v1708 = vsel %vm1643, %v1705, %v1707
      %v1709 = vrot.slane %v296, 2
      %v1710 = vrot.slane %v297, 2
      %v1711 = vsel %vm1643, %v1709, %v1710
      %v1712 = vrot.slane %v298, 2
      %v1713 = vsel %vm1643, %v1710, %v1712
      %v1714 = vrot.slane %v299, 2
      %v1715 = vrot.slane %v300, 2
      %v1716 = vsel %vm1643, %v1714, %v1715
      %v1717 = vrot.slane %v301, 2
      %v1718 = vsel %vm1643, %v1715, %v1717
      %v1719 = vrot.slane %v302, 2
      %v1720 = vrot.slane %v303, 2
      %v1721 = vsel %vm1643, %v1719, %v1720
      %v1722 = vrot.slane %v304, 2
      %v1723 = vsel %vm1643, %v1720, %v1722
      %v1724 = vsel %vm443, %v1646, 0
      %v1726 = vsel %vm443, %v1648, 0
      %v1728 = vsel %vm443, %v1651, 0
      %v1730 = vsel %vm443, %v1653, 0
      %v1732 = vsel %vm443, %v1656, 0
      %v1734 = vsel %vm443, %v1658, 0
      %v1736 = vsel %vm443, %v1661, 0
      %v1738 = vsel %vm443, %v1663, 0
      %v1740 = vsel %vm443, %v1666, 0
      %v1742 = vsel %vm443, %v1668, 0
      %v1744 = vsel %vm443, %v1671, 0
      %v1746 = vsel %vm443, %v1673, 0
      %v1748 = vsel %vm443, %v1676, 0
      %v1750 = vsel %vm443, %v1678, 0
      %v1752 = vsel %vm443, %v1681, 0
      %v1754 = vsel %vm443, %v1683, 0
      %v1756 = vsel %vm443, %v1686, 0
      %v1758 = vsel %vm443, %v1688, 0
      %v1760 = vsel %vm443, %v1691, 0
      %v1762 = vsel %vm443, %v1693, 0
      %v1764 = vsel %vm443, %v1696, 0
      %v1766 = vsel %vm443, %v1698, 0
      %v1768 = vsel %vm443, %v1701, 0
      %v1770 = vsel %vm443, %v1703, 0
      %v1772 = vsel %vm443, %v1706, 0
      %v1774 = vsel %vm443, %v1708, 0
      %v1776 = vsel %vm443, %v1711, 0
      %v1778 = vsel %vm443, %v1713, 0
      %v1780 = vsel %vm443, %v1716, 0
      %v1782 = vsel %vm443, %v1718, 0
      %v1784 = vsel %vm443, %v1721, 0
      %v1786 = vsel %vm443, %v1723, 0
      %v1789 = vsel %vm508, %v1642, 0
      %1791 = vmatprep.subr.mxu0 0.0
      %1792 = vmatpush1.msra.mxu0 %v1789
      %1793 = vmatprep.subr.mxu0 0.0
      %1794 = vmatpush1.msra.mxu0 0.0
      %1795 = vmatprep.subr.mxu0 0.0
      %1796 = vmatpush1.msra.mxu0 0.0
      %1797 = vmatprep.subr.mxu0 0.0
      %1798 = vmatpush1.msra.mxu0 0.0
      %1799 = vmatprep.subr.mxu0 0.0
      %1800 = vmatpush1.msra.mxu0 0.0
      %1801 = vmatprep.subr.mxu0 0.0
      %1802 = vmatpush1.msra.mxu0 0.0
      %1803 = vmatprep.subr.mxu0 0.0
      %1804 = vmatpush1.msra.mxu0 0.0
      %1805 = vmatprep.subr.mxu0 0.0
      %1806 = vmatpush1.msra.mxu0 0.0
      %1807 = vmatprep.subr.mxu0 0.0
      %1808 = vmatpush1.msra.mxu0 0.0
      %1809 = vmatprep.subr.mxu0 0.0
      %1810 = vmatpush1.msra.mxu0 0.0
      %1811 = vmatprep.subr.mxu0 0.0
      %1812 = vmatpush1.msra.mxu0 0.0
      %1813 = vmatprep.subr.mxu0 0.0
      %1814 = vmatpush1.msra.mxu0 0.0
      %1815 = vmatprep.subr.mxu0 0.0
      %1816 = vmatpush1.msra.mxu0 0.0
      %1817 = vmatprep.subr.mxu0 0.0
      %1818 = vmatpush1.msra.mxu0 0.0
      %1819 = vmatprep.subr.mxu0 0.0
      %1820 = vmatpush1.msra.mxu0 0.0
      %1821 = vmatprep.subr.mxu0 0.0
      %1822 = vmatpush1.msra.mxu0 0.0
      %1823 = vmatprep.subr.mxu0 0.0
      %1824 = vmatpush1.msra.mxu0 0.0
      %1825 = vmatprep.subr.mxu0 0.0
      %1826 = vmatpush1.msra.mxu0 0.0
      %1827 = vmatprep.subr.mxu0 0.0
      %1828 = vmatpush1.msra.mxu0 0.0
      %1829 = vmatprep.subr.mxu0 0.0
      %1830 = vmatpush1.msra.mxu0 0.0
      %1831 = vmatprep.subr.mxu0 0.0
      %1832 = vmatpush1.msra.mxu0 0.0
      %1833 = vmatprep.subr.mxu0 0.0
      %1834 = vmatpush1.msra.mxu0 0.0
      %1835 = vmatprep.subr.mxu0 0.0
      %1836 = vmatpush1.msra.mxu0 0.0
      %1837 = vmatprep.subr.mxu0 0.0
      %1838 = vmatpush1.msra.mxu0 0.0
      %1839 = vmatprep.subr.mxu0 0.0
      %1840 = vmatpush1.msra.mxu0 0.0
      %1841 = vmatprep.subr.mxu0 0.0
      %1842 = vmatpush1.msra.mxu0 0.0
      %1843 = vmatprep.subr.mxu0 0.0
      %1844 = vmatpush1.msra.mxu0 0.0
      %1845 = vmatprep.subr.mxu0 0.0
      %1846 = vmatpush1.msra.mxu0 0.0
      %1847 = vmatprep.subr.mxu0 0.0
      %1848 = vmatpush1.msra.mxu0 0.0
      %1849 = vmatprep.subr.mxu0 0.0
      %1850 = vmatpush1.msra.mxu0 0.0
      %1851 = vmatprep.subr.mxu0 0.0
      %1852 = vmatpush1.msra.mxu0 0.0
      %1853 = vmatprep.subr.mxu0 0.0
      %1854 = vmatpush1.msra.mxu0 0.0
      %1855 = vmatprep.mubr.f32.mxu0 0.0
      %1856 = vmatmul.mubr.f32.gmra.mrb[0].mxu0 %v1724
      %v1857 = vpop.f32.mrb[0].mxu0
      %v1858 = vadd.f32 0.0, %v1857
      %v1859 = vpop.f32.mrb[0].mxu0
      %1860 = vmatprep.mubr.f32.mxu0 0.0
      %1861 = vmatmul.mubr.f32.gmra.mrb[0].mxu0 %v1726
      %v1862 = vpop.f32.mrb[0].mxu0
      %v1863 = vadd.f32 0.0, %v1862
      %v1864 = vpop.f32.mrb[0].mxu0
      %1865 = vmatprep.mubr.f32.mxu0 0.0
      %1866 = vmatmul.mubr.f32.gmra.mrb[0].mxu0 %v1728
      %v1867 = vpop.f32.mrb[0].mxu0
      %v1868 = vadd.f32 0.0, %v1867
      %v1869 = vpop.f32.mrb[0].mxu0
      %1870 = vmatprep.mubr.f32.mxu0 0.0
      %1871 = vmatmul.mubr.f32.gmra.mrb[0].mxu0 %v1730
      %v1872 = vpop.f32.mrb[0].mxu0
      %v1873 = vadd.f32 0.0, %v1872
      %v1874 = vpop.f32.mrb[0].mxu0
      %1875 = vmatprep.mubr.f32.mxu0 0.0
      %1876 = vmatmul.mubr.f32.gmra.mrb[0].mxu0 %v1732
      %v1877 = vpop.f32.mrb[0].mxu0
      %v1878 = vadd.f32 0.0, %v1877
      %v1879 = vpop.f32.mrb[0].mxu0
      %1880 = vmatprep.mubr.f32.mxu0 0.0
      %1881 = vmatmul.mubr.f32.gmra.mrb[0].mxu0 %v1734
      %v1882 = vpop.f32.mrb[0].mxu0
      %v1883 = vadd.f32 0.0, %v1882
      %v1884 = vpop.f32.mrb[0].mxu0
      %1885 = vmatprep.mubr.f32.mxu0 0.0
      %1886 = vmatmul.mubr.f32.gmra.mrb[0].mxu0 %v1736
      %v1887 = vpop.f32.mrb[0].mxu0
      %v1888 = vadd.f32 0.0, %v1887
      %v1889 = vpop.f32.mrb[0].mxu0
      %1890 = vmatprep.mubr.f32.mxu0 0.0
      %1891 = vmatmul.mubr.f32.gmra.mrb[0].mxu0 %v1738
      %v1892 = vpop.f32.mrb[0].mxu0
      %v1893 = vadd.f32 0.0, %v1892
      %v1894 = vpop.f32.mrb[0].mxu0
      %1895 = vmatprep.mubr.f32.mxu0 0.0
      %1896 = vmatmul.mubr.f32.gmra.mrb[0].mxu0 %v1740
      %v1897 = vpop.f32.mrb[0].mxu0
      %v1898 = vadd.f32 0.0, %v1897
      %v1899 = vpop.f32.mrb[0].mxu0
      %1900 = vmatprep.mubr.f32.mxu0 0.0
      %1901 = vmatmul.mubr.f32.gmra.mrb[0].mxu0 %v1742
      %v1902 = vpop.f32.mrb[0].mxu0
      %v1903 = vadd.f32 0.0, %v1902
      %v1904 = vpop.f32.mrb[0].mxu0
      %1905 = vmatprep.mubr.f32.mxu0 0.0
      %1906 = vmatmul.mubr.f32.gmra.mrb[0].mxu0 %v1744
      %v1907 = vpop.f32.mrb[0].mxu0
      %v1908 = vadd.f32 0.0, %v1907
      %v1909 = vpop.f32.mrb[0].mxu0
      %1910 = vmatprep.mubr.f32.mxu0 0.0
      %1911 = vmatmul.mubr.f32.gmra.mrb[0].mxu0 %v1746
      %v1912 = vpop.f32.mrb[0].mxu0
      %v1913 = vadd.f32 0.0, %v1912
      %v1914 = vpop.f32.mrb[0].mxu0
      %1915 = vmatprep.mubr.f32.mxu0 0.0
      %1916 = vmatmul.mubr.f32.gmra.mrb[0].mxu0 %v1748
      %v1917 = vpop.f32.mrb[0].mxu0
      %v1918 = vadd.f32 0.0, %v1917
      %v1919 = vpop.f32.mrb[0].mxu0
      %1920 = vmatprep.mubr.f32.mxu0 0.0
      %1921 = vmatmul.mubr.f32.gmra.mrb[0].mxu0 %v1750
      %v1922 = vpop.f32.mrb[0].mxu0
      %v1923 = vadd.f32 0.0, %v1922
      %v1924 = vpop.f32.mrb[0].mxu0
      %1925 = vmatprep.mubr.f32.mxu0 0.0
      %1926 = vmatmul.mubr.f32.gmra.mrb[0].mxu0 %v1752
      %v1927 = vpop.f32.mrb[0].mxu0
      %v1928 = vadd.f32 0.0, %v1927
      %v1929 = vpop.f32.mrb[0].mxu0
      %1930 = vmatprep.mubr.f32.mxu0 0.0
      %1931 = vmatmul.mubr.f32.gmra.mrb[0].mxu0 %v1754
      %v1932 = vpop.f32.mrb[0].mxu0
      %v1933 = vadd.f32 0.0, %v1932
      %v1934 = vpop.f32.mrb[0].mxu0
      %1935 = vmatprep.mubr.f32.mxu0 0.0
      %1936 = vmatmul.mubr.f32.gmra.mrb[0].mxu0 %v1756
      %v1937 = vpop.f32.mrb[0].mxu0
      %v1938 = vadd.f32 0.0, %v1937
      %v1939 = vpop.f32.mrb[0].mxu0
      %1940 = vmatprep.mubr.f32.mxu0 0.0
      %1941 = vmatmul.mubr.f32.gmra.mrb[0].mxu0 %v1758
      %v1942 = vpop.f32.mrb[0].mxu0
      %v1943 = vadd.f32 0.0, %v1942
      %v1944 = vpop.f32.mrb[0].mxu0
      %1945 = vmatprep.mubr.f32.mxu0 0.0
      %1946 = vmatmul.mubr.f32.gmra.mrb[0].mxu0 %v1760
      %v1947 = vpop.f32.mrb[0].mxu0
      %v1948 = vadd.f32 0.0, %v1947
      %v1949 = vpop.f32.mrb[0].mxu0
      %1950 = vmatprep.mubr.f32.mxu0 0.0
      %1951 = vmatmul.mubr.f32.gmra.mrb[0].mxu0 %v1762
      %v1952 = vpop.f32.mrb[0].mxu0
      %v1953 = vadd.f32 0.0, %v1952
      %v1954 = vpop.f32.mrb[0].mxu0
      %1955 = vmatprep.mubr.f32.mxu0 0.0
      %1956 = vmatmul.mubr.f32.gmra.mrb[0].mxu0 %v1764
      %v1957 = vpop.f32.mrb[0].mxu0
      %v1958 = vadd.f32 0.0, %v1957
      %v1959 = vpop.f32.mrb[0].mxu0
      %1960 = vmatprep.mubr.f32.mxu0 0.0
      %1961 = vmatmul.mubr.f32.gmra.mrb[0].mxu0 %v1766
      %v1962 = vpop.f32.mrb[0].mxu0
      %v1963 = vadd.f32 0.0, %v1962
      %v1964 = vpop.f32.mrb[0].mxu0
      %1965 = vmatprep.mubr.f32.mxu0 0.0
      %1966 = vmatmul.mubr.f32.gmra.mrb[0].mxu0 %v1768
      %v1967 = vpop.f32.mrb[0].mxu0
      %v1968 = vadd.f32 0.0, %v1967
      %v1969 = vpop.f32.mrb[0].mxu0
      %1970 = vmatprep.mubr.f32.mxu0 0.0
      %1971 = vmatmul.mubr.f32.gmra.mrb[0].mxu0 %v1770
      %v1972 = vpop.f32.mrb[0].mxu0
      %v1973 = vadd.f32 0.0, %v1972
      %v1974 = vpop.f32.mrb[0].mxu0
      %1975 = vmatprep.mubr.f32.mxu0 0.0
      %1976 = vmatmul.mubr.f32.gmra.mrb[0].mxu0 %v1772
      %v1977 = vpop.f32.mrb[0].mxu0
      %v1978 = vadd.f32 0.0, %v1977
      %v1979 = vpop.f32.mrb[0].mxu0
      %1980 = vmatprep.mubr.f32.mxu0 0.0
      %1981 = vmatmul.mubr.f32.gmra.mrb[0].mxu0 %v1774
      %v1982 = vpop.f32.mrb[0].mxu0
      %v1983 = vadd.f32 0.0, %v1982
      %v1984 = vpop.f32.mrb[0].mxu0
      %1985 = vmatprep.mubr.f32.mxu0 0.0
      %1986 = vmatmul.mubr.f32.gmra.mrb[0].mxu0 %v1776
      %v1987 = vpop.f32.mrb[0].mxu0
      %v1988 = vadd.f32 0.0, %v1987
      %v1989 = vpop.f32.mrb[0].mxu0
      %1990 = vmatprep.mubr.f32.mxu0 0.0
      %1991 = vmatmul.mubr.f32.gmra.mrb[0].mxu0 %v1778
      %v1992 = vpop.f32.mrb[0].mxu0
      %v1993 = vadd.f32 0.0, %v1992
      %v1994 = vpop.f32.mrb[0].mxu0
      %1995 = vmatprep.mubr.f32.mxu0 0.0
      %1996 = vmatmul.mubr.f32.gmra.mrb[0].mxu0 %v1780
      %v1997 = vpop.f32.mrb[0].mxu0
      %v1998 = vadd.f32 0.0, %v1997
      %v1999 = vpop.f32.mrb[0].mxu0
      %2000 = vmatprep.mubr.f32.mxu0 0.0
      %2001 = vmatmul.mubr.f32.gmra.mrb[0].mxu0 %v1782
      %v2002 = vpop.f32.mrb[0].mxu0
      %v2003 = vadd.f32 0.0, %v2002
      %v2004 = vpop.f32.mrb[0].mxu0
      %2005 = vmatprep.mubr.f32.mxu0 0.0
      %2006 = vmatmul.mubr.f32.gmra.mrb[0].mxu0 %v1784
      %v2007 = vpop.f32.mrb[0].mxu0
      %v2008 = vadd.f32 0.0, %v2007
      %v2009 = vpop.f32.mrb[0].mxu0
      %2010 = vmatprep.mubr.f32.mxu0 0.0
      %2011 = vmatmul.mubr.f32.gmra.mrb[0].mxu0 %v1786
      %v2012 = vpop.f32.mrb[0].mxu0
      %v2013 = vadd.f32 0.0, %v2012
      %v2014 = vpop.f32.mrb[0].mxu0
      %2015 = vdwg.mxu0
      %v2017 = vsel %vm508, %v1640, 0
      %2019 = vmatprep.subr.mxu0 0.0
      %2020 = vmatpush1.msra.mxu0 %v2017
      %2021 = vmatprep.subr.mxu0 0.0
      %2022 = vmatpush1.msra.mxu0 0.0
      %2023 = vmatprep.subr.mxu0 0.0
      %2024 = vmatpush1.msra.mxu0 0.0
      %2025 = vmatprep.subr.mxu0 0.0
      %2026 = vmatpush1.msra.mxu0 0.0
      %2027 = vmatprep.subr.mxu0 0.0
      %2028 = vmatpush1.msra.mxu0 0.0
      %2029 = vmatprep.subr.mxu0 0.0
      %2030 = vmatpush1.msra.mxu0 0.0
      %2031 = vmatprep.subr.mxu0 0.0
      %2032 = vmatpush1.msra.mxu0 0.0
      %2033 = vmatprep.subr.mxu0 0.0
      %2034 = vmatpush1.msra.mxu0 0.0
      %2035 = vmatprep.subr.mxu0 0.0
      %2036 = vmatpush1.msra.mxu0 0.0
      %2037 = vmatprep.subr.mxu0 0.0
      %2038 = vmatpush1.msra.mxu0 0.0
      %2039 = vmatprep.subr.mxu0 0.0
      %2040 = vmatpush1.msra.mxu0 0.0
      %2041 = vmatprep.subr.mxu0 0.0
      %2042 = vmatpush1.msra.mxu0 0.0
      %2043 = vmatprep.subr.mxu0 0.0
      %2044 = vmatpush1.msra.mxu0 0.0
      %2045 = vmatprep.subr.mxu0 0.0
      %2046 = vmatpush1.msra.mxu0 0.0
      %2047 = vmatprep.subr.mxu0 0.0
      %2048 = vmatpush1.msra.mxu0 0.0
      %2049 = vmatprep.subr.mxu0 0.0
      %2050 = vmatpush1.msra.mxu0 0.0
      %2051 = vmatprep.subr.mxu0 0.0
      %2052 = vmatpush1.msra.mxu0 0.0
      %2053 = vmatprep.subr.mxu0 0.0
      %2054 = vmatpush1.msra.mxu0 0.0
      %2055 = vmatprep.subr.mxu0 0.0
      %2056 = vmatpush1.msra.mxu0 0.0
      %2057 = vmatprep.subr.mxu0 0.0
      %2058 = vmatpush1.msra.mxu0 0.0
      %2059 = vmatprep.subr.mxu0 0.0
      %2060 = vmatpush1.msra.mxu0 0.0
      %2061 = vmatprep.subr.mxu0 0.0
      %2062 = vmatpush1.msra.mxu0 0.0
      %2063 = vmatprep.subr.mxu0 0.0
      %2064 = vmatpush1.msra.mxu0 0.0
      %2065 = vmatprep.subr.mxu0 0.0
      %2066 = vmatpush1.msra.mxu0 0.0
      %2067 = vmatprep.subr.mxu0 0.0
      %2068 = vmatpush1.msra.mxu0 0.0
      %2069 = vmatprep.subr.mxu0 0.0
      %2070 = vmatpush1.msra.mxu0 0.0
      %2071 = vmatprep.subr.mxu0 0.0
      %2072 = vmatpush1.msra.mxu0 0.0
      %2073 = vmatprep.subr.mxu0 0.0
      %2074 = vmatpush1.msra.mxu0 0.0
      %2075 = vmatprep.subr.mxu0 0.0
      %2076 = vmatpush1.msra.mxu0 0.0
      %2077 = vmatprep.subr.mxu0 0.0
      %2078 = vmatpush1.msra.mxu0 0.0
      %2079 = vmatprep.subr.mxu0 0.0
      %2080 = vmatpush1.msra.mxu0 0.0
      %2081 = vmatprep.subr.mxu0 0.0
      %2082 = vmatpush1.msra.mxu0 0.0
      %2083 = vmatprep.mubr.f32.mxu0 0.0
      %2084 = vmatmul.mubr.f32.gmra.mrb[0].mxu0 %v444
      %v2085 = vpop.f32.mrb[0].mxu0
      %v2086 = vadd.f32 %v1858, %v2085
      %v2087 = vpop.f32.mrb[0].mxu0
      %2088 = vmatprep.mubr.f32.mxu0 0.0
      %2089 = vmatmul.mubr.f32.gmra.mrb[0].mxu0 %v446
      %v2090 = vpop.f32.mrb[0].mxu0
      %v2091 = vadd.f32 %v1863, %v2090
      %v2092 = vpop.f32.mrb[0].mxu0
      %2093 = vmatprep.mubr.f32.mxu0 0.0
      %2094 = vmatmul.mubr.f32.gmra.mrb[0].mxu0 %v448
      %v2095 = vpop.f32.mrb[0].mxu0
      %v2096 = vadd.f32 %v1868, %v2095
      %v2097 = vpop.f32.mrb[0].mxu0
      %2098 = vmatprep.mubr.f32.mxu0 0.0
      %2099 = vmatmul.mubr.f32.gmra.mrb[0].mxu0 %v450
      %v2100 = vpop.f32.mrb[0].mxu0
      %v2101 = vadd.f32 %v1873, %v2100
      %v2102 = vpop.f32.mrb[0].mxu0
      %2103 = vmatprep.mubr.f32.mxu0 0.0
      %2104 = vmatmul.mubr.f32.gmra.mrb[0].mxu0 %v452
      %v2105 = vpop.f32.mrb[0].mxu0
      %v2106 = vadd.f32 %v1878, %v2105
      %v2107 = vpop.f32.mrb[0].mxu0
      %2108 = vmatprep.mubr.f32.mxu0 0.0
      %2109 = vmatmul.mubr.f32.gmra.mrb[0].mxu0 %v454
      %v2110 = vpop.f32.mrb[0].mxu0
      %v2111 = vadd.f32 %v1883, %v2110
      %v2112 = vpop.f32.mrb[0].mxu0
      %2113 = vmatprep.mubr.f32.mxu0 0.0
      %2114 = vmatmul.mubr.f32.gmra.mrb[0].mxu0 %v456
      %v2115 = vpop.f32.mrb[0].mxu0
      %v2116 = vadd.f32 %v1888, %v2115
      %v2117 = vpop.f32.mrb[0].mxu0
      %2118 = vmatprep.mubr.f32.mxu0 0.0
      %2119 = vmatmul.mubr.f32.gmra.mrb[0].mxu0 %v458
      %v2120 = vpop.f32.mrb[0].mxu0
      %v2121 = vadd.f32 %v1893, %v2120
      %v2122 = vpop.f32.mrb[0].mxu0
      %2123 = vmatprep.mubr.f32.mxu0 0.0
      %2124 = vmatmul.mubr.f32.gmra.mrb[0].mxu0 %v460
      %v2125 = vpop.f32.mrb[0].mxu0
      %v2126 = vadd.f32 %v1898, %v2125
      %v2127 = vpop.f32.mrb[0].mxu0
      %2128 = vmatprep.mubr.f32.mxu0 0.0
      %2129 = vmatmul.mubr.f32.gmra.mrb[0].mxu0 %v462
      %v2130 = vpop.f32.mrb[0].mxu0
      %v2131 = vadd.f32 %v1903, %v2130
      %v2132 = vpop.f32.mrb[0].mxu0
      %2133 = vmatprep.mubr.f32.mxu0 0.0
      %2134 = vmatmul.mubr.f32.gmra.mrb[0].mxu0 %v464
      %v2135 = vpop.f32.mrb[0].mxu0
      %v2136 = vadd.f32 %v1908, %v2135
      %v2137 = vpop.f32.mrb[0].mxu0
      %2138 = vmatprep.mubr.f32.mxu0 0.0
      %2139 = vmatmul.mubr.f32.gmra.mrb[0].mxu0 %v466
      %v2140 = vpop.f32.mrb[0].mxu0
      %v2141 = vadd.f32 %v1913, %v2140
      %v2142 = vpop.f32.mrb[0].mxu0
      %2143 = vmatprep.mubr.f32.mxu0 0.0
      %2144 = vmatmul.mubr.f32.gmra.mrb[0].mxu0 %v468
      %v2145 = vpop.f32.mrb[0].mxu0
      %v2146 = vadd.f32 %v1918, %v2145
      %v2147 = vpop.f32.mrb[0].mxu0
      %2148 = vmatprep.mubr.f32.mxu0 0.0
      %2149 = vmatmul.mubr.f32.gmra.mrb[0].mxu0 %v470
      %v2150 = vpop.f32.mrb[0].mxu0
      %v2151 = vadd.f32 %v1923, %v2150
      %v2152 = vpop.f32.mrb[0].mxu0
      %2153 = vmatprep.mubr.f32.mxu0 0.0
      %2154 = vmatmul.mubr.f32.gmra.mrb[0].mxu0 %v472
      %v2155 = vpop.f32.mrb[0].mxu0
      %v2156 = vadd.f32 %v1928, %v2155
      %v2157 = vpop.f32.mrb[0].mxu0
      %2158 = vmatprep.mubr.f32.mxu0 0.0
      %2159 = vmatmul.mubr.f32.gmra.mrb[0].mxu0 %v474
      %v2160 = vpop.f32.mrb[0].mxu0
      %v2161 = vadd.f32 %v1933, %v2160
      %v2162 = vpop.f32.mrb[0].mxu0
      %2163 = vmatprep.mubr.f32.mxu0 0.0
      %2164 = vmatmul.mubr.f32.gmra.mrb[0].mxu0 %v476
      %v2165 = vpop.f32.mrb[0].mxu0
      %v2166 = vadd.f32 %v1938, %v2165
      %v2167 = vpop.f32.mrb[0].mxu0
      %2168 = vmatprep.mubr.f32.mxu0 0.0
      %2169 = vmatmul.mubr.f32.gmra.mrb[0].mxu0 %v478
      %v2170 = vpop.f32.mrb[0].mxu0
      %v2171 = vadd.f32 %v1943, %v2170
      %v2172 = vpop.f32.mrb[0].mxu0
      %2173 = vmatprep.mubr.f32.mxu0 0.0
      %2174 = vmatmul.mubr.f32.gmra.mrb[0].mxu0 %v480
      %v2175 = vpop.f32.mrb[0].mxu0
      %v2176 = vadd.f32 %v1948, %v2175
      %v2177 = vpop.f32.mrb[0].mxu0
      %2178 = vmatprep.mubr.f32.mxu0 0.0
      %2179 = vmatmul.mubr.f32.gmra.mrb[0].mxu0 %v482
      %v2180 = vpop.f32.mrb[0].mxu0
      %v2181 = vadd.f32 %v1953, %v2180
      %v2182 = vpop.f32.mrb[0].mxu0
      %2183 = vmatprep.mubr.f32.mxu0 0.0
      %2184 = vmatmul.mubr.f32.gmra.mrb[0].mxu0 %v484
      %v2185 = vpop.f32.mrb[0].mxu0
      %v2186 = vadd.f32 %v1958, %v2185
      %v2187 = vpop.f32.mrb[0].mxu0
      %2188 = vmatprep.mubr.f32.mxu0 0.0
      %2189 = vmatmul.mubr.f32.gmra.mrb[0].mxu0 %v486
      %v2190 = vpop.f32.mrb[0].mxu0
      %v2191 = vadd.f32 %v1963, %v2190
      %v2192 = vpop.f32.mrb[0].mxu0
      %2193 = vmatprep.mubr.f32.mxu0 0.0
      %2194 = vmatmul.mubr.f32.gmra.mrb[0].mxu0 %v488
      %v2195 = vpop.f32.mrb[0].mxu0
      %v2196 = vadd.f32 %v1968, %v2195
      %v2197 = vpop.f32.mrb[0].mxu0
      %2198 = vmatprep.mubr.f32.mxu0 0.0
      %2199 = vmatmul.mubr.f32.gmra.mrb[0].mxu0 %v490
      %v2200 = vpop.f32.mrb[0].mxu0
      %v2201 = vadd.f32 %v1973, %v2200
      %v2202 = vpop.f32.mrb[0].mxu0
      %2203 = vmatprep.mubr.f32.mxu0 0.0
      %2204 = vmatmul.mubr.f32.gmra.mrb[0].mxu0 %v492
      %v2205 = vpop.f32.mrb[0].mxu0
      %v2206 = vadd.f32 %v1978, %v2205
      %v2207 = vpop.f32.mrb[0].mxu0
      %2208 = vmatprep.mubr.f32.mxu0 0.0
      %2209 = vmatmul.mubr.f32.gmra.mrb[0].mxu0 %v494
      %v2210 = vpop.f32.mrb[0].mxu0
      %v2211 = vadd.f32 %v1983, %v2210
      %v2212 = vpop.f32.mrb[0].mxu0
      %2213 = vmatprep.mubr.f32.mxu0 0.0
      %2214 = vmatmul.mubr.f32.gmra.mrb[0].mxu0 %v496
      %v2215 = vpop.f32.mrb[0].mxu0
      %v2216 = vadd.f32 %v1988, %v2215
      %v2217 = vpop.f32.mrb[0].mxu0
      %2218 = vmatprep.mubr.f32.mxu0 0.0
      %2219 = vmatmul.mubr.f32.gmra.mrb[0].mxu0 %v498
      %v2220 = vpop.f32.mrb[0].mxu0
      %v2221 = vadd.f32 %v1993, %v2220
      %v2222 = vpop.f32.mrb[0].mxu0
      %2223 = vmatprep.mubr.f32.mxu0 0.0
      %2224 = vmatmul.mubr.f32.gmra.mrb[0].mxu0 %v500
      %v2225 = vpop.f32.mrb[0].mxu0
      %v2226 = vadd.f32 %v1998, %v2225
      %v2227 = vpop.f32.mrb[0].mxu0
      %2228 = vmatprep.mubr.f32.mxu0 0.0
      %2229 = vmatmul.mubr.f32.gmra.mrb[0].mxu0 %v502
      %v2230 = vpop.f32.mrb[0].mxu0
      %v2231 = vadd.f32 %v2003, %v2230
      %v2232 = vpop.f32.mrb[0].mxu0
      %2233 = vmatprep.mubr.f32.mxu0 0.0
      %2234 = vmatmul.mubr.f32.gmra.mrb[0].mxu0 %v504
      %v2235 = vpop.f32.mrb[0].mxu0
      %v2236 = vadd.f32 %v2008, %v2235
      %v2237 = vpop.f32.mrb[0].mxu0
      %2238 = vmatprep.mubr.f32.mxu0 0.0
      %2239 = vmatmul.mubr.f32.gmra.mrb[0].mxu0 %v506
      %v2240 = vpop.f32.mrb[0].mxu0
      %v2241 = vadd.f32 %v2013, %v2240
      %v2242 = vpop.f32.mrb[0].mxu0
      %2243 = vdwg.mxu0
      %s2244 = scalar_lea.vmem %s238, 24
      %v2245 = vld [vmem:[%s2244] sm:$0xf]
      %v2247 = vsel %vm508, %v2245, 0
      %2249 = vmatprep.subr.mxu0 0.0
      %2250 = vmatpush1.msra.mxu0 %v2247
      %2251 = vmatprep.subr.mxu0 0.0
      %2252 = vmatpush1.msra.mxu0 0.0
      %2253 = vmatprep.subr.mxu0 0.0
      %2254 = vmatpush1.msra.mxu0 0.0
      %2255 = vmatprep.subr.mxu0 0.0
      %2256 = vmatpush1.msra.mxu0 0.0
      %2257 = vmatprep.subr.mxu0 0.0
      %2258 = vmatpush1.msra.mxu0 0.0
      %2259 = vmatprep.subr.mxu0 0.0
      %2260 = vmatpush1.msra.mxu0 0.0
      %2261 = vmatprep.subr.mxu0 0.0
      %2262 = vmatpush1.msra.mxu0 0.0
      %2263 = vmatprep.subr.mxu0 0.0
      %2264 = vmatpush1.msra.mxu0 0.0
      %2265 = vmatprep.subr.mxu0 0.0
      %2266 = vmatpush1.msra.mxu0 0.0
      %2267 = vmatprep.subr.mxu0 0.0
      %2268 = vmatpush1.msra.mxu0 0.0
      %2269 = vmatprep.subr.mxu0 0.0
      %2270 = vmatpush1.msra.mxu0 0.0
      %2271 = vmatprep.subr.mxu0 0.0
      %2272 = vmatpush1.msra.mxu0 0.0
      %2273 = vmatprep.subr.mxu0 0.0
      %2274 = vmatpush1.msra.mxu0 0.0
      %2275 = vmatprep.subr.mxu0 0.0
      %2276 = vmatpush1.msra.mxu0 0.0
      %2277 = vmatprep.subr.mxu0 0.0
      %2278 = vmatpush1.msra.mxu0 0.0
      %2279 = vmatprep.subr.mxu0 0.0
      %2280 = vmatpush1.msra.mxu0 0.0
      %2281 = vmatprep.subr.mxu0 0.0
      %2282 = vmatpush1.msra.mxu0 0.0
      %2283 = vmatprep.subr.mxu0 0.0
      %2284 = vmatpush1.msra.mxu0 0.0
      %2285 = vmatprep.subr.mxu0 0.0
      %2286 = vmatpush1.msra.mxu0 0.0
      %2287 = vmatprep.subr.mxu0 0.0
      %2288 = vmatpush1.msra.mxu0 0.0
      %2289 = vmatprep.subr.mxu0 0.0
      %2290 = vmatpush1.msra.mxu0 0.0
      %2291 = vmatprep.subr.mxu0 0.0
      %2292 = vmatpush1.msra.mxu0 0.0
      %2293 = vmatprep.subr.mxu0 0.0
      %2294 = vmatpush1.msra.mxu0 0.0
      %2295 = vmatprep.subr.mxu0 0.0
      %2296 = vmatpush1.msra.mxu0 0.0
      %2297 = vmatprep.subr.mxu0 0.0
      %2298 = vmatpush1.msra.mxu0 0.0
      %2299 = vmatprep.subr.mxu0 0.0
      %2300 = vmatpush1.msra.mxu0 0.0
      %2301 = vmatprep.subr.mxu0 0.0
      %2302 = vmatpush1.msra.mxu0 0.0
      %2303 = vmatprep.subr.mxu0 0.0
      %2304 = vmatpush1.msra.mxu0 0.0
      %2305 = vmatprep.subr.mxu0 0.0
      %2306 = vmatpush1.msra.mxu0 0.0
      %2307 = vmatprep.subr.mxu0 0.0
      %2308 = vmatpush1.msra.mxu0 0.0
      %2309 = vmatprep.subr.mxu0 0.0
      %2310 = vmatpush1.msra.mxu0 0.0
      %2311 = vmatprep.subr.mxu0 0.0
      %2312 = vmatpush1.msra.mxu0 0.0
      %2313 = vmatprep.mubr.f32.mxu0 0.0
      %2314 = vmatmul.mubr.f32.gmra.mrb[0].mxu0 %v448
      %v2315 = vpop.f32.mrb[0].mxu0
      %v2316 = vadd.f32 0.0, %v2315
      %v2317 = vpop.f32.mrb[0].mxu0
      %2318 = vmatprep.mubr.f32.mxu0 0.0
      %2319 = vmatmul.mubr.f32.gmra.mrb[0].mxu0 %v450
      %v2320 = vpop.f32.mrb[0].mxu0
      %v2321 = vadd.f32 0.0, %v2320
      %v2322 = vpop.f32.mrb[0].mxu0
      %2323 = vmatprep.mubr.f32.mxu0 0.0
      %2324 = vmatmul.mubr.f32.gmra.mrb[0].mxu0 %v452
      %v2325 = vpop.f32.mrb[0].mxu0
      %v2326 = vadd.f32 0.0, %v2325
      %v2327 = vpop.f32.mrb[0].mxu0
      %2328 = vmatprep.mubr.f32.mxu0 0.0
      %2329 = vmatmul.mubr.f32.gmra.mrb[0].mxu0 %v454
      %v2330 = vpop.f32.mrb[0].mxu0
      %v2331 = vadd.f32 0.0, %v2330
      %v2332 = vpop.f32.mrb[0].mxu0
      %2333 = vmatprep.mubr.f32.mxu0 0.0
      %2334 = vmatmul.mubr.f32.gmra.mrb[0].mxu0 %v456
      %v2335 = vpop.f32.mrb[0].mxu0
      %v2336 = vadd.f32 0.0, %v2335
      %v2337 = vpop.f32.mrb[0].mxu0
      %2338 = vmatprep.mubr.f32.mxu0 0.0
      %2339 = vmatmul.mubr.f32.gmra.mrb[0].mxu0 %v458
      %v2340 = vpop.f32.mrb[0].mxu0
      %v2341 = vadd.f32 0.0, %v2340
      %v2342 = vpop.f32.mrb[0].mxu0
      %2343 = vmatprep.mubr.f32.mxu0 0.0
      %2344 = vmatmul.mubr.f32.gmra.mrb[0].mxu0 %v460
      %v2345 = vpop.f32.mrb[0].mxu0
      %v2346 = vadd.f32 0.0, %v2345
      %v2347 = vpop.f32.mrb[0].mxu0
      %2348 = vmatprep.mubr.f32.mxu0 0.0
      %2349 = vmatmul.mubr.f32.gmra.mrb[0].mxu0 %v462
      %v2350 = vpop.f32.mrb[0].mxu0
      %v2351 = vadd.f32 0.0, %v2350
      %v2352 = vpop.f32.mrb[0].mxu0
      %2353 = vmatprep.mubr.f32.mxu0 0.0
      %2354 = vmatmul.mubr.f32.gmra.mrb[0].mxu0 %v464
      %v2355 = vpop.f32.mrb[0].mxu0
      %v2356 = vadd.f32 0.0, %v2355
      %v2357 = vpop.f32.mrb[0].mxu0
      %2358 = vmatprep.mubr.f32.mxu0 0.0
      %2359 = vmatmul.mubr.f32.gmra.mrb[0].mxu0 %v466
      %v2360 = vpop.f32.mrb[0].mxu0
      %v2361 = vadd.f32 0.0, %v2360
      %v2362 = vpop.f32.mrb[0].mxu0
      %2363 = vmatprep.mubr.f32.mxu0 0.0
      %2364 = vmatmul.mubr.f32.gmra.mrb[0].mxu0 %v468
      %v2365 = vpop.f32.mrb[0].mxu0
      %v2366 = vadd.f32 0.0, %v2365
      %v2367 = vpop.f32.mrb[0].mxu0
      %2368 = vmatprep.mubr.f32.mxu0 0.0
      %2369 = vmatmul.mubr.f32.gmra.mrb[0].mxu0 %v470
      %v2370 = vpop.f32.mrb[0].mxu0
      %v2371 = vadd.f32 0.0, %v2370
      %v2372 = vpop.f32.mrb[0].mxu0
      %2373 = vmatprep.mubr.f32.mxu0 0.0
      %2374 = vmatmul.mubr.f32.gmra.mrb[0].mxu0 %v472
      %v2375 = vpop.f32.mrb[0].mxu0
      %v2376 = vadd.f32 0.0, %v2375
      %v2377 = vpop.f32.mrb[0].mxu0
      %2378 = vmatprep.mubr.f32.mxu0 0.0
      %2379 = vmatmul.mubr.f32.gmra.mrb[0].mxu0 %v474
      %v2380 = vpop.f32.mrb[0].mxu0
      %v2381 = vadd.f32 0.0, %v2380
      %v2382 = vpop.f32.mrb[0].mxu0
      %2383 = vmatprep.mubr.f32.mxu0 0.0
      %2384 = vmatmul.mubr.f32.gmra.mrb[0].mxu0 %v476
      %v2385 = vpop.f32.mrb[0].mxu0
      %v2386 = vadd.f32 0.0, %v2385
      %v2387 = vpop.f32.mrb[0].mxu0
      %2388 = vmatprep.mubr.f32.mxu0 0.0
      %2389 = vmatmul.mubr.f32.gmra.mrb[0].mxu0 %v478
      %v2390 = vpop.f32.mrb[0].mxu0
      %v2391 = vadd.f32 0.0, %v2390
      %v2392 = vpop.f32.mrb[0].mxu0
      %2393 = vmatprep.mubr.f32.mxu0 0.0
      %2394 = vmatmul.mubr.f32.gmra.mrb[0].mxu0 %v480
      %v2395 = vpop.f32.mrb[0].mxu0
      %v2396 = vadd.f32 0.0, %v2395
      %v2397 = vpop.f32.mrb[0].mxu0
      %2398 = vmatprep.mubr.f32.mxu0 0.0
      %2399 = vmatmul.mubr.f32.gmra.mrb[0].mxu0 %v482
      %v2400 = vpop.f32.mrb[0].mxu0
      %v2401 = vadd.f32 0.0, %v2400
      %v2402 = vpop.f32.mrb[0].mxu0
      %2403 = vmatprep.mubr.f32.mxu0 0.0
      %2404 = vmatmul.mubr.f32.gmra.mrb[0].mxu0 %v484
      %v2405 = vpop.f32.mrb[0].mxu0
      %v2406 = vadd.f32 0.0, %v2405
      %v2407 = vpop.f32.mrb[0].mxu0
      %2408 = vmatprep.mubr.f32.mxu0 0.0
      %2409 = vmatmul.mubr.f32.gmra.mrb[0].mxu0 %v486
      %v2410 = vpop.f32.mrb[0].mxu0
      %v2411 = vadd.f32 0.0, %v2410
      %v2412 = vpop.f32.mrb[0].mxu0
      %2413 = vmatprep.mubr.f32.mxu0 0.0
      %2414 = vmatmul.mubr.f32.gmra.mrb[0].mxu0 %v488
      %v2415 = vpop.f32.mrb[0].mxu0
      %v2416 = vadd.f32 0.0, %v2415
      %v2417 = vpop.f32.mrb[0].mxu0
      %2418 = vmatprep.mubr.f32.mxu0 0.0
      %2419 = vmatmul.mubr.f32.gmra.mrb[0].mxu0 %v490
      %v2420 = vpop.f32.mrb[0].mxu0
      %v2421 = vadd.f32 0.0, %v2420
      %v2422 = vpop.f32.mrb[0].mxu0
      %2423 = vmatprep.mubr.f32.mxu0 0.0
      %2424 = vmatmul.mubr.f32.gmra.mrb[0].mxu0 %v492
      %v2425 = vpop.f32.mrb[0].mxu0
      %v2426 = vadd.f32 0.0, %v2425
      %v2427 = vpop.f32.mrb[0].mxu0
      %2428 = vmatprep.mubr.f32.mxu0 0.0
      %2429 = vmatmul.mubr.f32.gmra.mrb[0].mxu0 %v494
      %v2430 = vpop.f32.mrb[0].mxu0
      %v2431 = vadd.f32 0.0, %v2430
      %v2432 = vpop.f32.mrb[0].mxu0
      %2433 = vmatprep.mubr.f32.mxu0 0.0
      %2434 = vmatmul.mubr.f32.gmra.mrb[0].mxu0 %v496
      %v2435 = vpop.f32.mrb[0].mxu0
      %v2436 = vadd.f32 0.0, %v2435
      %v2437 = vpop.f32.mrb[0].mxu0
      %2438 = vmatprep.mubr.f32.mxu0 0.0
      %2439 = vmatmul.mubr.f32.gmra.mrb[0].mxu0 %v498
      %v2440 = vpop.f32.mrb[0].mxu0
      %v2441 = vadd.f32 0.0, %v2440
      %v2442 = vpop.f32.mrb[0].mxu0
      %2443 = vmatprep.mubr.f32.mxu0 0.0
      %2444 = vmatmul.mubr.f32.gmra.mrb[0].mxu0 %v500
      %v2445 = vpop.f32.mrb[0].mxu0
      %v2446 = vadd.f32 0.0, %v2445
      %v2447 = vpop.f32.mrb[0].mxu0
      %2448 = vmatprep.mubr.f32.mxu0 0.0
      %2449 = vmatmul.mubr.f32.gmra.mrb[0].mxu0 %v502
      %v2450 = vpop.f32.mrb[0].mxu0
      %v2451 = vadd.f32 0.0, %v2450
      %v2452 = vpop.f32.mrb[0].mxu0
      %2453 = vmatprep.mubr.f32.mxu0 0.0
      %2454 = vmatmul.mubr.f32.gmra.mrb[0].mxu0 %v504
      %v2455 = vpop.f32.mrb[0].mxu0
      %v2456 = vadd.f32 0.0, %v2455
      %v2457 = vpop.f32.mrb[0].mxu0
      %2458 = vmatprep.mubr.f32.mxu0 0.0
      %2459 = vmatmul.mubr.f32.gmra.mrb[0].mxu0 %v506
      %v2460 = vpop.f32.mrb[0].mxu0
      %v2461 = vadd.f32 0.0, %v2460
      %v2462 = vpop.f32.mrb[0].mxu0
      %2463 = vmatprep.mubr.f32.mxu0 0.0
      %2464 = vmatmul.mubr.f32.gmra.mrb[0].mxu0 %v1305
      %v2465 = vpop.f32.mrb[0].mxu0
      %v2466 = vadd.f32 0.0, %v2465
      %v2467 = vpop.f32.mrb[0].mxu0
      %2468 = vmatprep.mubr.f32.mxu0 0.0
      %2469 = vmatmul.mubr.f32.gmra.mrb[0].mxu0 %v1307
      %v2470 = vpop.f32.mrb[0].mxu0
      %v2471 = vadd.f32 0.0, %v2470
      %v2472 = vpop.f32.mrb[0].mxu0
      %2473 = vdwg.mxu0
      %v2474 = vadd.f32 %v2086, %v2316
      %v2475 = vadd.f32 %v2091, %v2321
      %v2476 = vadd.f32 %v2096, %v2326
      %v2477 = vadd.f32 %v2101, %v2331
      %v2478 = vadd.f32 %v2106, %v2336
      %v2479 = vadd.f32 %v2111, %v2341
      %v2480 = vadd.f32 %v2116, %v2346
      %v2481 = vadd.f32 %v2121, %v2351
      %v2482 = vadd.f32 %v2126, %v2356
      %v2483 = vadd.f32 %v2131, %v2361
      %v2484 = vadd.f32 %v2136, %v2366
      %v2485 = vadd.f32 %v2141, %v2371
      %v2486 = vadd.f32 %v2146, %v2376
      %v2487 = vadd.f32 %v2151, %v2381
      %v2488 = vadd.f32 %v2156, %v2386
      %v2489 = vadd.f32 %v2161, %v2391
      %v2490 = vadd.f32 %v2166, %v2396
      %v2491 = vadd.f32 %v2171, %v2401
      %v2492 = vadd.f32 %v2176, %v2406
      %v2493 = vadd.f32 %v2181, %v2411
      %v2494 = vadd.f32 %v2186, %v2416
      %v2495 = vadd.f32 %v2191, %v2421
      %v2496 = vadd.f32 %v2196, %v2426
      %v2497 = vadd.f32 %v2201, %v2431
      %v2498 = vadd.f32 %v2206, %v2436
      %v2499 = vadd.f32 %v2211, %v2441
      %v2500 = vadd.f32 %v2216, %v2446
      %v2501 = vadd.f32 %v2221, %v2451
      %v2502 = vadd.f32 %v2226, %v2456
      %v2503 = vadd.f32 %v2231, %v2461
      %v2504 = vadd.f32 %v2236, %v2466
      %v2505 = vadd.f32 %v2241, %v2471
      %s2506 = scalar_lea.vmem %s238, 28
      %v2507 = vld [vmem:[%s2506] sm:$0xf]
      %v2508 = vrot.slane %v305, 2
      %v2509 = vrot.slane %v306, 2
      %v2510 = vsel %vm1643, %v2508, %v2509
      %v2511 = vrot.slane %v307, 2
      %v2512 = vsel %vm1643, %v2509, %v2511
      %v2513 = vsel %vm443, %v2510, 0
      %v2515 = vsel %vm443, %v2512, 0
      %v2518 = vsel %vm508, %v2507, 0
      %2520 = vmatprep.subr.mxu0 0.0
      %2521 = vmatpush1.msra.mxu0 %v2518
      %2522 = vmatprep.subr.mxu0 0.0
      %2523 = vmatpush1.msra.mxu0 0.0
      %2524 = vmatprep.subr.mxu0 0.0
      %2525 = vmatpush1.msra.mxu0 0.0
      %2526 = vmatprep.subr.mxu0 0.0
      %2527 = vmatpush1.msra.mxu0 0.0
      %2528 = vmatprep.subr.mxu0 0.0
      %2529 = vmatpush1.msra.mxu0 0.0
      %2530 = vmatprep.subr.mxu0 0.0
      %2531 = vmatpush1.msra.mxu0 0.0
      %2532 = vmatprep.subr.mxu0 0.0
      %2533 = vmatpush1.msra.mxu0 0.0
      %2534 = vmatprep.subr.mxu0 0.0
      %2535 = vmatpush1.msra.mxu0 0.0
      %2536 = vmatprep.subr.mxu0 0.0
      %2537 = vmatpush1.msra.mxu0 0.0
      %2538 = vmatprep.subr.mxu0 0.0
      %2539 = vmatpush1.msra.mxu0 0.0
      %2540 = vmatprep.subr.mxu0 0.0
      %2541 = vmatpush1.msra.mxu0 0.0
      %2542 = vmatprep.subr.mxu0 0.0
      %2543 = vmatpush1.msra.mxu0 0.0
      %2544 = vmatprep.subr.mxu0 0.0
      %2545 = vmatpush1.msra.mxu0 0.0
      %2546 = vmatprep.subr.mxu0 0.0
      %2547 = vmatpush1.msra.mxu0 0.0
      %2548 = vmatprep.subr.mxu0 0.0
      %2549 = vmatpush1.msra.mxu0 0.0
      %2550 = vmatprep.subr.mxu0 0.0
      %2551 = vmatpush1.msra.mxu0 0.0
      %2552 = vmatprep.subr.mxu0 0.0
      %2553 = vmatpush1.msra.mxu0 0.0
      %2554 = vmatprep.subr.mxu0 0.0
      %2555 = vmatpush1.msra.mxu0 0.0
      %2556 = vmatprep.subr.mxu0 0.0
      %2557 = vmatpush1.msra.mxu0 0.0
      %2558 = vmatprep.subr.mxu0 0.0
      %2559 = vmatpush1.msra.mxu0 0.0
      %2560 = vmatprep.subr.mxu0 0.0
      %2561 = vmatpush1.msra.mxu0 0.0
      %2562 = vmatprep.subr.mxu0 0.0
      %2563 = vmatpush1.msra.mxu0 0.0
      %2564 = vmatprep.subr.mxu0 0.0
      %2565 = vmatpush1.msra.mxu0 0.0
      %2566 = vmatprep.subr.mxu0 0.0
      %2567 = vmatpush1.msra.mxu0 0.0
      %2568 = vmatprep.subr.mxu0 0.0
      %2569 = vmatpush1.msra.mxu0 0.0
      %2570 = vmatprep.subr.mxu0 0.0
      %2571 = vmatpush1.msra.mxu0 0.0
      %2572 = vmatprep.subr.mxu0 0.0
      %2573 = vmatpush1.msra.mxu0 0.0
      %2574 = vmatprep.subr.mxu0 0.0
      %2575 = vmatpush1.msra.mxu0 0.0
      %2576 = vmatprep.subr.mxu0 0.0
      %2577 = vmatpush1.msra.mxu0 0.0
      %2578 = vmatprep.subr.mxu0 0.0
      %2579 = vmatpush1.msra.mxu0 0.0
      %2580 = vmatprep.subr.mxu0 0.0
      %2581 = vmatpush1.msra.mxu0 0.0
      %2582 = vmatprep.subr.mxu0 0.0
      %2583 = vmatpush1.msra.mxu0 0.0
      %2584 = vmatprep.mubr.f32.mxu0 0.0
      %2585 = vmatmul.mubr.f32.gmra.mrb[0].mxu0 %v1728
      %v2586 = vpop.f32.mrb[0].mxu0
      %v2587 = vadd.f32 0.0, %v2586
      %v2588 = vpop.f32.mrb[0].mxu0
      %2589 = vmatprep.mubr.f32.mxu0 0.0
      %2590 = vmatmul.mubr.f32.gmra.mrb[0].mxu0 %v1730
      %v2591 = vpop.f32.mrb[0].mxu0
      %v2592 = vadd.f32 0.0, %v2591
      %v2593 = vpop.f32.mrb[0].mxu0
      %2594 = vmatprep.mubr.f32.mxu0 0.0
      %2595 = vmatmul.mubr.f32.gmra.mrb[0].mxu0 %v1732
      %v2596 = vpop.f32.mrb[0].mxu0
      %v2597 = vadd.f32 0.0, %v2596
      %v2598 = vpop.f32.mrb[0].mxu0
      %2599 = vmatprep.mubr.f32.mxu0 0.0
      %2600 = vmatmul.mubr.f32.gmra.mrb[0].mxu0 %v1734
      %v2601 = vpop.f32.mrb[0].mxu0
      %v2602 = vadd.f32 0.0, %v2601
      %v2603 = vpop.f32.mrb[0].mxu0
      %2604 = vmatprep.mubr.f32.mxu0 0.0
      %2605 = vmatmul.mubr.f32.gmra.mrb[0].mxu0 %v1736
      %v2606 = vpop.f32.mrb[0].mxu0
      %v2607 = vadd.f32 0.0, %v2606
      %v2608 = vpop.f32.mrb[0].mxu0
      %2609 = vmatprep.mubr.f32.mxu0 0.0
      %2610 = vmatmul.mubr.f32.gmra.mrb[0].mxu0 %v1738
      %v2611 = vpop.f32.mrb[0].mxu0
      %v2612 = vadd.f32 0.0, %v2611
      %v2613 = vpop.f32.mrb[0].mxu0
      %2614 = vmatprep.mubr.f32.mxu0 0.0
      %2615 = vmatmul.mubr.f32.gmra.mrb[0].mxu0 %v1740
      %v2616 = vpop.f32.mrb[0].mxu0
      %v2617 = vadd.f32 0.0, %v2616
      %v2618 = vpop.f32.mrb[0].mxu0
      %2619 = vmatprep.mubr.f32.mxu0 0.0
      %2620 = vmatmul.mubr.f32.gmra.mrb[0].mxu0 %v1742
      %v2621 = vpop.f32.mrb[0].mxu0
      %v2622 = vadd.f32 0.0, %v2621
      %v2623 = vpop.f32.mrb[0].mxu0
      %2624 = vmatprep.mubr.f32.mxu0 0.0
      %2625 = vmatmul.mubr.f32.gmra.mrb[0].mxu0 %v1744
      %v2626 = vpop.f32.mrb[0].mxu0
      %v2627 = vadd.f32 0.0, %v2626
      %v2628 = vpop.f32.mrb[0].mxu0
      %2629 = vmatprep.mubr.f32.mxu0 0.0
      %2630 = vmatmul.mubr.f32.gmra.mrb[0].mxu0 %v1746
      %v2631 = vpop.f32.mrb[0].mxu0
      %v2632 = vadd.f32 0.0, %v2631
      %v2633 = vpop.f32.mrb[0].mxu0
      %2634 = vmatprep.mubr.f32.mxu0 0.0
      %2635 = vmatmul.mubr.f32.gmra.mrb[0].mxu0 %v1748
      %v2636 = vpop.f32.mrb[0].mxu0
      %v2637 = vadd.f32 0.0, %v2636
      %v2638 = vpop.f32.mrb[0].mxu0
      %2639 = vmatprep.mubr.f32.mxu0 0.0
      %2640 = vmatmul.mubr.f32.gmra.mrb[0].mxu0 %v1750
      %v2641 = vpop.f32.mrb[0].mxu0
      %v2642 = vadd.f32 0.0, %v2641
      %v2643 = vpop.f32.mrb[0].mxu0
      %2644 = vmatprep.mubr.f32.mxu0 0.0
      %2645 = vmatmul.mubr.f32.gmra.mrb[0].mxu0 %v1752
      %v2646 = vpop.f32.mrb[0].mxu0
      %v2647 = vadd.f32 0.0, %v2646
      %v2648 = vpop.f32.mrb[0].mxu0
      %2649 = vmatprep.mubr.f32.mxu0 0.0
      %2650 = vmatmul.mubr.f32.gmra.mrb[0].mxu0 %v1754
      %v2651 = vpop.f32.mrb[0].mxu0
      %v2652 = vadd.f32 0.0, %v2651
      %v2653 = vpop.f32.mrb[0].mxu0
      %2654 = vmatprep.mubr.f32.mxu0 0.0
      %2655 = vmatmul.mubr.f32.gmra.mrb[0].mxu0 %v1756
      %v2656 = vpop.f32.mrb[0].mxu0
      %v2657 = vadd.f32 0.0, %v2656
      %v2658 = vpop.f32.mrb[0].mxu0
      %2659 = vmatprep.mubr.f32.mxu0 0.0
      %2660 = vmatmul.mubr.f32.gmra.mrb[0].mxu0 %v1758
      %v2661 = vpop.f32.mrb[0].mxu0
      %v2662 = vadd.f32 0.0, %v2661
      %v2663 = vpop.f32.mrb[0].mxu0
      %2664 = vmatprep.mubr.f32.mxu0 0.0
      %2665 = vmatmul.mubr.f32.gmra.mrb[0].mxu0 %v1760
      %v2666 = vpop.f32.mrb[0].mxu0
      %v2667 = vadd.f32 0.0, %v2666
      %v2668 = vpop.f32.mrb[0].mxu0
      %2669 = vmatprep.mubr.f32.mxu0 0.0
      %2670 = vmatmul.mubr.f32.gmra.mrb[0].mxu0 %v1762
      %v2671 = vpop.f32.mrb[0].mxu0
      %v2672 = vadd.f32 0.0, %v2671
      %v2673 = vpop.f32.mrb[0].mxu0
      %2674 = vmatprep.mubr.f32.mxu0 0.0
      %2675 = vmatmul.mubr.f32.gmra.mrb[0].mxu0 %v1764
      %v2676 = vpop.f32.mrb[0].mxu0
      %v2677 = vadd.f32 0.0, %v2676
      %v2678 = vpop.f32.mrb[0].mxu0
      %2679 = vmatprep.mubr.f32.mxu0 0.0
      %2680 = vmatmul.mubr.f32.gmra.mrb[0].mxu0 %v1766
      %v2681 = vpop.f32.mrb[0].mxu0
      %v2682 = vadd.f32 0.0, %v2681
      %v2683 = vpop.f32.mrb[0].mxu0
      %2684 = vmatprep.mubr.f32.mxu0 0.0
      %2685 = vmatmul.mubr.f32.gmra.mrb[0].mxu0 %v1768
      %v2686 = vpop.f32.mrb[0].mxu0
      %v2687 = vadd.f32 0.0, %v2686
      %v2688 = vpop.f32.mrb[0].mxu0
      %2689 = vmatprep.mubr.f32.mxu0 0.0
      %2690 = vmatmul.mubr.f32.gmra.mrb[0].mxu0 %v1770
      %v2691 = vpop.f32.mrb[0].mxu0
      %v2692 = vadd.f32 0.0, %v2691
      %v2693 = vpop.f32.mrb[0].mxu0
      %2694 = vmatprep.mubr.f32.mxu0 0.0
      %2695 = vmatmul.mubr.f32.gmra.mrb[0].mxu0 %v1772
      %v2696 = vpop.f32.mrb[0].mxu0
      %v2697 = vadd.f32 0.0, %v2696
      %v2698 = vpop.f32.mrb[0].mxu0
      %2699 = vmatprep.mubr.f32.mxu0 0.0
      %2700 = vmatmul.mubr.f32.gmra.mrb[0].mxu0 %v1774
      %v2701 = vpop.f32.mrb[0].mxu0
      %v2702 = vadd.f32 0.0, %v2701
      %v2703 = vpop.f32.mrb[0].mxu0
      %2704 = vmatprep.mubr.f32.mxu0 0.0
      %2705 = vmatmul.mubr.f32.gmra.mrb[0].mxu0 %v1776
      %v2706 = vpop.f32.mrb[0].mxu0
      %v2707 = vadd.f32 0.0, %v2706
      %v2708 = vpop.f32.mrb[0].mxu0
      %2709 = vmatprep.mubr.f32.mxu0 0.0
      %2710 = vmatmul.mubr.f32.gmra.mrb[0].mxu0 %v1778
      %v2711 = vpop.f32.mrb[0].mxu0
      %v2712 = vadd.f32 0.0, %v2711
      %v2713 = vpop.f32.mrb[0].mxu0
      %2714 = vmatprep.mubr.f32.mxu0 0.0
      %2715 = vmatmul.mubr.f32.gmra.mrb[0].mxu0 %v1780
      %v2716 = vpop.f32.mrb[0].mxu0
      %v2717 = vadd.f32 0.0, %v2716
      %v2718 = vpop.f32.mrb[0].mxu0
      %2719 = vmatprep.mubr.f32.mxu0 0.0
      %2720 = vmatmul.mubr.f32.gmra.mrb[0].mxu0 %v1782
      %v2721 = vpop.f32.mrb[0].mxu0
      %v2722 = vadd.f32 0.0, %v2721
      %v2723 = vpop.f32.mrb[0].mxu0
      %2724 = vmatprep.mubr.f32.mxu0 0.0
      %2725 = vmatmul.mubr.f32.gmra.mrb[0].mxu0 %v1784
      %v2726 = vpop.f32.mrb[0].mxu0
      %v2727 = vadd.f32 0.0, %v2726
      %v2728 = vpop.f32.mrb[0].mxu0
      %2729 = vmatprep.mubr.f32.mxu0 0.0
      %2730 = vmatmul.mubr.f32.gmra.mrb[0].mxu0 %v1786
      %v2731 = vpop.f32.mrb[0].mxu0
      %v2732 = vadd.f32 0.0, %v2731
      %v2733 = vpop.f32.mrb[0].mxu0
      %2734 = vmatprep.mubr.f32.mxu0 0.0
      %2735 = vmatmul.mubr.f32.gmra.mrb[0].mxu0 %v2513
      %v2736 = vpop.f32.mrb[0].mxu0
      %v2737 = vadd.f32 0.0, %v2736
      %v2738 = vpop.f32.mrb[0].mxu0
      %2739 = vmatprep.mubr.f32.mxu0 0.0
      %2740 = vmatmul.mubr.f32.gmra.mrb[0].mxu0 %v2515
      %v2741 = vpop.f32.mrb[0].mxu0
      %v2742 = vadd.f32 0.0, %v2741
      %v2743 = vpop.f32.mrb[0].mxu0
      %2744 = vdwg.mxu0
      %v2745 = vadd.f32 %v2474, %v2587
      %v2746 = vadd.f32 %v2475, %v2592
      %v2747 = vadd.f32 %v2476, %v2597
      %v2748 = vadd.f32 %v2477, %v2602
      %v2749 = vadd.f32 %v2478, %v2607
      %v2750 = vadd.f32 %v2479, %v2612
      %v2751 = vadd.f32 %v2480, %v2617
      %v2752 = vadd.f32 %v2481, %v2622
      %v2753 = vadd.f32 %v2482, %v2627
      %v2754 = vadd.f32 %v2483, %v2632
      %v2755 = vadd.f32 %v2484, %v2637
      %v2756 = vadd.f32 %v2485, %v2642
      %v2757 = vadd.f32 %v2486, %v2647
      %v2758 = vadd.f32 %v2487, %v2652
      %v2759 = vadd.f32 %v2488, %v2657
      %v2760 = vadd.f32 %v2489, %v2662
      %v2761 = vadd.f32 %v2490, %v2667
      %v2762 = vadd.f32 %v2491, %v2672
      %v2763 = vadd.f32 %v2492, %v2677
      %v2764 = vadd.f32 %v2493, %v2682
      %v2765 = vadd.f32 %v2494, %v2687
      %v2766 = vadd.f32 %v2495, %v2692
      %v2767 = vadd.f32 %v2496, %v2697
      %v2768 = vadd.f32 %v2497, %v2702
      %v2769 = vadd.f32 %v2498, %v2707
      %v2770 = vadd.f32 %v2499, %v2712
      %v2771 = vadd.f32 %v2500, %v2717
      %v2772 = vadd.f32 %v2501, %v2722
      %v2773 = vadd.f32 %v2502, %v2727
      %v2774 = vadd.f32 %v2503, %v2732
      %v2775 = vadd.f32 %v2504, %v2737
      %v2776 = vadd.f32 %v2505, %v2742
      %v2777 = vadd.f32 %v2745, %v1573
      %v2778 = vadd.f32 %v2746, %v1573
      %v2779 = vadd.f32 %v2747, %v1573
      %v2780 = vadd.f32 %v2748, %v1573
      %v2781 = vadd.f32 %v2749, %v1573
      %v2782 = vadd.f32 %v2750, %v1573
      %v2783 = vadd.f32 %v2751, %v1573
      %v2784 = vadd.f32 %v2752, %v1573
      %v2785 = vadd.f32 %v2753, %v1573
      %v2786 = vadd.f32 %v2754, %v1573
      %v2787 = vadd.f32 %v2755, %v1573
      %v2788 = vadd.f32 %v2756, %v1573
      %v2789 = vadd.f32 %v2757, %v1573
      %v2790 = vadd.f32 %v2758, %v1573
      %v2791 = vadd.f32 %v2759, %v1573
      %v2792 = vadd.f32 %v2760, %v1573
      %v2793 = vadd.f32 %v2761, %v1573
      %v2794 = vadd.f32 %v2762, %v1573
      %v2795 = vadd.f32 %v2763, %v1573
      %v2796 = vadd.f32 %v2764, %v1573
      %v2797 = vadd.f32 %v2765, %v1573
      %v2798 = vadd.f32 %v2766, %v1573
      %v2799 = vadd.f32 %v2767, %v1573
      %v2800 = vadd.f32 %v2768, %v1573
      %v2801 = vadd.f32 %v2769, %v1573
      %v2802 = vadd.f32 %v2770, %v1573
      %v2803 = vadd.f32 %v2771, %v1573
      %v2804 = vadd.f32 %v2772, %v1573
      %v2805 = vadd.f32 %v2773, %v1573
      %v2806 = vadd.f32 %v2774, %v1573
      %v2807 = vadd.f32 %v2775, %v1573
      %v2808 = vadd.f32 %v2776, %v1573
      %s2809 = scalar_lea.vmem %s254, 256
      %2810 = vst.msk [vmem:[%s2809] sm:$0xff] %vm443, %v2777
      %2811 = vst.msk [vmem:[%s2809 + $0x8] sm:$0xff] %vm443, %v2778
      %2812 = vst.msk [vmem:[%s2809 + $0x10] sm:$0xff] %vm443, %v2779
      %2813 = vst.msk [vmem:[%s2809 + $0x18] sm:$0xff] %vm443, %v2780
      %2814 = vst.msk [vmem:[%s2809 + $0x20] sm:$0xff] %vm443, %v2781
      %2815 = vst.msk [vmem:[%s2809 + $0x28] sm:$0xff] %vm443, %v2782
      %2816 = vst.msk [vmem:[%s2809 + $0x30] sm:$0xff] %vm443, %v2783
      %2817 = vst.msk [vmem:[%s2809 + $0x38] sm:$0xff] %vm443, %v2784
      %2818 = vst.msk [vmem:[%s2809 + $0x40] sm:$0xff] %vm443, %v2785
      %2819 = vst.msk [vmem:[%s2809 + $0x48] sm:$0xff] %vm443, %v2786
      %2820 = vst.msk [vmem:[%s2809 + $0x50] sm:$0xff] %vm443, %v2787
      %2821 = vst.msk [vmem:[%s2809 + $0x58] sm:$0xff] %vm443, %v2788
      %2822 = vst.msk [vmem:[%s2809 + $0x60] sm:$0xff] %vm443, %v2789
      %2823 = vst.msk [vmem:[%s2809 + $0x68] sm:$0xff] %vm443, %v2790
      %2824 = vst.msk [vmem:[%s2809 + $0x70] sm:$0xff] %vm443, %v2791
      %2825 = vst.msk [vmem:[%s2809 + $0x78] sm:$0xff] %vm443, %v2792
      %2826 = vst.msk [vmem:[%s2809 + $0x80] sm:$0xff] %vm443, %v2793
      %2827 = vst.msk [vmem:[%s2809 + $0x88] sm:$0xff] %vm443, %v2794
      %2828 = vst.msk [vmem:[%s2809 + $0x90] sm:$0xff] %vm443, %v2795
      %2829 = vst.msk [vmem:[%s2809 + $0x98] sm:$0xff] %vm443, %v2796
      %2830 = vst.msk [vmem:[%s2809 + $0xa0] sm:$0xff] %vm443, %v2797
      %2831 = vst.msk [vmem:[%s2809 + $0xa8] sm:$0xff] %vm443, %v2798
      %2832 = vst.msk [vmem:[%s2809 + $0xb0] sm:$0xff] %vm443, %v2799
      %2833 = vst.msk [vmem:[%s2809 + $0xb8] sm:$0xff] %vm443, %v2800
      %2834 = vst.msk [vmem:[%s2809 + $0xc0] sm:$0xff] %vm443, %v2801
      %2835 = vst.msk [vmem:[%s2809 + $0xc8] sm:$0xff] %vm443, %v2802
      %2836 = vst.msk [vmem:[%s2809 + $0xd0] sm:$0xff] %vm443, %v2803
      %2837 = vst.msk [vmem:[%s2809 + $0xd8] sm:$0xff] %vm443, %v2804
      %2838 = vst.msk [vmem:[%s2809 + $0xe0] sm:$0xff] %vm443, %v2805
      %2839 = vst.msk [vmem:[%s2809 + $0xe8] sm:$0xff] %vm443, %v2806
      %2840 = vst.msk [vmem:[%s2809 + $0xf0] sm:$0xff] %vm443, %v2807
      %2841 = vst.msk [vmem:[%s2809 + $0xf8] sm:$0xff] %vm443, %v2808
      %s2842 = scalar_lea.vmem %s238, 32
      %v2843 = vld [vmem:[%s2842] sm:$0xf]
      %s2844 = scalar_lea.vmem %s238, 36
      %v2845 = vld [vmem:[%s2844] sm:$0xf]
      %v2847 = vsel %vm508, %v2845, 0
      %2849 = vmatprep.subr.mxu0 0.0
      %2850 = vmatpush1.msra.mxu0 %v2847
      %2851 = vmatprep.subr.mxu0 0.0
      %2852 = vmatpush1.msra.mxu0 0.0
      %2853 = vmatprep.subr.mxu0 0.0
      %2854 = vmatpush1.msra.mxu0 0.0
      %2855 = vmatprep.subr.mxu0 0.0
      %2856 = vmatpush1.msra.mxu0 0.0
      %2857 = vmatprep.subr.mxu0 0.0
      %2858 = vmatpush1.msra.mxu0 0.0
      %2859 = vmatprep.subr.mxu0 0.0
      %2860 = vmatpush1.msra.mxu0 0.0
      %2861 = vmatprep.subr.mxu0 0.0
      %2862 = vmatpush1.msra.mxu0 0.0
      %2863 = vmatprep.subr.mxu0 0.0
      %2864 = vmatpush1.msra.mxu0 0.0
      %2865 = vmatprep.subr.mxu0 0.0
      %2866 = vmatpush1.msra.mxu0 0.0
      %2867 = vmatprep.subr.mxu0 0.0
      %2868 = vmatpush1.msra.mxu0 0.0
      %2869 = vmatprep.subr.mxu0 0.0
      %2870 = vmatpush1.msra.mxu0 0.0
      %2871 = vmatprep.subr.mxu0 0.0
      %2872 = vmatpush1.msra.mxu0 0.0
      %2873 = vmatprep.subr.mxu0 0.0
      %2874 = vmatpush1.msra.mxu0 0.0
      %2875 = vmatprep.subr.mxu0 0.0
      %2876 = vmatpush1.msra.mxu0 0.0
      %2877 = vmatprep.subr.mxu0 0.0
      %2878 = vmatpush1.msra.mxu0 0.0
      %2879 = vmatprep.subr.mxu0 0.0
      %2880 = vmatpush1.msra.mxu0 0.0
      %2881 = vmatprep.subr.mxu0 0.0
      %2882 = vmatpush1.msra.mxu0 0.0
      %2883 = vmatprep.subr.mxu0 0.0
      %2884 = vmatpush1.msra.mxu0 0.0
      %2885 = vmatprep.subr.mxu0 0.0
      %2886 = vmatpush1.msra.mxu0 0.0
      %2887 = vmatprep.subr.mxu0 0.0
      %2888 = vmatpush1.msra.mxu0 0.0
      %2889 = vmatprep.subr.mxu0 0.0
      %2890 = vmatpush1.msra.mxu0 0.0
      %2891 = vmatprep.subr.mxu0 0.0
      %2892 = vmatpush1.msra.mxu0 0.0
      %2893 = vmatprep.subr.mxu0 0.0
      %2894 = vmatpush1.msra.mxu0 0.0
      %2895 = vmatprep.subr.mxu0 0.0
      %2896 = vmatpush1.msra.mxu0 0.0
      %2897 = vmatprep.subr.mxu0 0.0
      %2898 = vmatpush1.msra.mxu0 0.0
      %2899 = vmatprep.subr.mxu0 0.0
      %2900 = vmatpush1.msra.mxu0 0.0
      %2901 = vmatprep.subr.mxu0 0.0
      %2902 = vmatpush1.msra.mxu0 0.0
      %2903 = vmatprep.subr.mxu0 0.0
      %2904 = vmatpush1.msra.mxu0 0.0
      %2905 = vmatprep.subr.mxu0 0.0
      %2906 = vmatpush1.msra.mxu0 0.0
      %2907 = vmatprep.subr.mxu0 0.0
      %2908 = vmatpush1.msra.mxu0 0.0
      %2909 = vmatprep.subr.mxu0 0.0
      %2910 = vmatpush1.msra.mxu0 0.0
      %2911 = vmatprep.subr.mxu0 0.0
      %2912 = vmatpush1.msra.mxu0 0.0
      %2913 = vmatprep.mubr.f32.mxu0 0.0
      %2914 = vmatmul.mubr.f32.gmra.mrb[0].mxu0 %v448
      %v2915 = vpop.f32.mrb[0].mxu0
      %v2916 = vadd.f32 0.0, %v2915
      %v2917 = vpop.f32.mrb[0].mxu0
      %2918 = vmatprep.mubr.f32.mxu0 0.0
      %2919 = vmatmul.mubr.f32.gmra.mrb[0].mxu0 %v450
      %v2920 = vpop.f32.mrb[0].mxu0
      %v2921 = vadd.f32 0.0, %v2920
      %v2922 = vpop.f32.mrb[0].mxu0
      %2923 = vmatprep.mubr.f32.mxu0 0.0
      %2924 = vmatmul.mubr.f32.gmra.mrb[0].mxu0 %v452
      %v2925 = vpop.f32.mrb[0].mxu0
      %v2926 = vadd.f32 0.0, %v2925
      %v2927 = vpop.f32.mrb[0].mxu0
      %2928 = vmatprep.mubr.f32.mxu0 0.0
      %2929 = vmatmul.mubr.f32.gmra.mrb[0].mxu0 %v454
      %v2930 = vpop.f32.mrb[0].mxu0
      %v2931 = vadd.f32 0.0, %v2930
      %v2932 = vpop.f32.mrb[0].mxu0
      %2933 = vmatprep.mubr.f32.mxu0 0.0
      %2934 = vmatmul.mubr.f32.gmra.mrb[0].mxu0 %v456
      %v2935 = vpop.f32.mrb[0].mxu0
      %v2936 = vadd.f32 0.0, %v2935
      %v2937 = vpop.f32.mrb[0].mxu0
      %2938 = vmatprep.mubr.f32.mxu0 0.0
      %2939 = vmatmul.mubr.f32.gmra.mrb[0].mxu0 %v458
      %v2940 = vpop.f32.mrb[0].mxu0
      %v2941 = vadd.f32 0.0, %v2940
      %v2942 = vpop.f32.mrb[0].mxu0
      %2943 = vmatprep.mubr.f32.mxu0 0.0
      %2944 = vmatmul.mubr.f32.gmra.mrb[0].mxu0 %v460
      %v2945 = vpop.f32.mrb[0].mxu0
      %v2946 = vadd.f32 0.0, %v2945
      %v2947 = vpop.f32.mrb[0].mxu0
      %2948 = vmatprep.mubr.f32.mxu0 0.0
      %2949 = vmatmul.mubr.f32.gmra.mrb[0].mxu0 %v462
      %v2950 = vpop.f32.mrb[0].mxu0
      %v2951 = vadd.f32 0.0, %v2950
      %v2952 = vpop.f32.mrb[0].mxu0
      %2953 = vmatprep.mubr.f32.mxu0 0.0
      %2954 = vmatmul.mubr.f32.gmra.mrb[0].mxu0 %v464
      %v2955 = vpop.f32.mrb[0].mxu0
      %v2956 = vadd.f32 0.0, %v2955
      %v2957 = vpop.f32.mrb[0].mxu0
      %2958 = vmatprep.mubr.f32.mxu0 0.0
      %2959 = vmatmul.mubr.f32.gmra.mrb[0].mxu0 %v466
      %v2960 = vpop.f32.mrb[0].mxu0
      %v2961 = vadd.f32 0.0, %v2960
      %v2962 = vpop.f32.mrb[0].mxu0
      %2963 = vmatprep.mubr.f32.mxu0 0.0
      %2964 = vmatmul.mubr.f32.gmra.mrb[0].mxu0 %v468
      %v2965 = vpop.f32.mrb[0].mxu0
      %v2966 = vadd.f32 0.0, %v2965
      %v2967 = vpop.f32.mrb[0].mxu0
      %2968 = vmatprep.mubr.f32.mxu0 0.0
      %2969 = vmatmul.mubr.f32.gmra.mrb[0].mxu0 %v470
      %v2970 = vpop.f32.mrb[0].mxu0
      %v2971 = vadd.f32 0.0, %v2970
      %v2972 = vpop.f32.mrb[0].mxu0
      %2973 = vmatprep.mubr.f32.mxu0 0.0
      %2974 = vmatmul.mubr.f32.gmra.mrb[0].mxu0 %v472
      %v2975 = vpop.f32.mrb[0].mxu0
      %v2976 = vadd.f32 0.0, %v2975
      %v2977 = vpop.f32.mrb[0].mxu0
      %2978 = vmatprep.mubr.f32.mxu0 0.0
      %2979 = vmatmul.mubr.f32.gmra.mrb[0].mxu0 %v474
      %v2980 = vpop.f32.mrb[0].mxu0
      %v2981 = vadd.f32 0.0, %v2980
      %v2982 = vpop.f32.mrb[0].mxu0
      %2983 = vmatprep.mubr.f32.mxu0 0.0
      %2984 = vmatmul.mubr.f32.gmra.mrb[0].mxu0 %v476
      %v2985 = vpop.f32.mrb[0].mxu0
      %v2986 = vadd.f32 0.0, %v2985
      %v2987 = vpop.f32.mrb[0].mxu0
      %2988 = vmatprep.mubr.f32.mxu0 0.0
      %2989 = vmatmul.mubr.f32.gmra.mrb[0].mxu0 %v478
      %v2990 = vpop.f32.mrb[0].mxu0
      %v2991 = vadd.f32 0.0, %v2990
      %v2992 = vpop.f32.mrb[0].mxu0
      %2993 = vmatprep.mubr.f32.mxu0 0.0
      %2994 = vmatmul.mubr.f32.gmra.mrb[0].mxu0 %v480
      %v2995 = vpop.f32.mrb[0].mxu0
      %v2996 = vadd.f32 0.0, %v2995
      %v2997 = vpop.f32.mrb[0].mxu0
      %2998 = vmatprep.mubr.f32.mxu0 0.0
      %2999 = vmatmul.mubr.f32.gmra.mrb[0].mxu0 %v482
      %v3000 = vpop.f32.mrb[0].mxu0
      %v3001 = vadd.f32 0.0, %v3000
      %v3002 = vpop.f32.mrb[0].mxu0
      %3003 = vmatprep.mubr.f32.mxu0 0.0
      %3004 = vmatmul.mubr.f32.gmra.mrb[0].mxu0 %v484
      %v3005 = vpop.f32.mrb[0].mxu0
      %v3006 = vadd.f32 0.0, %v3005
      %v3007 = vpop.f32.mrb[0].mxu0
      %3008 = vmatprep.mubr.f32.mxu0 0.0
      %3009 = vmatmul.mubr.f32.gmra.mrb[0].mxu0 %v486
      %v3010 = vpop.f32.mrb[0].mxu0
      %v3011 = vadd.f32 0.0, %v3010
      %v3012 = vpop.f32.mrb[0].mxu0
      %3013 = vmatprep.mubr.f32.mxu0 0.0
      %3014 = vmatmul.mubr.f32.gmra.mrb[0].mxu0 %v488
      %v3015 = vpop.f32.mrb[0].mxu0
      %v3016 = vadd.f32 0.0, %v3015
      %v3017 = vpop.f32.mrb[0].mxu0
      %3018 = vmatprep.mubr.f32.mxu0 0.0
      %3019 = vmatmul.mubr.f32.gmra.mrb[0].mxu0 %v490
      %v3020 = vpop.f32.mrb[0].mxu0
      %v3021 = vadd.f32 0.0, %v3020
      %v3022 = vpop.f32.mrb[0].mxu0
      %3023 = vmatprep.mubr.f32.mxu0 0.0
      %3024 = vmatmul.mubr.f32.gmra.mrb[0].mxu0 %v492
      %v3025 = vpop.f32.mrb[0].mxu0
      %v3026 = vadd.f32 0.0, %v3025
      %v3027 = vpop.f32.mrb[0].mxu0
      %3028 = vmatprep.mubr.f32.mxu0 0.0
      %3029 = vmatmul.mubr.f32.gmra.mrb[0].mxu0 %v494
      %v3030 = vpop.f32.mrb[0].mxu0
      %v3031 = vadd.f32 0.0, %v3030
      %v3032 = vpop.f32.mrb[0].mxu0
      %3033 = vmatprep.mubr.f32.mxu0 0.0
      %3034 = vmatmul.mubr.f32.gmra.mrb[0].mxu0 %v496
      %v3035 = vpop.f32.mrb[0].mxu0
      %v3036 = vadd.f32 0.0, %v3035
      %v3037 = vpop.f32.mrb[0].mxu0
      %3038 = vmatprep.mubr.f32.mxu0 0.0
      %3039 = vmatmul.mubr.f32.gmra.mrb[0].mxu0 %v498
      %v3040 = vpop.f32.mrb[0].mxu0
      %v3041 = vadd.f32 0.0, %v3040
      %v3042 = vpop.f32.mrb[0].mxu0
      %3043 = vmatprep.mubr.f32.mxu0 0.0
      %3044 = vmatmul.mubr.f32.gmra.mrb[0].mxu0 %v500
      %v3045 = vpop.f32.mrb[0].mxu0
      %v3046 = vadd.f32 0.0, %v3045
      %v3047 = vpop.f32.mrb[0].mxu0
      %3048 = vmatprep.mubr.f32.mxu0 0.0
      %3049 = vmatmul.mubr.f32.gmra.mrb[0].mxu0 %v502
      %v3050 = vpop.f32.mrb[0].mxu0
      %v3051 = vadd.f32 0.0, %v3050
      %v3052 = vpop.f32.mrb[0].mxu0
      %3053 = vmatprep.mubr.f32.mxu0 0.0
      %3054 = vmatmul.mubr.f32.gmra.mrb[0].mxu0 %v504
      %v3055 = vpop.f32.mrb[0].mxu0
      %v3056 = vadd.f32 0.0, %v3055
      %v3057 = vpop.f32.mrb[0].mxu0
      %3058 = vmatprep.mubr.f32.mxu0 0.0
      %3059 = vmatmul.mubr.f32.gmra.mrb[0].mxu0 %v506
      %v3060 = vpop.f32.mrb[0].mxu0
      %v3061 = vadd.f32 0.0, %v3060
      %v3062 = vpop.f32.mrb[0].mxu0
      %3063 = vmatprep.mubr.f32.mxu0 0.0
      %3064 = vmatmul.mubr.f32.gmra.mrb[0].mxu0 %v1305
      %v3065 = vpop.f32.mrb[0].mxu0
      %v3066 = vadd.f32 0.0, %v3065
      %v3067 = vpop.f32.mrb[0].mxu0
      %3068 = vmatprep.mubr.f32.mxu0 0.0
      %3069 = vmatmul.mubr.f32.gmra.mrb[0].mxu0 %v1307
      %v3070 = vpop.f32.mrb[0].mxu0
      %v3071 = vadd.f32 0.0, %v3070
      %v3072 = vpop.f32.mrb[0].mxu0
      %3073 = vdwg.mxu0
      %v3075 = vsel %vm508, %v2843, 0
      %3077 = vmatprep.subr.mxu0 0.0
      %3078 = vmatpush1.msra.mxu0 %v3075
      %3079 = vmatprep.subr.mxu0 0.0
      %3080 = vmatpush1.msra.mxu0 0.0
      %3081 = vmatprep.subr.mxu0 0.0
      %3082 = vmatpush1.msra.mxu0 0.0
      %3083 = vmatprep.subr.mxu0 0.0
      %3084 = vmatpush1.msra.mxu0 0.0
      %3085 = vmatprep.subr.mxu0 0.0
      %3086 = vmatpush1.msra.mxu0 0.0
      %3087 = vmatprep.subr.mxu0 0.0
      %3088 = vmatpush1.msra.mxu0 0.0
      %3089 = vmatprep.subr.mxu0 0.0
      %3090 = vmatpush1.msra.mxu0 0.0
      %3091 = vmatprep.subr.mxu0 0.0
      %3092 = vmatpush1.msra.mxu0 0.0
      %3093 = vmatprep.subr.mxu0 0.0
      %3094 = vmatpush1.msra.mxu0 0.0
      %3095 = vmatprep.subr.mxu0 0.0
      %3096 = vmatpush1.msra.mxu0 0.0
      %3097 = vmatprep.subr.mxu0 0.0
      %3098 = vmatpush1.msra.mxu0 0.0
      %3099 = vmatprep.subr.mxu0 0.0
      %3100 = vmatpush1.msra.mxu0 0.0
      %3101 = vmatprep.subr.mxu0 0.0
      %3102 = vmatpush1.msra.mxu0 0.0
      %3103 = vmatprep.subr.mxu0 0.0
      %3104 = vmatpush1.msra.mxu0 0.0
      %3105 = vmatprep.subr.mxu0 0.0
      %3106 = vmatpush1.msra.mxu0 0.0
      %3107 = vmatprep.subr.mxu0 0.0
      %3108 = vmatpush1.msra.mxu0 0.0
      %3109 = vmatprep.subr.mxu0 0.0
      %3110 = vmatpush1.msra.mxu0 0.0
      %3111 = vmatprep.subr.mxu0 0.0
      %3112 = vmatpush1.msra.mxu0 0.0
      %3113 = vmatprep.subr.mxu0 0.0
      %3114 = vmatpush1.msra.mxu0 0.0
      %3115 = vmatprep.subr.mxu0 0.0
      %3116 = vmatpush1.msra.mxu0 0.0
      %3117 = vmatprep.subr.mxu0 0.0
      %3118 = vmatpush1.msra.mxu0 0.0
      %3119 = vmatprep.subr.mxu0 0.0
      %3120 = vmatpush1.msra.mxu0 0.0
      %3121 = vmatprep.subr.mxu0 0.0
      %3122 = vmatpush1.msra.mxu0 0.0
      %3123 = vmatprep.subr.mxu0 0.0
      %3124 = vmatpush1.msra.mxu0 0.0
      %3125 = vmatprep.subr.mxu0 0.0
      %3126 = vmatpush1.msra.mxu0 0.0
      %3127 = vmatprep.subr.mxu0 0.0
      %3128 = vmatpush1.msra.mxu0 0.0
      %3129 = vmatprep.subr.mxu0 0.0
      %3130 = vmatpush1.msra.mxu0 0.0
      %3131 = vmatprep.subr.mxu0 0.0
      %3132 = vmatpush1.msra.mxu0 0.0
      %3133 = vmatprep.subr.mxu0 0.0
      %3134 = vmatpush1.msra.mxu0 0.0
      %3135 = vmatprep.subr.mxu0 0.0
      %3136 = vmatpush1.msra.mxu0 0.0
      %3137 = vmatprep.subr.mxu0 0.0
      %3138 = vmatpush1.msra.mxu0 0.0
      %3139 = vmatprep.subr.mxu0 0.0
      %3140 = vmatpush1.msra.mxu0 0.0
      %3141 = vmatprep.mubr.f32.mxu0 0.0
      %3142 = vmatmul.mubr.f32.gmra.mrb[0].mxu0 %v741
      %v3143 = vpop.f32.mrb[0].mxu0
      %v3144 = vadd.f32 %v2916, %v3143
      %v3145 = vpop.f32.mrb[0].mxu0
      %3146 = vmatprep.mubr.f32.mxu0 0.0
      %3147 = vmatmul.mubr.f32.gmra.mrb[0].mxu0 %v743
      %v3148 = vpop.f32.mrb[0].mxu0
      %v3149 = vadd.f32 %v2921, %v3148
      %v3150 = vpop.f32.mrb[0].mxu0
      %3151 = vmatprep.mubr.f32.mxu0 0.0
      %3152 = vmatmul.mubr.f32.gmra.mrb[0].mxu0 %v745
      %v3153 = vpop.f32.mrb[0].mxu0
      %v3154 = vadd.f32 %v2926, %v3153
      %v3155 = vpop.f32.mrb[0].mxu0
      %3156 = vmatprep.mubr.f32.mxu0 0.0
      %3157 = vmatmul.mubr.f32.gmra.mrb[0].mxu0 %v747
      %v3158 = vpop.f32.mrb[0].mxu0
      %v3159 = vadd.f32 %v2931, %v3158
      %v3160 = vpop.f32.mrb[0].mxu0
      %3161 = vmatprep.mubr.f32.mxu0 0.0
      %3162 = vmatmul.mubr.f32.gmra.mrb[0].mxu0 %v749
      %v3163 = vpop.f32.mrb[0].mxu0
      %v3164 = vadd.f32 %v2936, %v3163
      %v3165 = vpop.f32.mrb[0].mxu0
      %3166 = vmatprep.mubr.f32.mxu0 0.0
      %3167 = vmatmul.mubr.f32.gmra.mrb[0].mxu0 %v751
      %v3168 = vpop.f32.mrb[0].mxu0
      %v3169 = vadd.f32 %v2941, %v3168
      %v3170 = vpop.f32.mrb[0].mxu0
      %3171 = vmatprep.mubr.f32.mxu0 0.0
      %3172 = vmatmul.mubr.f32.gmra.mrb[0].mxu0 %v753
      %v3173 = vpop.f32.mrb[0].mxu0
      %v3174 = vadd.f32 %v2946, %v3173
      %v3175 = vpop.f32.mrb[0].mxu0
      %3176 = vmatprep.mubr.f32.mxu0 0.0
      %3177 = vmatmul.mubr.f32.gmra.mrb[0].mxu0 %v755
      %v3178 = vpop.f32.mrb[0].mxu0
      %v3179 = vadd.f32 %v2951, %v3178
      %v3180 = vpop.f32.mrb[0].mxu0
      %3181 = vmatprep.mubr.f32.mxu0 0.0
      %3182 = vmatmul.mubr.f32.gmra.mrb[0].mxu0 %v757
      %v3183 = vpop.f32.mrb[0].mxu0
      %v3184 = vadd.f32 %v2956, %v3183
      %v3185 = vpop.f32.mrb[0].mxu0
      %3186 = vmatprep.mubr.f32.mxu0 0.0
      %3187 = vmatmul.mubr.f32.gmra.mrb[0].mxu0 %v759
      %v3188 = vpop.f32.mrb[0].mxu0
      %v3189 = vadd.f32 %v2961, %v3188
      %v3190 = vpop.f32.mrb[0].mxu0
      %3191 = vmatprep.mubr.f32.mxu0 0.0
      %3192 = vmatmul.mubr.f32.gmra.mrb[0].mxu0 %v761
      %v3193 = vpop.f32.mrb[0].mxu0
      %v3194 = vadd.f32 %v2966, %v3193
      %v3195 = vpop.f32.mrb[0].mxu0
      %3196 = vmatprep.mubr.f32.mxu0 0.0
      %3197 = vmatmul.mubr.f32.gmra.mrb[0].mxu0 %v763
      %v3198 = vpop.f32.mrb[0].mxu0
      %v3199 = vadd.f32 %v2971, %v3198
      %v3200 = vpop.f32.mrb[0].mxu0
      %3201 = vmatprep.mubr.f32.mxu0 0.0
      %3202 = vmatmul.mubr.f32.gmra.mrb[0].mxu0 %v765
      %v3203 = vpop.f32.mrb[0].mxu0
      %v3204 = vadd.f32 %v2976, %v3203
      %v3205 = vpop.f32.mrb[0].mxu0
      %3206 = vmatprep.mubr.f32.mxu0 0.0
      %3207 = vmatmul.mubr.f32.gmra.mrb[0].mxu0 %v767
      %v3208 = vpop.f32.mrb[0].mxu0
      %v3209 = vadd.f32 %v2981, %v3208
      %v3210 = vpop.f32.mrb[0].mxu0
      %3211 = vmatprep.mubr.f32.mxu0 0.0
      %3212 = vmatmul.mubr.f32.gmra.mrb[0].mxu0 %v769
      %v3213 = vpop.f32.mrb[0].mxu0
      %v3214 = vadd.f32 %v2986, %v3213
      %v3215 = vpop.f32.mrb[0].mxu0
      %3216 = vmatprep.mubr.f32.mxu0 0.0
      %3217 = vmatmul.mubr.f32.gmra.mrb[0].mxu0 %v771
      %v3218 = vpop.f32.mrb[0].mxu0
      %v3219 = vadd.f32 %v2991, %v3218
      %v3220 = vpop.f32.mrb[0].mxu0
      %3221 = vmatprep.mubr.f32.mxu0 0.0
      %3222 = vmatmul.mubr.f32.gmra.mrb[0].mxu0 %v773
      %v3223 = vpop.f32.mrb[0].mxu0
      %v3224 = vadd.f32 %v2996, %v3223
      %v3225 = vpop.f32.mrb[0].mxu0
      %3226 = vmatprep.mubr.f32.mxu0 0.0
      %3227 = vmatmul.mubr.f32.gmra.mrb[0].mxu0 %v775
      %v3228 = vpop.f32.mrb[0].mxu0
      %v3229 = vadd.f32 %v3001, %v3228
      %v3230 = vpop.f32.mrb[0].mxu0
      %3231 = vmatprep.mubr.f32.mxu0 0.0
      %3232 = vmatmul.mubr.f32.gmra.mrb[0].mxu0 %v777
      %v3233 = vpop.f32.mrb[0].mxu0
      %v3234 = vadd.f32 %v3006, %v3233
      %v3235 = vpop.f32.mrb[0].mxu0
      %3236 = vmatprep.mubr.f32.mxu0 0.0
      %3237 = vmatmul.mubr.f32.gmra.mrb[0].mxu0 %v779
      %v3238 = vpop.f32.mrb[0].mxu0
      %v3239 = vadd.f32 %v3011, %v3238
      %v3240 = vpop.f32.mrb[0].mxu0
      %3241 = vmatprep.mubr.f32.mxu0 0.0
      %3242 = vmatmul.mubr.f32.gmra.mrb[0].mxu0 %v781
      %v3243 = vpop.f32.mrb[0].mxu0
      %v3244 = vadd.f32 %v3016, %v3243
      %v3245 = vpop.f32.mrb[0].mxu0
      %3246 = vmatprep.mubr.f32.mxu0 0.0
      %3247 = vmatmul.mubr.f32.gmra.mrb[0].mxu0 %v783
      %v3248 = vpop.f32.mrb[0].mxu0
      %v3249 = vadd.f32 %v3021, %v3248
      %v3250 = vpop.f32.mrb[0].mxu0
      %3251 = vmatprep.mubr.f32.mxu0 0.0
      %3252 = vmatmul.mubr.f32.gmra.mrb[0].mxu0 %v785
      %v3253 = vpop.f32.mrb[0].mxu0
      %v3254 = vadd.f32 %v3026, %v3253
      %v3255 = vpop.f32.mrb[0].mxu0
      %3256 = vmatprep.mubr.f32.mxu0 0.0
      %3257 = vmatmul.mubr.f32.gmra.mrb[0].mxu0 %v787
      %v3258 = vpop.f32.mrb[0].mxu0
      %v3259 = vadd.f32 %v3031, %v3258
      %v3260 = vpop.f32.mrb[0].mxu0
      %3261 = vmatprep.mubr.f32.mxu0 0.0
      %3262 = vmatmul.mubr.f32.gmra.mrb[0].mxu0 %v789
      %v3263 = vpop.f32.mrb[0].mxu0
      %v3264 = vadd.f32 %v3036, %v3263
      %v3265 = vpop.f32.mrb[0].mxu0
      %3266 = vmatprep.mubr.f32.mxu0 0.0
      %3267 = vmatmul.mubr.f32.gmra.mrb[0].mxu0 %v791
      %v3268 = vpop.f32.mrb[0].mxu0
      %v3269 = vadd.f32 %v3041, %v3268
      %v3270 = vpop.f32.mrb[0].mxu0
      %3271 = vmatprep.mubr.f32.mxu0 0.0
      %3272 = vmatmul.mubr.f32.gmra.mrb[0].mxu0 %v793
      %v3273 = vpop.f32.mrb[0].mxu0
      %v3274 = vadd.f32 %v3046, %v3273
      %v3275 = vpop.f32.mrb[0].mxu0
      %3276 = vmatprep.mubr.f32.mxu0 0.0
      %3277 = vmatmul.mubr.f32.gmra.mrb[0].mxu0 %v795
      %v3278 = vpop.f32.mrb[0].mxu0
      %v3279 = vadd.f32 %v3051, %v3278
      %v3280 = vpop.f32.mrb[0].mxu0
      %3281 = vmatprep.mubr.f32.mxu0 0.0
      %3282 = vmatmul.mubr.f32.gmra.mrb[0].mxu0 %v797
      %v3283 = vpop.f32.mrb[0].mxu0
      %v3284 = vadd.f32 %v3056, %v3283
      %v3285 = vpop.f32.mrb[0].mxu0
      %3286 = vmatprep.mubr.f32.mxu0 0.0
      %3287 = vmatmul.mubr.f32.gmra.mrb[0].mxu0 %v799
      %v3288 = vpop.f32.mrb[0].mxu0
      %v3289 = vadd.f32 %v3061, %v3288
      %v3290 = vpop.f32.mrb[0].mxu0
      %3291 = vmatprep.mubr.f32.mxu0 0.0
      %3292 = vmatmul.mubr.f32.gmra.mrb[0].mxu0 %v1032
      %v3293 = vpop.f32.mrb[0].mxu0
      %v3294 = vadd.f32 %v3066, %v3293
      %v3295 = vpop.f32.mrb[0].mxu0
      %3296 = vmatprep.mubr.f32.mxu0 0.0
      %3297 = vmatmul.mubr.f32.gmra.mrb[0].mxu0 %v1035
      %v3298 = vpop.f32.mrb[0].mxu0
      %v3299 = vadd.f32 %v3071, %v3298
      %v3300 = vpop.f32.mrb[0].mxu0
      %3301 = vdwg.mxu0
      %s3302 = scalar_lea.vmem %s238, 40
      %v3303 = vld [vmem:[%s3302] sm:$0xf]
      %v3305 = vsel %vm443, %v308, 0
      %v3308 = vsel %vm443, %v309, 0
      %v3311 = vsel %vm508, %v3303, 0
      %3313 = vmatprep.subr.mxu0 0.0
      %3314 = vmatpush1.msra.mxu0 %v3311
      %3315 = vmatprep.subr.mxu0 0.0
      %3316 = vmatpush1.msra.mxu0 0.0
      %3317 = vmatprep.subr.mxu0 0.0
      %3318 = vmatpush1.msra.mxu0 0.0
      %3319 = vmatprep.subr.mxu0 0.0
      %3320 = vmatpush1.msra.mxu0 0.0
      %3321 = vmatprep.subr.mxu0 0.0
      %3322 = vmatpush1.msra.mxu0 0.0
      %3323 = vmatprep.subr.mxu0 0.0
      %3324 = vmatpush1.msra.mxu0 0.0
      %3325 = vmatprep.subr.mxu0 0.0
      %3326 = vmatpush1.msra.mxu0 0.0
      %3327 = vmatprep.subr.mxu0 0.0
      %3328 = vmatpush1.msra.mxu0 0.0
      %3329 = vmatprep.subr.mxu0 0.0
      %3330 = vmatpush1.msra.mxu0 0.0
      %3331 = vmatprep.subr.mxu0 0.0
      %3332 = vmatpush1.msra.mxu0 0.0
      %3333 = vmatprep.subr.mxu0 0.0
      %3334 = vmatpush1.msra.mxu0 0.0
      %3335 = vmatprep.subr.mxu0 0.0
      %3336 = vmatpush1.msra.mxu0 0.0
      %3337 = vmatprep.subr.mxu0 0.0
      %3338 = vmatpush1.msra.mxu0 0.0
      %3339 = vmatprep.subr.mxu0 0.0
      %3340 = vmatpush1.msra.mxu0 0.0
      %3341 = vmatprep.subr.mxu0 0.0
      %3342 = vmatpush1.msra.mxu0 0.0
      %3343 = vmatprep.subr.mxu0 0.0
      %3344 = vmatpush1.msra.mxu0 0.0
      %3345 = vmatprep.subr.mxu0 0.0
      %3346 = vmatpush1.msra.mxu0 0.0
      %3347 = vmatprep.subr.mxu0 0.0
      %3348 = vmatpush1.msra.mxu0 0.0
      %3349 = vmatprep.subr.mxu0 0.0
      %3350 = vmatpush1.msra.mxu0 0.0
      %3351 = vmatprep.subr.mxu0 0.0
      %3352 = vmatpush1.msra.mxu0 0.0
      %3353 = vmatprep.subr.mxu0 0.0
      %3354 = vmatpush1.msra.mxu0 0.0
      %3355 = vmatprep.subr.mxu0 0.0
      %3356 = vmatpush1.msra.mxu0 0.0
      %3357 = vmatprep.subr.mxu0 0.0
      %3358 = vmatpush1.msra.mxu0 0.0
      %3359 = vmatprep.subr.mxu0 0.0
      %3360 = vmatpush1.msra.mxu0 0.0
      %3361 = vmatprep.subr.mxu0 0.0
      %3362 = vmatpush1.msra.mxu0 0.0
      %3363 = vmatprep.subr.mxu0 0.0
      %3364 = vmatpush1.msra.mxu0 0.0
      %3365 = vmatprep.subr.mxu0 0.0
      %3366 = vmatpush1.msra.mxu0 0.0
      %3367 = vmatprep.subr.mxu0 0.0
      %3368 = vmatpush1.msra.mxu0 0.0
      %3369 = vmatprep.subr.mxu0 0.0
      %3370 = vmatpush1.msra.mxu0 0.0
      %3371 = vmatprep.subr.mxu0 0.0
      %3372 = vmatpush1.msra.mxu0 0.0
      %3373 = vmatprep.subr.mxu0 0.0
      %3374 = vmatpush1.msra.mxu0 0.0
      %3375 = vmatprep.subr.mxu0 0.0
      %3376 = vmatpush1.msra.mxu0 0.0
      %3377 = vmatprep.mubr.f32.mxu0 0.0
      %3378 = vmatmul.mubr.f32.gmra.mrb[0].mxu0 %v745
      %v3379 = vpop.f32.mrb[0].mxu0
      %v3380 = vadd.f32 0.0, %v3379
      %v3381 = vpop.f32.mrb[0].mxu0
      %3382 = vmatprep.mubr.f32.mxu0 0.0
      %3383 = vmatmul.mubr.f32.gmra.mrb[0].mxu0 %v747
      %v3384 = vpop.f32.mrb[0].mxu0
      %v3385 = vadd.f32 0.0, %v3384
      %v3386 = vpop.f32.mrb[0].mxu0
      %3387 = vmatprep.mubr.f32.mxu0 0.0
      %3388 = vmatmul.mubr.f32.gmra.mrb[0].mxu0 %v749
      %v3389 = vpop.f32.mrb[0].mxu0
      %v3390 = vadd.f32 0.0, %v3389
      %v3391 = vpop.f32.mrb[0].mxu0
      %3392 = vmatprep.mubr.f32.mxu0 0.0
      %3393 = vmatmul.mubr.f32.gmra.mrb[0].mxu0 %v751
      %v3394 = vpop.f32.mrb[0].mxu0
      %v3395 = vadd.f32 0.0, %v3394
      %v3396 = vpop.f32.mrb[0].mxu0
      %3397 = vmatprep.mubr.f32.mxu0 0.0
      %3398 = vmatmul.mubr.f32.gmra.mrb[0].mxu0 %v753
      %v3399 = vpop.f32.mrb[0].mxu0
      %v3400 = vadd.f32 0.0, %v3399
      %v3401 = vpop.f32.mrb[0].mxu0
      %3402 = vmatprep.mubr.f32.mxu0 0.0
      %3403 = vmatmul.mubr.f32.gmra.mrb[0].mxu0 %v755
      %v3404 = vpop.f32.mrb[0].mxu0
      %v3405 = vadd.f32 0.0, %v3404
      %v3406 = vpop.f32.mrb[0].mxu0
      %3407 = vmatprep.mubr.f32.mxu0 0.0
      %3408 = vmatmul.mubr.f32.gmra.mrb[0].mxu0 %v757
      %v3409 = vpop.f32.mrb[0].mxu0
      %v3410 = vadd.f32 0.0, %v3409
      %v3411 = vpop.f32.mrb[0].mxu0
      %3412 = vmatprep.mubr.f32.mxu0 0.0
      %3413 = vmatmul.mubr.f32.gmra.mrb[0].mxu0 %v759
      %v3414 = vpop.f32.mrb[0].mxu0
      %v3415 = vadd.f32 0.0, %v3414
      %v3416 = vpop.f32.mrb[0].mxu0
      %3417 = vmatprep.mubr.f32.mxu0 0.0
      %3418 = vmatmul.mubr.f32.gmra.mrb[0].mxu0 %v761
      %v3419 = vpop.f32.mrb[0].mxu0
      %v3420 = vadd.f32 0.0, %v3419
      %v3421 = vpop.f32.mrb[0].mxu0
      %3422 = vmatprep.mubr.f32.mxu0 0.0
      %3423 = vmatmul.mubr.f32.gmra.mrb[0].mxu0 %v763
      %v3424 = vpop.f32.mrb[0].mxu0
      %v3425 = vadd.f32 0.0, %v3424
      %v3426 = vpop.f32.mrb[0].mxu0
      %3427 = vmatprep.mubr.f32.mxu0 0.0
      %3428 = vmatmul.mubr.f32.gmra.mrb[0].mxu0 %v765
      %v3429 = vpop.f32.mrb[0].mxu0
      %v3430 = vadd.f32 0.0, %v3429
      %v3431 = vpop.f32.mrb[0].mxu0
      %3432 = vmatprep.mubr.f32.mxu0 0.0
      %3433 = vmatmul.mubr.f32.gmra.mrb[0].mxu0 %v767
      %v3434 = vpop.f32.mrb[0].mxu0
      %v3435 = vadd.f32 0.0, %v3434
      %v3436 = vpop.f32.mrb[0].mxu0
      %3437 = vmatprep.mubr.f32.mxu0 0.0
      %3438 = vmatmul.mubr.f32.gmra.mrb[0].mxu0 %v769
      %v3439 = vpop.f32.mrb[0].mxu0
      %v3440 = vadd.f32 0.0, %v3439
      %v3441 = vpop.f32.mrb[0].mxu0
      %3442 = vmatprep.mubr.f32.mxu0 0.0
      %3443 = vmatmul.mubr.f32.gmra.mrb[0].mxu0 %v771
      %v3444 = vpop.f32.mrb[0].mxu0
      %v3445 = vadd.f32 0.0, %v3444
      %v3446 = vpop.f32.mrb[0].mxu0
      %3447 = vmatprep.mubr.f32.mxu0 0.0
      %3448 = vmatmul.mubr.f32.gmra.mrb[0].mxu0 %v773
      %v3449 = vpop.f32.mrb[0].mxu0
      %v3450 = vadd.f32 0.0, %v3449
      %v3451 = vpop.f32.mrb[0].mxu0
      %3452 = vmatprep.mubr.f32.mxu0 0.0
      %3453 = vmatmul.mubr.f32.gmra.mrb[0].mxu0 %v775
      %v3454 = vpop.f32.mrb[0].mxu0
      %v3455 = vadd.f32 0.0, %v3454
      %v3456 = vpop.f32.mrb[0].mxu0
      %3457 = vmatprep.mubr.f32.mxu0 0.0
      %3458 = vmatmul.mubr.f32.gmra.mrb[0].mxu0 %v777
      %v3459 = vpop.f32.mrb[0].mxu0
      %v3460 = vadd.f32 0.0, %v3459
      %v3461 = vpop.f32.mrb[0].mxu0
      %3462 = vmatprep.mubr.f32.mxu0 0.0
      %3463 = vmatmul.mubr.f32.gmra.mrb[0].mxu0 %v779
      %v3464 = vpop.f32.mrb[0].mxu0
      %v3465 = vadd.f32 0.0, %v3464
      %v3466 = vpop.f32.mrb[0].mxu0
      %3467 = vmatprep.mubr.f32.mxu0 0.0
      %3468 = vmatmul.mubr.f32.gmra.mrb[0].mxu0 %v781
      %v3469 = vpop.f32.mrb[0].mxu0
      %v3470 = vadd.f32 0.0, %v3469
      %v3471 = vpop.f32.mrb[0].mxu0
      %3472 = vmatprep.mubr.f32.mxu0 0.0
      %3473 = vmatmul.mubr.f32.gmra.mrb[0].mxu0 %v783
      %v3474 = vpop.f32.mrb[0].mxu0
      %v3475 = vadd.f32 0.0, %v3474
      %v3476 = vpop.f32.mrb[0].mxu0
      %3477 = vmatprep.mubr.f32.mxu0 0.0
      %3478 = vmatmul.mubr.f32.gmra.mrb[0].mxu0 %v785
      %v3479 = vpop.f32.mrb[0].mxu0
      %v3480 = vadd.f32 0.0, %v3479
      %v3481 = vpop.f32.mrb[0].mxu0
      %3482 = vmatprep.mubr.f32.mxu0 0.0
      %3483 = vmatmul.mubr.f32.gmra.mrb[0].mxu0 %v787
      %v3484 = vpop.f32.mrb[0].mxu0
      %v3485 = vadd.f32 0.0, %v3484
      %v3486 = vpop.f32.mrb[0].mxu0
      %3487 = vmatprep.mubr.f32.mxu0 0.0
      %3488 = vmatmul.mubr.f32.gmra.mrb[0].mxu0 %v789
      %v3489 = vpop.f32.mrb[0].mxu0
      %v3490 = vadd.f32 0.0, %v3489
      %v3491 = vpop.f32.mrb[0].mxu0
      %3492 = vmatprep.mubr.f32.mxu0 0.0
      %3493 = vmatmul.mubr.f32.gmra.mrb[0].mxu0 %v791
      %v3494 = vpop.f32.mrb[0].mxu0
      %v3495 = vadd.f32 0.0, %v3494
      %v3496 = vpop.f32.mrb[0].mxu0
      %3497 = vmatprep.mubr.f32.mxu0 0.0
      %3498 = vmatmul.mubr.f32.gmra.mrb[0].mxu0 %v793
      %v3499 = vpop.f32.mrb[0].mxu0
      %v3500 = vadd.f32 0.0, %v3499
      %v3501 = vpop.f32.mrb[0].mxu0
      %3502 = vmatprep.mubr.f32.mxu0 0.0
      %3503 = vmatmul.mubr.f32.gmra.mrb[0].mxu0 %v795
      %v3504 = vpop.f32.mrb[0].mxu0
      %v3505 = vadd.f32 0.0, %v3504
      %v3506 = vpop.f32.mrb[0].mxu0
      %3507 = vmatprep.mubr.f32.mxu0 0.0
      %3508 = vmatmul.mubr.f32.gmra.mrb[0].mxu0 %v797
      %v3509 = vpop.f32.mrb[0].mxu0
      %v3510 = vadd.f32 0.0, %v3509
      %v3511 = vpop.f32.mrb[0].mxu0
      %3512 = vmatprep.mubr.f32.mxu0 0.0
      %3513 = vmatmul.mubr.f32.gmra.mrb[0].mxu0 %v799
      %v3514 = vpop.f32.mrb[0].mxu0
      %v3515 = vadd.f32 0.0, %v3514
      %v3516 = vpop.f32.mrb[0].mxu0
      %3517 = vmatprep.mubr.f32.mxu0 0.0
      %3518 = vmatmul.mubr.f32.gmra.mrb[0].mxu0 %v1032
      %v3519 = vpop.f32.mrb[0].mxu0
      %v3520 = vadd.f32 0.0, %v3519
      %v3521 = vpop.f32.mrb[0].mxu0
      %3522 = vmatprep.mubr.f32.mxu0 0.0
      %3523 = vmatmul.mubr.f32.gmra.mrb[0].mxu0 %v1035
      %v3524 = vpop.f32.mrb[0].mxu0
      %v3525 = vadd.f32 0.0, %v3524
      %v3526 = vpop.f32.mrb[0].mxu0
      %3527 = vmatprep.mubr.f32.mxu0 0.0
      %3528 = vmatmul.mubr.f32.gmra.mrb[0].mxu0 %v3305
      %v3529 = vpop.f32.mrb[0].mxu0
      %v3530 = vadd.f32 0.0, %v3529
      %v3531 = vpop.f32.mrb[0].mxu0
      %3532 = vmatprep.mubr.f32.mxu0 0.0
      %3533 = vmatmul.mubr.f32.gmra.mrb[0].mxu0 %v3308
      %v3534 = vpop.f32.mrb[0].mxu0
      %v3535 = vadd.f32 0.0, %v3534
      %v3536 = vpop.f32.mrb[0].mxu0
      %3537 = vdwg.mxu0
      %v3538 = vadd.f32 %v3144, %v3380
      %v3539 = vadd.f32 %v3149, %v3385
      %v3540 = vadd.f32 %v3154, %v3390
      %v3541 = vadd.f32 %v3159, %v3395
      %v3542 = vadd.f32 %v3164, %v3400
      %v3543 = vadd.f32 %v3169, %v3405
      %v3544 = vadd.f32 %v3174, %v3410
      %v3545 = vadd.f32 %v3179, %v3415
      %v3546 = vadd.f32 %v3184, %v3420
      %v3547 = vadd.f32 %v3189, %v3425
      %v3548 = vadd.f32 %v3194, %v3430
      %v3549 = vadd.f32 %v3199, %v3435
      %v3550 = vadd.f32 %v3204, %v3440
      %v3551 = vadd.f32 %v3209, %v3445
      %v3552 = vadd.f32 %v3214, %v3450
      %v3553 = vadd.f32 %v3219, %v3455
      %v3554 = vadd.f32 %v3224, %v3460
      %v3555 = vadd.f32 %v3229, %v3465
      %v3556 = vadd.f32 %v3234, %v3470
      %v3557 = vadd.f32 %v3239, %v3475
      %v3558 = vadd.f32 %v3244, %v3480
      %v3559 = vadd.f32 %v3249, %v3485
      %v3560 = vadd.f32 %v3254, %v3490
      %v3561 = vadd.f32 %v3259, %v3495
      %v3562 = vadd.f32 %v3264, %v3500
      %v3563 = vadd.f32 %v3269, %v3505
      %v3564 = vadd.f32 %v3274, %v3510
      %v3565 = vadd.f32 %v3279, %v3515
      %v3566 = vadd.f32 %v3284, %v3520
      %v3567 = vadd.f32 %v3289, %v3525
      %v3568 = vadd.f32 %v3294, %v3530
      %v3569 = vadd.f32 %v3299, %v3535
      %s3570 = scalar_lea.vmem %s238, 44
      %v3571 = vld [vmem:[%s3570] sm:$0xf]
      %v3573 = vrot.slane %v308, 1
      %v3574 = vrot.slane %v309, 1
      %v3575 = vsel %vm362, %v3573, %v3574
      %v3576 = vrot.slane %v310, 1
      %v3577 = vsel %vm362, %v3574, %v3576
      %v3578 = vsel %vm443, %v3575, 0
      %v3580 = vsel %vm443, %v3577, 0
      %v3583 = vsel %vm508, %v3571, 0
      %3585 = vmatprep.subr.mxu0 0.0
      %3586 = vmatpush1.msra.mxu0 %v3583
      %3587 = vmatprep.subr.mxu0 0.0
      %3588 = vmatpush1.msra.mxu0 0.0
      %3589 = vmatprep.subr.mxu0 0.0
      %3590 = vmatpush1.msra.mxu0 0.0
      %3591 = vmatprep.subr.mxu0 0.0
      %3592 = vmatpush1.msra.mxu0 0.0
      %3593 = vmatprep.subr.mxu0 0.0
      %3594 = vmatpush1.msra.mxu0 0.0
      %3595 = vmatprep.subr.mxu0 0.0
      %3596 = vmatpush1.msra.mxu0 0.0
      %3597 = vmatprep.subr.mxu0 0.0
      %3598 = vmatpush1.msra.mxu0 0.0
      %3599 = vmatprep.subr.mxu0 0.0
      %3600 = vmatpush1.msra.mxu0 0.0
      %3601 = vmatprep.subr.mxu0 0.0
      %3602 = vmatpush1.msra.mxu0 0.0
      %3603 = vmatprep.subr.mxu0 0.0
      %3604 = vmatpush1.msra.mxu0 0.0
      %3605 = vmatprep.subr.mxu0 0.0
      %3606 = vmatpush1.msra.mxu0 0.0
      %3607 = vmatprep.subr.mxu0 0.0
      %3608 = vmatpush1.msra.mxu0 0.0
      %3609 = vmatprep.subr.mxu0 0.0
      %3610 = vmatpush1.msra.mxu0 0.0
      %3611 = vmatprep.subr.mxu0 0.0
      %3612 = vmatpush1.msra.mxu0 0.0
      %3613 = vmatprep.subr.mxu0 0.0
      %3614 = vmatpush1.msra.mxu0 0.0
      %3615 = vmatprep.subr.mxu0 0.0
      %3616 = vmatpush1.msra.mxu0 0.0
      %3617 = vmatprep.subr.mxu0 0.0
      %3618 = vmatpush1.msra.mxu0 0.0
      %3619 = vmatprep.subr.mxu0 0.0
      %3620 = vmatpush1.msra.mxu0 0.0
      %3621 = vmatprep.subr.mxu0 0.0
      %3622 = vmatpush1.msra.mxu0 0.0
      %3623 = vmatprep.subr.mxu0 0.0
      %3624 = vmatpush1.msra.mxu0 0.0
      %3625 = vmatprep.subr.mxu0 0.0
      %3626 = vmatpush1.msra.mxu0 0.0
      %3627 = vmatprep.subr.mxu0 0.0
      %3628 = vmatpush1.msra.mxu0 0.0
      %3629 = vmatprep.subr.mxu0 0.0
      %3630 = vmatpush1.msra.mxu0 0.0
      %3631 = vmatprep.subr.mxu0 0.0
      %3632 = vmatpush1.msra.mxu0 0.0
      %3633 = vmatprep.subr.mxu0 0.0
      %3634 = vmatpush1.msra.mxu0 0.0
      %3635 = vmatprep.subr.mxu0 0.0
      %3636 = vmatpush1.msra.mxu0 0.0
      %3637 = vmatprep.subr.mxu0 0.0
      %3638 = vmatpush1.msra.mxu0 0.0
      %3639 = vmatprep.subr.mxu0 0.0
      %3640 = vmatpush1.msra.mxu0 0.0
      %3641 = vmatprep.subr.mxu0 0.0
      %3642 = vmatpush1.msra.mxu0 0.0
      %3643 = vmatprep.subr.mxu0 0.0
      %3644 = vmatpush1.msra.mxu0 0.0
      %3645 = vmatprep.subr.mxu0 0.0
      %3646 = vmatpush1.msra.mxu0 0.0
      %3647 = vmatprep.subr.mxu0 0.0
      %3648 = vmatpush1.msra.mxu0 0.0
      %3649 = vmatprep.mubr.f32.mxu0 0.0
      %3650 = vmatmul.mubr.f32.gmra.mrb[0].mxu0 %v452
      %v3651 = vpop.f32.mrb[0].mxu0
      %v3652 = vadd.f32 0.0, %v3651
      %v3653 = vpop.f32.mrb[0].mxu0
      %3654 = vmatprep.mubr.f32.mxu0 0.0
      %3655 = vmatmul.mubr.f32.gmra.mrb[0].mxu0 %v454
      %v3656 = vpop.f32.mrb[0].mxu0
      %v3657 = vadd.f32 0.0, %v3656
      %v3658 = vpop.f32.mrb[0].mxu0
      %3659 = vmatprep.mubr.f32.mxu0 0.0
      %3660 = vmatmul.mubr.f32.gmra.mrb[0].mxu0 %v456
      %v3661 = vpop.f32.mrb[0].mxu0
      %v3662 = vadd.f32 0.0, %v3661
      %v3663 = vpop.f32.mrb[0].mxu0
      %3664 = vmatprep.mubr.f32.mxu0 0.0
      %3665 = vmatmul.mubr.f32.gmra.mrb[0].mxu0 %v458
      %v3666 = vpop.f32.mrb[0].mxu0
      %v3667 = vadd.f32 0.0, %v3666
      %v3668 = vpop.f32.mrb[0].mxu0
      %3669 = vmatprep.mubr.f32.mxu0 0.0
      %3670 = vmatmul.mubr.f32.gmra.mrb[0].mxu0 %v460
      %v3671 = vpop.f32.mrb[0].mxu0
      %v3672 = vadd.f32 0.0, %v3671
      %v3673 = vpop.f32.mrb[0].mxu0
      %3674 = vmatprep.mubr.f32.mxu0 0.0
      %3675 = vmatmul.mubr.f32.gmra.mrb[0].mxu0 %v462
      %v3676 = vpop.f32.mrb[0].mxu0
      %v3677 = vadd.f32 0.0, %v3676
      %v3678 = vpop.f32.mrb[0].mxu0
      %3679 = vmatprep.mubr.f32.mxu0 0.0
      %3680 = vmatmul.mubr.f32.gmra.mrb[0].mxu0 %v464
      %v3681 = vpop.f32.mrb[0].mxu0
      %v3682 = vadd.f32 0.0, %v3681
      %v3683 = vpop.f32.mrb[0].mxu0
      %3684 = vmatprep.mubr.f32.mxu0 0.0
      %3685 = vmatmul.mubr.f32.gmra.mrb[0].mxu0 %v466
      %v3686 = vpop.f32.mrb[0].mxu0
      %v3687 = vadd.f32 0.0, %v3686
      %v3688 = vpop.f32.mrb[0].mxu0
      %3689 = vmatprep.mubr.f32.mxu0 0.0
      %3690 = vmatmul.mubr.f32.gmra.mrb[0].mxu0 %v468
      %v3691 = vpop.f32.mrb[0].mxu0
      %v3692 = vadd.f32 0.0, %v3691
      %v3693 = vpop.f32.mrb[0].mxu0
      %3694 = vmatprep.mubr.f32.mxu0 0.0
      %3695 = vmatmul.mubr.f32.gmra.mrb[0].mxu0 %v470
      %v3696 = vpop.f32.mrb[0].mxu0
      %v3697 = vadd.f32 0.0, %v3696
      %v3698 = vpop.f32.mrb[0].mxu0
      %3699 = vmatprep.mubr.f32.mxu0 0.0
      %3700 = vmatmul.mubr.f32.gmra.mrb[0].mxu0 %v472
      %v3701 = vpop.f32.mrb[0].mxu0
      %v3702 = vadd.f32 0.0, %v3701
      %v3703 = vpop.f32.mrb[0].mxu0
      %3704 = vmatprep.mubr.f32.mxu0 0.0
      %3705 = vmatmul.mubr.f32.gmra.mrb[0].mxu0 %v474
      %v3706 = vpop.f32.mrb[0].mxu0
      %v3707 = vadd.f32 0.0, %v3706
      %v3708 = vpop.f32.mrb[0].mxu0
      %3709 = vmatprep.mubr.f32.mxu0 0.0
      %3710 = vmatmul.mubr.f32.gmra.mrb[0].mxu0 %v476
      %v3711 = vpop.f32.mrb[0].mxu0
      %v3712 = vadd.f32 0.0, %v3711
      %v3713 = vpop.f32.mrb[0].mxu0
      %3714 = vmatprep.mubr.f32.mxu0 0.0
      %3715 = vmatmul.mubr.f32.gmra.mrb[0].mxu0 %v478
      %v3716 = vpop.f32.mrb[0].mxu0
      %v3717 = vadd.f32 0.0, %v3716
      %v3718 = vpop.f32.mrb[0].mxu0
      %3719 = vmatprep.mubr.f32.mxu0 0.0
      %3720 = vmatmul.mubr.f32.gmra.mrb[0].mxu0 %v480
      %v3721 = vpop.f32.mrb[0].mxu0
      %v3722 = vadd.f32 0.0, %v3721
      %v3723 = vpop.f32.mrb[0].mxu0
      %3724 = vmatprep.mubr.f32.mxu0 0.0
      %3725 = vmatmul.mubr.f32.gmra.mrb[0].mxu0 %v482
      %v3726 = vpop.f32.mrb[0].mxu0
      %v3727 = vadd.f32 0.0, %v3726
      %v3728 = vpop.f32.mrb[0].mxu0
      %3729 = vmatprep.mubr.f32.mxu0 0.0
      %3730 = vmatmul.mubr.f32.gmra.mrb[0].mxu0 %v484
      %v3731 = vpop.f32.mrb[0].mxu0
      %v3732 = vadd.f32 0.0, %v3731
      %v3733 = vpop.f32.mrb[0].mxu0
      %3734 = vmatprep.mubr.f32.mxu0 0.0
      %3735 = vmatmul.mubr.f32.gmra.mrb[0].mxu0 %v486
      %v3736 = vpop.f32.mrb[0].mxu0
      %v3737 = vadd.f32 0.0, %v3736
      %v3738 = vpop.f32.mrb[0].mxu0
      %3739 = vmatprep.mubr.f32.mxu0 0.0
      %3740 = vmatmul.mubr.f32.gmra.mrb[0].mxu0 %v488
      %v3741 = vpop.f32.mrb[0].mxu0
      %v3742 = vadd.f32 0.0, %v3741
      %v3743 = vpop.f32.mrb[0].mxu0
      %3744 = vmatprep.mubr.f32.mxu0 0.0
      %3745 = vmatmul.mubr.f32.gmra.mrb[0].mxu0 %v490
      %v3746 = vpop.f32.mrb[0].mxu0
      %v3747 = vadd.f32 0.0, %v3746
      %v3748 = vpop.f32.mrb[0].mxu0
      %3749 = vmatprep.mubr.f32.mxu0 0.0
      %3750 = vmatmul.mubr.f32.gmra.mrb[0].mxu0 %v492
      %v3751 = vpop.f32.mrb[0].mxu0
      %v3752 = vadd.f32 0.0, %v3751
      %v3753 = vpop.f32.mrb[0].mxu0
      %3754 = vmatprep.mubr.f32.mxu0 0.0
      %3755 = vmatmul.mubr.f32.gmra.mrb[0].mxu0 %v494
      %v3756 = vpop.f32.mrb[0].mxu0
      %v3757 = vadd.f32 0.0, %v3756
      %v3758 = vpop.f32.mrb[0].mxu0
      %3759 = vmatprep.mubr.f32.mxu0 0.0
      %3760 = vmatmul.mubr.f32.gmra.mrb[0].mxu0 %v496
      %v3761 = vpop.f32.mrb[0].mxu0
      %v3762 = vadd.f32 0.0, %v3761
      %v3763 = vpop.f32.mrb[0].mxu0
      %3764 = vmatprep.mubr.f32.mxu0 0.0
      %3765 = vmatmul.mubr.f32.gmra.mrb[0].mxu0 %v498
      %v3766 = vpop.f32.mrb[0].mxu0
      %v3767 = vadd.f32 0.0, %v3766
      %v3768 = vpop.f32.mrb[0].mxu0
      %3769 = vmatprep.mubr.f32.mxu0 0.0
      %3770 = vmatmul.mubr.f32.gmra.mrb[0].mxu0 %v500
      %v3771 = vpop.f32.mrb[0].mxu0
      %v3772 = vadd.f32 0.0, %v3771
      %v3773 = vpop.f32.mrb[0].mxu0
      %3774 = vmatprep.mubr.f32.mxu0 0.0
      %3775 = vmatmul.mubr.f32.gmra.mrb[0].mxu0 %v502
      %v3776 = vpop.f32.mrb[0].mxu0
      %v3777 = vadd.f32 0.0, %v3776
      %v3778 = vpop.f32.mrb[0].mxu0
      %3779 = vmatprep.mubr.f32.mxu0 0.0
      %3780 = vmatmul.mubr.f32.gmra.mrb[0].mxu0 %v504
      %v3781 = vpop.f32.mrb[0].mxu0
      %v3782 = vadd.f32 0.0, %v3781
      %v3783 = vpop.f32.mrb[0].mxu0
      %3784 = vmatprep.mubr.f32.mxu0 0.0
      %3785 = vmatmul.mubr.f32.gmra.mrb[0].mxu0 %v506
      %v3786 = vpop.f32.mrb[0].mxu0
      %v3787 = vadd.f32 0.0, %v3786
      %v3788 = vpop.f32.mrb[0].mxu0
      %3789 = vmatprep.mubr.f32.mxu0 0.0
      %3790 = vmatmul.mubr.f32.gmra.mrb[0].mxu0 %v1305
      %v3791 = vpop.f32.mrb[0].mxu0
      %v3792 = vadd.f32 0.0, %v3791
      %v3793 = vpop.f32.mrb[0].mxu0
      %3794 = vmatprep.mubr.f32.mxu0 0.0
      %3795 = vmatmul.mubr.f32.gmra.mrb[0].mxu0 %v1307
      %v3796 = vpop.f32.mrb[0].mxu0
      %v3797 = vadd.f32 0.0, %v3796
      %v3798 = vpop.f32.mrb[0].mxu0
      %3799 = vmatprep.mubr.f32.mxu0 0.0
      %3800 = vmatmul.mubr.f32.gmra.mrb[0].mxu0 %v3578
      %v3801 = vpop.f32.mrb[0].mxu0
      %v3802 = vadd.f32 0.0, %v3801
      %v3803 = vpop.f32.mrb[0].mxu0
      %3804 = vmatprep.mubr.f32.mxu0 0.0
      %3805 = vmatmul.mubr.f32.gmra.mrb[0].mxu0 %v3580
      %v3806 = vpop.f32.mrb[0].mxu0
      %v3807 = vadd.f32 0.0, %v3806
      %v3808 = vpop.f32.mrb[0].mxu0
      %3809 = vdwg.mxu0
      %v3810 = vadd.f32 %v3538, %v3652
      %v3811 = vadd.f32 %v3539, %v3657
      %v3812 = vadd.f32 %v3540, %v3662
      %v3813 = vadd.f32 %v3541, %v3667
      %v3814 = vadd.f32 %v3542, %v3672
      %v3815 = vadd.f32 %v3543, %v3677
      %v3816 = vadd.f32 %v3544, %v3682
      %v3817 = vadd.f32 %v3545, %v3687
      %v3818 = vadd.f32 %v3546, %v3692
      %v3819 = vadd.f32 %v3547, %v3697
      %v3820 = vadd.f32 %v3548, %v3702
      %v3821 = vadd.f32 %v3549, %v3707
      %v3822 = vadd.f32 %v3550, %v3712
      %v3823 = vadd.f32 %v3551, %v3717
      %v3824 = vadd.f32 %v3552, %v3722
      %v3825 = vadd.f32 %v3553, %v3727
      %v3826 = vadd.f32 %v3554, %v3732
      %v3827 = vadd.f32 %v3555, %v3737
      %v3828 = vadd.f32 %v3556, %v3742
      %v3829 = vadd.f32 %v3557, %v3747
      %v3830 = vadd.f32 %v3558, %v3752
      %v3831 = vadd.f32 %v3559, %v3757
      %v3832 = vadd.f32 %v3560, %v3762
      %v3833 = vadd.f32 %v3561, %v3767
      %v3834 = vadd.f32 %v3562, %v3772
      %v3835 = vadd.f32 %v3563, %v3777
      %v3836 = vadd.f32 %v3564, %v3782
      %v3837 = vadd.f32 %v3565, %v3787
      %v3838 = vadd.f32 %v3566, %v3792
      %v3839 = vadd.f32 %v3567, %v3797
      %v3840 = vadd.f32 %v3568, %v3802
      %v3841 = vadd.f32 %v3569, %v3807
      %v3842 = vadd.f32 %v3810, %v1573
      %v3843 = vadd.f32 %v3811, %v1573
      %v3844 = vadd.f32 %v3812, %v1573
      %v3845 = vadd.f32 %v3813, %v1573
      %v3846 = vadd.f32 %v3814, %v1573
      %v3847 = vadd.f32 %v3815, %v1573
      %v3848 = vadd.f32 %v3816, %v1573
      %v3849 = vadd.f32 %v3817, %v1573
      %v3850 = vadd.f32 %v3818, %v1573
      %v3851 = vadd.f32 %v3819, %v1573
      %v3852 = vadd.f32 %v3820, %v1573
      %v3853 = vadd.f32 %v3821, %v1573
      %v3854 = vadd.f32 %v3822, %v1573
      %v3855 = vadd.f32 %v3823, %v1573
      %v3856 = vadd.f32 %v3824, %v1573
      %v3857 = vadd.f32 %v3825, %v1573
      %v3858 = vadd.f32 %v3826, %v1573
      %v3859 = vadd.f32 %v3827, %v1573
      %v3860 = vadd.f32 %v3828, %v1573
      %v3861 = vadd.f32 %v3829, %v1573
      %v3862 = vadd.f32 %v3830, %v1573
      %v3863 = vadd.f32 %v3831, %v1573
      %v3864 = vadd.f32 %v3832, %v1573
      %v3865 = vadd.f32 %v3833, %v1573
      %v3866 = vadd.f32 %v3834, %v1573
      %v3867 = vadd.f32 %v3835, %v1573
      %v3868 = vadd.f32 %v3836, %v1573
      %v3869 = vadd.f32 %v3837, %v1573
      %v3870 = vadd.f32 %v3838, %v1573
      %v3871 = vadd.f32 %v3839, %v1573
      %v3872 = vadd.f32 %v3840, %v1573
      %v3873 = vadd.f32 %v3841, %v1573
      %s3874 = scalar_lea.vmem %s254, 512
      %3875 = vst.msk [vmem:[%s3874] sm:$0xff] %vm443, %v3842
      %3876 = vst.msk [vmem:[%s3874 + $0x8] sm:$0xff] %vm443, %v3843
      %3877 = vst.msk [vmem:[%s3874 + $0x10] sm:$0xff] %vm443, %v3844
      %3878 = vst.msk [vmem:[%s3874 + $0x18] sm:$0xff] %vm443, %v3845
      %3879 = vst.msk [vmem:[%s3874 + $0x20] sm:$0xff] %vm443, %v3846
      %3880 = vst.msk [vmem:[%s3874 + $0x28] sm:$0xff] %vm443, %v3847
      %3881 = vst.msk [vmem:[%s3874 + $0x30] sm:$0xff] %vm443, %v3848
      %3882 = vst.msk [vmem:[%s3874 + $0x38] sm:$0xff] %vm443, %v3849
      %3883 = vst.msk [vmem:[%s3874 + $0x40] sm:$0xff] %vm443, %v3850
      %3884 = vst.msk [vmem:[%s3874 + $0x48] sm:$0xff] %vm443, %v3851
      %3885 = vst.msk [vmem:[%s3874 + $0x50] sm:$0xff] %vm443, %v3852
      %3886 = vst.msk [vmem:[%s3874 + $0x58] sm:$0xff] %vm443, %v3853
      %3887 = vst.msk [vmem:[%s3874 + $0x60] sm:$0xff] %vm443, %v3854
      %3888 = vst.msk [vmem:[%s3874 + $0x68] sm:$0xff] %vm443, %v3855
      %3889 = vst.msk [vmem:[%s3874 + $0x70] sm:$0xff] %vm443, %v3856
      %3890 = vst.msk [vmem:[%s3874 + $0x78] sm:$0xff] %vm443, %v3857
      %3891 = vst.msk [vmem:[%s3874 + $0x80] sm:$0xff] %vm443, %v3858
      %3892 = vst.msk [vmem:[%s3874 + $0x88] sm:$0xff] %vm443, %v3859
      %3893 = vst.msk [vmem:[%s3874 + $0x90] sm:$0xff] %vm443, %v3860
      %3894 = vst.msk [vmem:[%s3874 + $0x98] sm:$0xff] %vm443, %v3861
      %3895 = vst.msk [vmem:[%s3874 + $0xa0] sm:$0xff] %vm443, %v3862
      %3896 = vst.msk [vmem:[%s3874 + $0xa8] sm:$0xff] %vm443, %v3863
      %3897 = vst.msk [vmem:[%s3874 + $0xb0] sm:$0xff] %vm443, %v3864
      %3898 = vst.msk [vmem:[%s3874 + $0xb8] sm:$0xff] %vm443, %v3865
      %3899 = vst.msk [vmem:[%s3874 + $0xc0] sm:$0xff] %vm443, %v3866
      %3900 = vst.msk [vmem:[%s3874 + $0xc8] sm:$0xff] %vm443, %v3867
      %3901 = vst.msk [vmem:[%s3874 + $0xd0] sm:$0xff] %vm443, %v3868
      %3902 = vst.msk [vmem:[%s3874 + $0xd8] sm:$0xff] %vm443, %v3869
      %3903 = vst.msk [vmem:[%s3874 + $0xe0] sm:$0xff] %vm443, %v3870
      %3904 = vst.msk [vmem:[%s3874 + $0xe8] sm:$0xff] %vm443, %v3871
      %3905 = vst.msk [vmem:[%s3874 + $0xf0] sm:$0xff] %vm443, %v3872
      %3906 = vst.msk [vmem:[%s3874 + $0xf8] sm:$0xff] %vm443, %v3873
      %s3907 = scalar_lea.vmem %s238, 48
      %v3908 = vld [vmem:[%s3907] sm:$0xf]
      %s3909 = scalar_lea.vmem %s238, 52
      %v3910 = vld [vmem:[%s3909] sm:$0xf]
      %v3912 = vsel %vm508, %v3910, 0
      %3914 = vmatprep.subr.mxu0 0.0
      %3915 = vmatpush1.msra.mxu0 %v3912
      %3916 = vmatprep.subr.mxu0 0.0
      %3917 = vmatpush1.msra.mxu0 0.0
      %3918 = vmatprep.subr.mxu0 0.0
      %3919 = vmatpush1.msra.mxu0 0.0
      %3920 = vmatprep.subr.mxu0 0.0
      %3921 = vmatpush1.msra.mxu0 0.0
      %3922 = vmatprep.subr.mxu0 0.0
      %3923 = vmatpush1.msra.mxu0 0.0
      %3924 = vmatprep.subr.mxu0 0.0
      %3925 = vmatpush1.msra.mxu0 0.0
      %3926 = vmatprep.subr.mxu0 0.0
      %3927 = vmatpush1.msra.mxu0 0.0
      %3928 = vmatprep.subr.mxu0 0.0
      %3929 = vmatpush1.msra.mxu0 0.0
      %3930 = vmatprep.subr.mxu0 0.0
      %3931 = vmatpush1.msra.mxu0 0.0
      %3932 = vmatprep.subr.mxu0 0.0
      %3933 = vmatpush1.msra.mxu0 0.0
      %3934 = vmatprep.subr.mxu0 0.0
      %3935 = vmatpush1.msra.mxu0 0.0
      %3936 = vmatprep.subr.mxu0 0.0
      %3937 = vmatpush1.msra.mxu0 0.0
      %3938 = vmatprep.subr.mxu0 0.0
      %3939 = vmatpush1.msra.mxu0 0.0
      %3940 = vmatprep.subr.mxu0 0.0
      %3941 = vmatpush1.msra.mxu0 0.0
      %3942 = vmatprep.subr.mxu0 0.0
      %3943 = vmatpush1.msra.mxu0 0.0
      %3944 = vmatprep.subr.mxu0 0.0
      %3945 = vmatpush1.msra.mxu0 0.0
      %3946 = vmatprep.subr.mxu0 0.0
      %3947 = vmatpush1.msra.mxu0 0.0
      %3948 = vmatprep.subr.mxu0 0.0
      %3949 = vmatpush1.msra.mxu0 0.0
      %3950 = vmatprep.subr.mxu0 0.0
      %3951 = vmatpush1.msra.mxu0 0.0
      %3952 = vmatprep.subr.mxu0 0.0
      %3953 = vmatpush1.msra.mxu0 0.0
      %3954 = vmatprep.subr.mxu0 0.0
      %3955 = vmatpush1.msra.mxu0 0.0
      %3956 = vmatprep.subr.mxu0 0.0
      %3957 = vmatpush1.msra.mxu0 0.0
      %3958 = vmatprep.subr.mxu0 0.0
      %3959 = vmatpush1.msra.mxu0 0.0
      %3960 = vmatprep.subr.mxu0 0.0
      %3961 = vmatpush1.msra.mxu0 0.0
      %3962 = vmatprep.subr.mxu0 0.0
      %3963 = vmatpush1.msra.mxu0 0.0
      %3964 = vmatprep.subr.mxu0 0.0
      %3965 = vmatpush1.msra.mxu0 0.0
      %3966 = vmatprep.subr.mxu0 0.0
      %3967 = vmatpush1.msra.mxu0 0.0
      %3968 = vmatprep.subr.mxu0 0.0
      %3969 = vmatpush1.msra.mxu0 0.0
      %3970 = vmatprep.subr.mxu0 0.0
      %3971 = vmatpush1.msra.mxu0 0.0
      %3972 = vmatprep.subr.mxu0 0.0
      %3973 = vmatpush1.msra.mxu0 0.0
      %3974 = vmatprep.subr.mxu0 0.0
      %3975 = vmatpush1.msra.mxu0 0.0
      %3976 = vmatprep.subr.mxu0 0.0
      %3977 = vmatpush1.msra.mxu0 0.0
      %3978 = vmatprep.mubr.f32.mxu0 0.0
      %3979 = vmatmul.mubr.f32.gmra.mrb[0].mxu0 %v1728
      %v3980 = vpop.f32.mrb[0].mxu0
      %v3981 = vadd.f32 0.0, %v3980
      %v3982 = vpop.f32.mrb[0].mxu0
      %3983 = vmatprep.mubr.f32.mxu0 0.0
      %3984 = vmatmul.mubr.f32.gmra.mrb[0].mxu0 %v1730
      %v3985 = vpop.f32.mrb[0].mxu0
      %v3986 = vadd.f32 0.0, %v3985
      %v3987 = vpop.f32.mrb[0].mxu0
      %3988 = vmatprep.mubr.f32.mxu0 0.0
      %3989 = vmatmul.mubr.f32.gmra.mrb[0].mxu0 %v1732
      %v3990 = vpop.f32.mrb[0].mxu0
      %v3991 = vadd.f32 0.0, %v3990
      %v3992 = vpop.f32.mrb[0].mxu0
      %3993 = vmatprep.mubr.f32.mxu0 0.0
      %3994 = vmatmul.mubr.f32.gmra.mrb[0].mxu0 %v1734
      %v3995 = vpop.f32.mrb[0].mxu0
      %v3996 = vadd.f32 0.0, %v3995
      %v3997 = vpop.f32.mrb[0].mxu0
      %3998 = vmatprep.mubr.f32.mxu0 0.0
      %3999 = vmatmul.mubr.f32.gmra.mrb[0].mxu0 %v1736
      %v4000 = vpop.f32.mrb[0].mxu0
      %v4001 = vadd.f32 0.0, %v4000
      %v4002 = vpop.f32.mrb[0].mxu0
      %4003 = vmatprep.mubr.f32.mxu0 0.0
      %4004 = vmatmul.mubr.f32.gmra.mrb[0].mxu0 %v1738
      %v4005 = vpop.f32.mrb[0].mxu0
      %v4006 = vadd.f32 0.0, %v4005
      %v4007 = vpop.f32.mrb[0].mxu0
      %4008 = vmatprep.mubr.f32.mxu0 0.0
      %4009 = vmatmul.mubr.f32.gmra.mrb[0].mxu0 %v1740
      %v4010 = vpop.f32.mrb[0].mxu0
      %v4011 = vadd.f32 0.0, %v4010
      %v4012 = vpop.f32.mrb[0].mxu0
      %4013 = vmatprep.mubr.f32.mxu0 0.0
      %4014 = vmatmul.mubr.f32.gmra.mrb[0].mxu0 %v1742
      %v4015 = vpop.f32.mrb[0].mxu0
      %v4016 = vadd.f32 0.0, %v4015
      %v4017 = vpop.f32.mrb[0].mxu0
      %4018 = vmatprep.mubr.f32.mxu0 0.0
      %4019 = vmatmul.mubr.f32.gmra.mrb[0].mxu0 %v1744
      %v4020 = vpop.f32.mrb[0].mxu0
      %v4021 = vadd.f32 0.0, %v4020
      %v4022 = vpop.f32.mrb[0].mxu0
      %4023 = vmatprep.mubr.f32.mxu0 0.0
      %4024 = vmatmul.mubr.f32.gmra.mrb[0].mxu0 %v1746
      %v4025 = vpop.f32.mrb[0].mxu0
      %v4026 = vadd.f32 0.0, %v4025
      %v4027 = vpop.f32.mrb[0].mxu0
      %4028 = vmatprep.mubr.f32.mxu0 0.0
      %4029 = vmatmul.mubr.f32.gmra.mrb[0].mxu0 %v1748
      %v4030 = vpop.f32.mrb[0].mxu0
      %v4031 = vadd.f32 0.0, %v4030
      %v4032 = vpop.f32.mrb[0].mxu0
      %4033 = vmatprep.mubr.f32.mxu0 0.0
      %4034 = vmatmul.mubr.f32.gmra.mrb[0].mxu0 %v1750
      %v4035 = vpop.f32.mrb[0].mxu0
      %v4036 = vadd.f32 0.0, %v4035
      %v4037 = vpop.f32.mrb[0].mxu0
      %4038 = vmatprep.mubr.f32.mxu0 0.0
      %4039 = vmatmul.mubr.f32.gmra.mrb[0].mxu0 %v1752
      %v4040 = vpop.f32.mrb[0].mxu0
      %v4041 = vadd.f32 0.0, %v4040
      %v4042 = vpop.f32.mrb[0].mxu0
      %4043 = vmatprep.mubr.f32.mxu0 0.0
      %4044 = vmatmul.mubr.f32.gmra.mrb[0].mxu0 %v1754
      %v4045 = vpop.f32.mrb[0].mxu0
      %v4046 = vadd.f32 0.0, %v4045
      %v4047 = vpop.f32.mrb[0].mxu0
      %4048 = vmatprep.mubr.f32.mxu0 0.0
      %4049 = vmatmul.mubr.f32.gmra.mrb[0].mxu0 %v1756
      %v4050 = vpop.f32.mrb[0].mxu0
      %v4051 = vadd.f32 0.0, %v4050
      %v4052 = vpop.f32.mrb[0].mxu0
      %4053 = vmatprep.mubr.f32.mxu0 0.0
      %4054 = vmatmul.mubr.f32.gmra.mrb[0].mxu0 %v1758
      %v4055 = vpop.f32.mrb[0].mxu0
      %v4056 = vadd.f32 0.0, %v4055
      %v4057 = vpop.f32.mrb[0].mxu0
      %4058 = vmatprep.mubr.f32.mxu0 0.0
      %4059 = vmatmul.mubr.f32.gmra.mrb[0].mxu0 %v1760
      %v4060 = vpop.f32.mrb[0].mxu0
      %v4061 = vadd.f32 0.0, %v4060
      %v4062 = vpop.f32.mrb[0].mxu0
      %4063 = vmatprep.mubr.f32.mxu0 0.0
      %4064 = vmatmul.mubr.f32.gmra.mrb[0].mxu0 %v1762
      %v4065 = vpop.f32.mrb[0].mxu0
      %v4066 = vadd.f32 0.0, %v4065
      %v4067 = vpop.f32.mrb[0].mxu0
      %4068 = vmatprep.mubr.f32.mxu0 0.0
      %4069 = vmatmul.mubr.f32.gmra.mrb[0].mxu0 %v1764
      %v4070 = vpop.f32.mrb[0].mxu0
      %v4071 = vadd.f32 0.0, %v4070
      %v4072 = vpop.f32.mrb[0].mxu0
      %4073 = vmatprep.mubr.f32.mxu0 0.0
      %4074 = vmatmul.mubr.f32.gmra.mrb[0].mxu0 %v1766
      %v4075 = vpop.f32.mrb[0].mxu0
      %v4076 = vadd.f32 0.0, %v4075
      %v4077 = vpop.f32.mrb[0].mxu0
      %4078 = vmatprep.mubr.f32.mxu0 0.0
      %4079 = vmatmul.mubr.f32.gmra.mrb[0].mxu0 %v1768
      %v4080 = vpop.f32.mrb[0].mxu0
      %v4081 = vadd.f32 0.0, %v4080
      %v4082 = vpop.f32.mrb[0].mxu0
      %4083 = vmatprep.mubr.f32.mxu0 0.0
      %4084 = vmatmul.mubr.f32.gmra.mrb[0].mxu0 %v1770
      %v4085 = vpop.f32.mrb[0].mxu0
      %v4086 = vadd.f32 0.0, %v4085
      %v4087 = vpop.f32.mrb[0].mxu0
      %4088 = vmatprep.mubr.f32.mxu0 0.0
      %4089 = vmatmul.mubr.f32.gmra.mrb[0].mxu0 %v1772
      %v4090 = vpop.f32.mrb[0].mxu0
      %v4091 = vadd.f32 0.0, %v4090
      %v4092 = vpop.f32.mrb[0].mxu0
      %4093 = vmatprep.mubr.f32.mxu0 0.0
      %4094 = vmatmul.mubr.f32.gmra.mrb[0].mxu0 %v1774
      %v4095 = vpop.f32.mrb[0].mxu0
      %v4096 = vadd.f32 0.0, %v4095
      %v4097 = vpop.f32.mrb[0].mxu0
      %4098 = vmatprep.mubr.f32.mxu0 0.0
      %4099 = vmatmul.mubr.f32.gmra.mrb[0].mxu0 %v1776
      %v4100 = vpop.f32.mrb[0].mxu0
      %v4101 = vadd.f32 0.0, %v4100
      %v4102 = vpop.f32.mrb[0].mxu0
      %4103 = vmatprep.mubr.f32.mxu0 0.0
      %4104 = vmatmul.mubr.f32.gmra.mrb[0].mxu0 %v1778
      %v4105 = vpop.f32.mrb[0].mxu0
      %v4106 = vadd.f32 0.0, %v4105
      %v4107 = vpop.f32.mrb[0].mxu0
      %4108 = vmatprep.mubr.f32.mxu0 0.0
      %4109 = vmatmul.mubr.f32.gmra.mrb[0].mxu0 %v1780
      %v4110 = vpop.f32.mrb[0].mxu0
      %v4111 = vadd.f32 0.0, %v4110
      %v4112 = vpop.f32.mrb[0].mxu0
      %4113 = vmatprep.mubr.f32.mxu0 0.0
      %4114 = vmatmul.mubr.f32.gmra.mrb[0].mxu0 %v1782
      %v4115 = vpop.f32.mrb[0].mxu0
      %v4116 = vadd.f32 0.0, %v4115
      %v4117 = vpop.f32.mrb[0].mxu0
      %4118 = vmatprep.mubr.f32.mxu0 0.0
      %4119 = vmatmul.mubr.f32.gmra.mrb[0].mxu0 %v1784
      %v4120 = vpop.f32.mrb[0].mxu0
      %v4121 = vadd.f32 0.0, %v4120
      %v4122 = vpop.f32.mrb[0].mxu0
      %4123 = vmatprep.mubr.f32.mxu0 0.0
      %4124 = vmatmul.mubr.f32.gmra.mrb[0].mxu0 %v1786
      %v4125 = vpop.f32.mrb[0].mxu0
      %v4126 = vadd.f32 0.0, %v4125
      %v4127 = vpop.f32.mrb[0].mxu0
      %4128 = vmatprep.mubr.f32.mxu0 0.0
      %4129 = vmatmul.mubr.f32.gmra.mrb[0].mxu0 %v2513
      %v4130 = vpop.f32.mrb[0].mxu0
      %v4131 = vadd.f32 0.0, %v4130
      %v4132 = vpop.f32.mrb[0].mxu0
      %4133 = vmatprep.mubr.f32.mxu0 0.0
      %4134 = vmatmul.mubr.f32.gmra.mrb[0].mxu0 %v2515
      %v4135 = vpop.f32.mrb[0].mxu0
      %v4136 = vadd.f32 0.0, %v4135
      %v4137 = vpop.f32.mrb[0].mxu0
      %4138 = vdwg.mxu0
      %v4140 = vsel %vm508, %v3908, 0
      %4142 = vmatprep.subr.mxu0 0.0
      %4143 = vmatpush1.msra.mxu0 %v4140
      %4144 = vmatprep.subr.mxu0 0.0
      %4145 = vmatpush1.msra.mxu0 0.0
      %4146 = vmatprep.subr.mxu0 0.0
      %4147 = vmatpush1.msra.mxu0 0.0
      %4148 = vmatprep.subr.mxu0 0.0
      %4149 = vmatpush1.msra.mxu0 0.0
      %4150 = vmatprep.subr.mxu0 0.0
      %4151 = vmatpush1.msra.mxu0 0.0
      %4152 = vmatprep.subr.mxu0 0.0
      %4153 = vmatpush1.msra.mxu0 0.0
      %4154 = vmatprep.subr.mxu0 0.0
      %4155 = vmatpush1.msra.mxu0 0.0
      %4156 = vmatprep.subr.mxu0 0.0
      %4157 = vmatpush1.msra.mxu0 0.0
      %4158 = vmatprep.subr.mxu0 0.0
      %4159 = vmatpush1.msra.mxu0 0.0
      %4160 = vmatprep.subr.mxu0 0.0
      %4161 = vmatpush1.msra.mxu0 0.0
      %4162 = vmatprep.subr.mxu0 0.0
      %4163 = vmatpush1.msra.mxu0 0.0
      %4164 = vmatprep.subr.mxu0 0.0
      %4165 = vmatpush1.msra.mxu0 0.0
      %4166 = vmatprep.subr.mxu0 0.0
      %4167 = vmatpush1.msra.mxu0 0.0
      %4168 = vmatprep.subr.mxu0 0.0
      %4169 = vmatpush1.msra.mxu0 0.0
      %4170 = vmatprep.subr.mxu0 0.0
      %4171 = vmatpush1.msra.mxu0 0.0
      %4172 = vmatprep.subr.mxu0 0.0
      %4173 = vmatpush1.msra.mxu0 0.0
      %4174 = vmatprep.subr.mxu0 0.0
      %4175 = vmatpush1.msra.mxu0 0.0
      %4176 = vmatprep.subr.mxu0 0.0
      %4177 = vmatpush1.msra.mxu0 0.0
      %4178 = vmatprep.subr.mxu0 0.0
      %4179 = vmatpush1.msra.mxu0 0.0
      %4180 = vmatprep.subr.mxu0 0.0
      %4181 = vmatpush1.msra.mxu0 0.0
      %4182 = vmatprep.subr.mxu0 0.0
      %4183 = vmatpush1.msra.mxu0 0.0
      %4184 = vmatprep.subr.mxu0 0.0
      %4185 = vmatpush1.msra.mxu0 0.0
      %4186 = vmatprep.subr.mxu0 0.0
      %4187 = vmatpush1.msra.mxu0 0.0
      %4188 = vmatprep.subr.mxu0 0.0
      %4189 = vmatpush1.msra.mxu0 0.0
      %4190 = vmatprep.subr.mxu0 0.0
      %4191 = vmatpush1.msra.mxu0 0.0
      %4192 = vmatprep.subr.mxu0 0.0
      %4193 = vmatpush1.msra.mxu0 0.0
      %4194 = vmatprep.subr.mxu0 0.0
      %4195 = vmatpush1.msra.mxu0 0.0
      %4196 = vmatprep.subr.mxu0 0.0
      %4197 = vmatpush1.msra.mxu0 0.0
      %4198 = vmatprep.subr.mxu0 0.0
      %4199 = vmatpush1.msra.mxu0 0.0
      %4200 = vmatprep.subr.mxu0 0.0
      %4201 = vmatpush1.msra.mxu0 0.0
      %4202 = vmatprep.subr.mxu0 0.0
      %4203 = vmatpush1.msra.mxu0 0.0
      %4204 = vmatprep.subr.mxu0 0.0
      %4205 = vmatpush1.msra.mxu0 0.0
      %4206 = vmatprep.mubr.f32.mxu0 0.0
      %4207 = vmatmul.mubr.f32.gmra.mrb[0].mxu0 %v448
      %v4208 = vpop.f32.mrb[0].mxu0
      %v4209 = vadd.f32 %v3981, %v4208
      %v4210 = vpop.f32.mrb[0].mxu0
      %4211 = vmatprep.mubr.f32.mxu0 0.0
      %4212 = vmatmul.mubr.f32.gmra.mrb[0].mxu0 %v450
      %v4213 = vpop.f32.mrb[0].mxu0
      %v4214 = vadd.f32 %v3986, %v4213
      %v4215 = vpop.f32.mrb[0].mxu0
      %4216 = vmatprep.mubr.f32.mxu0 0.0
      %4217 = vmatmul.mubr.f32.gmra.mrb[0].mxu0 %v452
      %v4218 = vpop.f32.mrb[0].mxu0
      %v4219 = vadd.f32 %v3991, %v4218
      %v4220 = vpop.f32.mrb[0].mxu0
      %4221 = vmatprep.mubr.f32.mxu0 0.0
      %4222 = vmatmul.mubr.f32.gmra.mrb[0].mxu0 %v454
      %v4223 = vpop.f32.mrb[0].mxu0
      %v4224 = vadd.f32 %v3996, %v4223
      %v4225 = vpop.f32.mrb[0].mxu0
      %4226 = vmatprep.mubr.f32.mxu0 0.0
      %4227 = vmatmul.mubr.f32.gmra.mrb[0].mxu0 %v456
      %v4228 = vpop.f32.mrb[0].mxu0
      %v4229 = vadd.f32 %v4001, %v4228
      %v4230 = vpop.f32.mrb[0].mxu0
      %4231 = vmatprep.mubr.f32.mxu0 0.0
      %4232 = vmatmul.mubr.f32.gmra.mrb[0].mxu0 %v458
      %v4233 = vpop.f32.mrb[0].mxu0
      %v4234 = vadd.f32 %v4006, %v4233
      %v4235 = vpop.f32.mrb[0].mxu0
      %4236 = vmatprep.mubr.f32.mxu0 0.0
      %4237 = vmatmul.mubr.f32.gmra.mrb[0].mxu0 %v460
      %v4238 = vpop.f32.mrb[0].mxu0
      %v4239 = vadd.f32 %v4011, %v4238
      %v4240 = vpop.f32.mrb[0].mxu0
      %4241 = vmatprep.mubr.f32.mxu0 0.0
      %4242 = vmatmul.mubr.f32.gmra.mrb[0].mxu0 %v462
      %v4243 = vpop.f32.mrb[0].mxu0
      %v4244 = vadd.f32 %v4016, %v4243
      %v4245 = vpop.f32.mrb[0].mxu0
      %4246 = vmatprep.mubr.f32.mxu0 0.0
      %4247 = vmatmul.mubr.f32.gmra.mrb[0].mxu0 %v464
      %v4248 = vpop.f32.mrb[0].mxu0
      %v4249 = vadd.f32 %v4021, %v4248
      %v4250 = vpop.f32.mrb[0].mxu0
      %4251 = vmatprep.mubr.f32.mxu0 0.0
      %4252 = vmatmul.mubr.f32.gmra.mrb[0].mxu0 %v466
      %v4253 = vpop.f32.mrb[0].mxu0
      %v4254 = vadd.f32 %v4026, %v4253
      %v4255 = vpop.f32.mrb[0].mxu0
      %4256 = vmatprep.mubr.f32.mxu0 0.0
      %4257 = vmatmul.mubr.f32.gmra.mrb[0].mxu0 %v468
      %v4258 = vpop.f32.mrb[0].mxu0
      %v4259 = vadd.f32 %v4031, %v4258
      %v4260 = vpop.f32.mrb[0].mxu0
      %4261 = vmatprep.mubr.f32.mxu0 0.0
      %4262 = vmatmul.mubr.f32.gmra.mrb[0].mxu0 %v470
      %v4263 = vpop.f32.mrb[0].mxu0
      %v4264 = vadd.f32 %v4036, %v4263
      %v4265 = vpop.f32.mrb[0].mxu0
      %4266 = vmatprep.mubr.f32.mxu0 0.0
      %4267 = vmatmul.mubr.f32.gmra.mrb[0].mxu0 %v472
      %v4268 = vpop.f32.mrb[0].mxu0
      %v4269 = vadd.f32 %v4041, %v4268
      %v4270 = vpop.f32.mrb[0].mxu0
      %4271 = vmatprep.mubr.f32.mxu0 0.0
      %4272 = vmatmul.mubr.f32.gmra.mrb[0].mxu0 %v474
      %v4273 = vpop.f32.mrb[0].mxu0
      %v4274 = vadd.f32 %v4046, %v4273
      %v4275 = vpop.f32.mrb[0].mxu0
      %4276 = vmatprep.mubr.f32.mxu0 0.0
      %4277 = vmatmul.mubr.f32.gmra.mrb[0].mxu0 %v476
      %v4278 = vpop.f32.mrb[0].mxu0
      %v4279 = vadd.f32 %v4051, %v4278
      %v4280 = vpop.f32.mrb[0].mxu0
      %4281 = vmatprep.mubr.f32.mxu0 0.0
      %4282 = vmatmul.mubr.f32.gmra.mrb[0].mxu0 %v478
      %v4283 = vpop.f32.mrb[0].mxu0
      %v4284 = vadd.f32 %v4056, %v4283
      %v4285 = vpop.f32.mrb[0].mxu0
      %4286 = vmatprep.mubr.f32.mxu0 0.0
      %4287 = vmatmul.mubr.f32.gmra.mrb[0].mxu0 %v480
      %v4288 = vpop.f32.mrb[0].mxu0
      %v4289 = vadd.f32 %v4061, %v4288
      %v4290 = vpop.f32.mrb[0].mxu0
      %4291 = vmatprep.mubr.f32.mxu0 0.0
      %4292 = vmatmul.mubr.f32.gmra.mrb[0].mxu0 %v482
      %v4293 = vpop.f32.mrb[0].mxu0
      %v4294 = vadd.f32 %v4066, %v4293
      %v4295 = vpop.f32.mrb[0].mxu0
      %4296 = vmatprep.mubr.f32.mxu0 0.0
      %4297 = vmatmul.mubr.f32.gmra.mrb[0].mxu0 %v484
      %v4298 = vpop.f32.mrb[0].mxu0
      %v4299 = vadd.f32 %v4071, %v4298
      %v4300 = vpop.f32.mrb[0].mxu0
      %4301 = vmatprep.mubr.f32.mxu0 0.0
      %4302 = vmatmul.mubr.f32.gmra.mrb[0].mxu0 %v486
      %v4303 = vpop.f32.mrb[0].mxu0
      %v4304 = vadd.f32 %v4076, %v4303
      %v4305 = vpop.f32.mrb[0].mxu0
      %4306 = vmatprep.mubr.f32.mxu0 0.0
      %4307 = vmatmul.mubr.f32.gmra.mrb[0].mxu0 %v488
      %v4308 = vpop.f32.mrb[0].mxu0
      %v4309 = vadd.f32 %v4081, %v4308
      %v4310 = vpop.f32.mrb[0].mxu0
      %4311 = vmatprep.mubr.f32.mxu0 0.0
      %4312 = vmatmul.mubr.f32.gmra.mrb[0].mxu0 %v490
      %v4313 = vpop.f32.mrb[0].mxu0
      %v4314 = vadd.f32 %v4086, %v4313
      %v4315 = vpop.f32.mrb[0].mxu0
      %4316 = vmatprep.mubr.f32.mxu0 0.0
      %4317 = vmatmul.mubr.f32.gmra.mrb[0].mxu0 %v492
      %v4318 = vpop.f32.mrb[0].mxu0
      %v4319 = vadd.f32 %v4091, %v4318
      %v4320 = vpop.f32.mrb[0].mxu0
      %4321 = vmatprep.mubr.f32.mxu0 0.0
      %4322 = vmatmul.mubr.f32.gmra.mrb[0].mxu0 %v494
      %v4323 = vpop.f32.mrb[0].mxu0
      %v4324 = vadd.f32 %v4096, %v4323
      %v4325 = vpop.f32.mrb[0].mxu0
      %4326 = vmatprep.mubr.f32.mxu0 0.0
      %4327 = vmatmul.mubr.f32.gmra.mrb[0].mxu0 %v496
      %v4328 = vpop.f32.mrb[0].mxu0
      %v4329 = vadd.f32 %v4101, %v4328
      %v4330 = vpop.f32.mrb[0].mxu0
      %4331 = vmatprep.mubr.f32.mxu0 0.0
      %4332 = vmatmul.mubr.f32.gmra.mrb[0].mxu0 %v498
      %v4333 = vpop.f32.mrb[0].mxu0
      %v4334 = vadd.f32 %v4106, %v4333
      %v4335 = vpop.f32.mrb[0].mxu0
      %4336 = vmatprep.mubr.f32.mxu0 0.0
      %4337 = vmatmul.mubr.f32.gmra.mrb[0].mxu0 %v500
      %v4338 = vpop.f32.mrb[0].mxu0
      %v4339 = vadd.f32 %v4111, %v4338
      %v4340 = vpop.f32.mrb[0].mxu0
      %4341 = vmatprep.mubr.f32.mxu0 0.0
      %4342 = vmatmul.mubr.f32.gmra.mrb[0].mxu0 %v502
      %v4343 = vpop.f32.mrb[0].mxu0
      %v4344 = vadd.f32 %v4116, %v4343
      %v4345 = vpop.f32.mrb[0].mxu0
      %4346 = vmatprep.mubr.f32.mxu0 0.0
      %4347 = vmatmul.mubr.f32.gmra.mrb[0].mxu0 %v504
      %v4348 = vpop.f32.mrb[0].mxu0
      %v4349 = vadd.f32 %v4121, %v4348
      %v4350 = vpop.f32.mrb[0].mxu0
      %4351 = vmatprep.mubr.f32.mxu0 0.0
      %4352 = vmatmul.mubr.f32.gmra.mrb[0].mxu0 %v506
      %v4353 = vpop.f32.mrb[0].mxu0
      %v4354 = vadd.f32 %v4126, %v4353
      %v4355 = vpop.f32.mrb[0].mxu0
      %4356 = vmatprep.mubr.f32.mxu0 0.0
      %4357 = vmatmul.mubr.f32.gmra.mrb[0].mxu0 %v1305
      %v4358 = vpop.f32.mrb[0].mxu0
      %v4359 = vadd.f32 %v4131, %v4358
      %v4360 = vpop.f32.mrb[0].mxu0
      %4361 = vmatprep.mubr.f32.mxu0 0.0
      %4362 = vmatmul.mubr.f32.gmra.mrb[0].mxu0 %v1307
      %v4363 = vpop.f32.mrb[0].mxu0
      %v4364 = vadd.f32 %v4136, %v4363
      %v4365 = vpop.f32.mrb[0].mxu0
      %4366 = vdwg.mxu0
      %s4367 = scalar_lea.vmem %s238, 56
      %v4368 = vld [vmem:[%s4367] sm:$0xf]
      %v4370 = vsel %vm508, %v4368, 0
      %4372 = vmatprep.subr.mxu0 0.0
      %4373 = vmatpush1.msra.mxu0 %v4370
      %4374 = vmatprep.subr.mxu0 0.0
      %4375 = vmatpush1.msra.mxu0 0.0
      %4376 = vmatprep.subr.mxu0 0.0
      %4377 = vmatpush1.msra.mxu0 0.0
      %4378 = vmatprep.subr.mxu0 0.0
      %4379 = vmatpush1.msra.mxu0 0.0
      %4380 = vmatprep.subr.mxu0 0.0
      %4381 = vmatpush1.msra.mxu0 0.0
      %4382 = vmatprep.subr.mxu0 0.0
      %4383 = vmatpush1.msra.mxu0 0.0
      %4384 = vmatprep.subr.mxu0 0.0
      %4385 = vmatpush1.msra.mxu0 0.0
      %4386 = vmatprep.subr.mxu0 0.0
      %4387 = vmatpush1.msra.mxu0 0.0
      %4388 = vmatprep.subr.mxu0 0.0
      %4389 = vmatpush1.msra.mxu0 0.0
      %4390 = vmatprep.subr.mxu0 0.0
      %4391 = vmatpush1.msra.mxu0 0.0
      %4392 = vmatprep.subr.mxu0 0.0
      %4393 = vmatpush1.msra.mxu0 0.0
      %4394 = vmatprep.subr.mxu0 0.0
      %4395 = vmatpush1.msra.mxu0 0.0
      %4396 = vmatprep.subr.mxu0 0.0
      %4397 = vmatpush1.msra.mxu0 0.0
      %4398 = vmatprep.subr.mxu0 0.0
      %4399 = vmatpush1.msra.mxu0 0.0
      %4400 = vmatprep.subr.mxu0 0.0
      %4401 = vmatpush1.msra.mxu0 0.0
      %4402 = vmatprep.subr.mxu0 0.0
      %4403 = vmatpush1.msra.mxu0 0.0
      %4404 = vmatprep.subr.mxu0 0.0
      %4405 = vmatpush1.msra.mxu0 0.0
      %4406 = vmatprep.subr.mxu0 0.0
      %4407 = vmatpush1.msra.mxu0 0.0
      %4408 = vmatprep.subr.mxu0 0.0
      %4409 = vmatpush1.msra.mxu0 0.0
      %4410 = vmatprep.subr.mxu0 0.0
      %4411 = vmatpush1.msra.mxu0 0.0
      %4412 = vmatprep.subr.mxu0 0.0
      %4413 = vmatpush1.msra.mxu0 0.0
      %4414 = vmatprep.subr.mxu0 0.0
      %4415 = vmatpush1.msra.mxu0 0.0
      %4416 = vmatprep.subr.mxu0 0.0
      %4417 = vmatpush1.msra.mxu0 0.0
      %4418 = vmatprep.subr.mxu0 0.0
      %4419 = vmatpush1.msra.mxu0 0.0
      %4420 = vmatprep.subr.mxu0 0.0
      %4421 = vmatpush1.msra.mxu0 0.0
      %4422 = vmatprep.subr.mxu0 0.0
      %4423 = vmatpush1.msra.mxu0 0.0
      %4424 = vmatprep.subr.mxu0 0.0
      %4425 = vmatpush1.msra.mxu0 0.0
      %4426 = vmatprep.subr.mxu0 0.0
      %4427 = vmatpush1.msra.mxu0 0.0
      %4428 = vmatprep.subr.mxu0 0.0
      %4429 = vmatpush1.msra.mxu0 0.0
      %4430 = vmatprep.subr.mxu0 0.0
      %4431 = vmatpush1.msra.mxu0 0.0
      %4432 = vmatprep.subr.mxu0 0.0
      %4433 = vmatpush1.msra.mxu0 0.0
      %4434 = vmatprep.subr.mxu0 0.0
      %4435 = vmatpush1.msra.mxu0 0.0
      %4436 = vmatprep.mubr.f32.mxu0 0.0
      %4437 = vmatmul.mubr.f32.gmra.mrb[0].mxu0 %v452
      %v4438 = vpop.f32.mrb[0].mxu0
      %v4439 = vadd.f32 0.0, %v4438
      %v4440 = vpop.f32.mrb[0].mxu0
      %4441 = vmatprep.mubr.f32.mxu0 0.0
      %4442 = vmatmul.mubr.f32.gmra.mrb[0].mxu0 %v454
      %v4443 = vpop.f32.mrb[0].mxu0
      %v4444 = vadd.f32 0.0, %v4443
      %v4445 = vpop.f32.mrb[0].mxu0
      %4446 = vmatprep.mubr.f32.mxu0 0.0
      %4447 = vmatmul.mubr.f32.gmra.mrb[0].mxu0 %v456
      %v4448 = vpop.f32.mrb[0].mxu0
      %v4449 = vadd.f32 0.0, %v4448
      %v4450 = vpop.f32.mrb[0].mxu0
      %4451 = vmatprep.mubr.f32.mxu0 0.0
      %4452 = vmatmul.mubr.f32.gmra.mrb[0].mxu0 %v458
      %v4453 = vpop.f32.mrb[0].mxu0
      %v4454 = vadd.f32 0.0, %v4453
      %v4455 = vpop.f32.mrb[0].mxu0
      %4456 = vmatprep.mubr.f32.mxu0 0.0
      %4457 = vmatmul.mubr.f32.gmra.mrb[0].mxu0 %v460
      %v4458 = vpop.f32.mrb[0].mxu0
      %v4459 = vadd.f32 0.0, %v4458
      %v4460 = vpop.f32.mrb[0].mxu0
      %4461 = vmatprep.mubr.f32.mxu0 0.0
      %4462 = vmatmul.mubr.f32.gmra.mrb[0].mxu0 %v462
      %v4463 = vpop.f32.mrb[0].mxu0
      %v4464 = vadd.f32 0.0, %v4463
      %v4465 = vpop.f32.mrb[0].mxu0
      %4466 = vmatprep.mubr.f32.mxu0 0.0
      %4467 = vmatmul.mubr.f32.gmra.mrb[0].mxu0 %v464
      %v4468 = vpop.f32.mrb[0].mxu0
      %v4469 = vadd.f32 0.0, %v4468
      %v4470 = vpop.f32.mrb[0].mxu0
      %4471 = vmatprep.mubr.f32.mxu0 0.0
      %4472 = vmatmul.mubr.f32.gmra.mrb[0].mxu0 %v466
      %v4473 = vpop.f32.mrb[0].mxu0
      %v4474 = vadd.f32 0.0, %v4473
      %v4475 = vpop.f32.mrb[0].mxu0
      %4476 = vmatprep.mubr.f32.mxu0 0.0
      %4477 = vmatmul.mubr.f32.gmra.mrb[0].mxu0 %v468
      %v4478 = vpop.f32.mrb[0].mxu0
      %v4479 = vadd.f32 0.0, %v4478
      %v4480 = vpop.f32.mrb[0].mxu0
      %4481 = vmatprep.mubr.f32.mxu0 0.0
      %4482 = vmatmul.mubr.f32.gmra.mrb[0].mxu0 %v470
      %v4483 = vpop.f32.mrb[0].mxu0
      %v4484 = vadd.f32 0.0, %v4483
      %v4485 = vpop.f32.mrb[0].mxu0
      %4486 = vmatprep.mubr.f32.mxu0 0.0
      %4487 = vmatmul.mubr.f32.gmra.mrb[0].mxu0 %v472
      %v4488 = vpop.f32.mrb[0].mxu0
      %v4489 = vadd.f32 0.0, %v4488
      %v4490 = vpop.f32.mrb[0].mxu0
      %4491 = vmatprep.mubr.f32.mxu0 0.0
      %4492 = vmatmul.mubr.f32.gmra.mrb[0].mxu0 %v474
      %v4493 = vpop.f32.mrb[0].mxu0
      %v4494 = vadd.f32 0.0, %v4493
      %v4495 = vpop.f32.mrb[0].mxu0
      %4496 = vmatprep.mubr.f32.mxu0 0.0
      %4497 = vmatmul.mubr.f32.gmra.mrb[0].mxu0 %v476
      %v4498 = vpop.f32.mrb[0].mxu0
      %v4499 = vadd.f32 0.0, %v4498
      %v4500 = vpop.f32.mrb[0].mxu0
      %4501 = vmatprep.mubr.f32.mxu0 0.0
      %4502 = vmatmul.mubr.f32.gmra.mrb[0].mxu0 %v478
      %v4503 = vpop.f32.mrb[0].mxu0
      %v4504 = vadd.f32 0.0, %v4503
      %v4505 = vpop.f32.mrb[0].mxu0
      %4506 = vmatprep.mubr.f32.mxu0 0.0
      %4507 = vmatmul.mubr.f32.gmra.mrb[0].mxu0 %v480
      %v4508 = vpop.f32.mrb[0].mxu0
      %v4509 = vadd.f32 0.0, %v4508
      %v4510 = vpop.f32.mrb[0].mxu0
      %4511 = vmatprep.mubr.f32.mxu0 0.0
      %4512 = vmatmul.mubr.f32.gmra.mrb[0].mxu0 %v482
      %v4513 = vpop.f32.mrb[0].mxu0
      %v4514 = vadd.f32 0.0, %v4513
      %v4515 = vpop.f32.mrb[0].mxu0
      %4516 = vmatprep.mubr.f32.mxu0 0.0
      %4517 = vmatmul.mubr.f32.gmra.mrb[0].mxu0 %v484
      %v4518 = vpop.f32.mrb[0].mxu0
      %v4519 = vadd.f32 0.0, %v4518
      %v4520 = vpop.f32.mrb[0].mxu0
      %4521 = vmatprep.mubr.f32.mxu0 0.0
      %4522 = vmatmul.mubr.f32.gmra.mrb[0].mxu0 %v486
      %v4523 = vpop.f32.mrb[0].mxu0
      %v4524 = vadd.f32 0.0, %v4523
      %v4525 = vpop.f32.mrb[0].mxu0
      %4526 = vmatprep.mubr.f32.mxu0 0.0
      %4527 = vmatmul.mubr.f32.gmra.mrb[0].mxu0 %v488
      %v4528 = vpop.f32.mrb[0].mxu0
      %v4529 = vadd.f32 0.0, %v4528
      %v4530 = vpop.f32.mrb[0].mxu0
      %4531 = vmatprep.mubr.f32.mxu0 0.0
      %4532 = vmatmul.mubr.f32.gmra.mrb[0].mxu0 %v490
      %v4533 = vpop.f32.mrb[0].mxu0
      %v4534 = vadd.f32 0.0, %v4533
      %v4535 = vpop.f32.mrb[0].mxu0
      %4536 = vmatprep.mubr.f32.mxu0 0.0
      %4537 = vmatmul.mubr.f32.gmra.mrb[0].mxu0 %v492
      %v4538 = vpop.f32.mrb[0].mxu0
      %v4539 = vadd.f32 0.0, %v4538
      %v4540 = vpop.f32.mrb[0].mxu0
      %4541 = vmatprep.mubr.f32.mxu0 0.0
      %4542 = vmatmul.mubr.f32.gmra.mrb[0].mxu0 %v494
      %v4543 = vpop.f32.mrb[0].mxu0
      %v4544 = vadd.f32 0.0, %v4543
      %v4545 = vpop.f32.mrb[0].mxu0
      %4546 = vmatprep.mubr.f32.mxu0 0.0
      %4547 = vmatmul.mubr.f32.gmra.mrb[0].mxu0 %v496
      %v4548 = vpop.f32.mrb[0].mxu0
      %v4549 = vadd.f32 0.0, %v4548
      %v4550 = vpop.f32.mrb[0].mxu0
      %4551 = vmatprep.mubr.f32.mxu0 0.0
      %4552 = vmatmul.mubr.f32.gmra.mrb[0].mxu0 %v498
      %v4553 = vpop.f32.mrb[0].mxu0
      %v4554 = vadd.f32 0.0, %v4553
      %v4555 = vpop.f32.mrb[0].mxu0
      %4556 = vmatprep.mubr.f32.mxu0 0.0
      %4557 = vmatmul.mubr.f32.gmra.mrb[0].mxu0 %v500
      %v4558 = vpop.f32.mrb[0].mxu0
      %v4559 = vadd.f32 0.0, %v4558
      %v4560 = vpop.f32.mrb[0].mxu0
      %4561 = vmatprep.mubr.f32.mxu0 0.0
      %4562 = vmatmul.mubr.f32.gmra.mrb[0].mxu0 %v502
      %v4563 = vpop.f32.mrb[0].mxu0
      %v4564 = vadd.f32 0.0, %v4563
      %v4565 = vpop.f32.mrb[0].mxu0
      %4566 = vmatprep.mubr.f32.mxu0 0.0
      %4567 = vmatmul.mubr.f32.gmra.mrb[0].mxu0 %v504
      %v4568 = vpop.f32.mrb[0].mxu0
      %v4569 = vadd.f32 0.0, %v4568
      %v4570 = vpop.f32.mrb[0].mxu0
      %4571 = vmatprep.mubr.f32.mxu0 0.0
      %4572 = vmatmul.mubr.f32.gmra.mrb[0].mxu0 %v506
      %v4573 = vpop.f32.mrb[0].mxu0
      %v4574 = vadd.f32 0.0, %v4573
      %v4575 = vpop.f32.mrb[0].mxu0
      %4576 = vmatprep.mubr.f32.mxu0 0.0
      %4577 = vmatmul.mubr.f32.gmra.mrb[0].mxu0 %v1305
      %v4578 = vpop.f32.mrb[0].mxu0
      %v4579 = vadd.f32 0.0, %v4578
      %v4580 = vpop.f32.mrb[0].mxu0
      %4581 = vmatprep.mubr.f32.mxu0 0.0
      %4582 = vmatmul.mubr.f32.gmra.mrb[0].mxu0 %v1307
      %v4583 = vpop.f32.mrb[0].mxu0
      %v4584 = vadd.f32 0.0, %v4583
      %v4585 = vpop.f32.mrb[0].mxu0
      %4586 = vmatprep.mubr.f32.mxu0 0.0
      %4587 = vmatmul.mubr.f32.gmra.mrb[0].mxu0 %v3578
      %v4588 = vpop.f32.mrb[0].mxu0
      %v4589 = vadd.f32 0.0, %v4588
      %v4590 = vpop.f32.mrb[0].mxu0
      %4591 = vmatprep.mubr.f32.mxu0 0.0
      %4592 = vmatmul.mubr.f32.gmra.mrb[0].mxu0 %v3580
      %v4593 = vpop.f32.mrb[0].mxu0
      %v4594 = vadd.f32 0.0, %v4593
      %v4595 = vpop.f32.mrb[0].mxu0
      %4596 = vdwg.mxu0
      %v4597 = vadd.f32 %v4209, %v4439
      %v4598 = vadd.f32 %v4214, %v4444
      %v4599 = vadd.f32 %v4219, %v4449
      %v4600 = vadd.f32 %v4224, %v4454
      %v4601 = vadd.f32 %v4229, %v4459
      %v4602 = vadd.f32 %v4234, %v4464
      %v4603 = vadd.f32 %v4239, %v4469
      %v4604 = vadd.f32 %v4244, %v4474
      %v4605 = vadd.f32 %v4249, %v4479
      %v4606 = vadd.f32 %v4254, %v4484
      %v4607 = vadd.f32 %v4259, %v4489
      %v4608 = vadd.f32 %v4264, %v4494
      %v4609 = vadd.f32 %v4269, %v4499
      %v4610 = vadd.f32 %v4274, %v4504
      %v4611 = vadd.f32 %v4279, %v4509
      %v4612 = vadd.f32 %v4284, %v4514
      %v4613 = vadd.f32 %v4289, %v4519
      %v4614 = vadd.f32 %v4294, %v4524
      %v4615 = vadd.f32 %v4299, %v4529
      %v4616 = vadd.f32 %v4304, %v4534
      %v4617 = vadd.f32 %v4309, %v4539
      %v4618 = vadd.f32 %v4314, %v4544
      %v4619 = vadd.f32 %v4319, %v4549
      %v4620 = vadd.f32 %v4324, %v4554
      %v4621 = vadd.f32 %v4329, %v4559
      %v4622 = vadd.f32 %v4334, %v4564
      %v4623 = vadd.f32 %v4339, %v4569
      %v4624 = vadd.f32 %v4344, %v4574
      %v4625 = vadd.f32 %v4349, %v4579
      %v4626 = vadd.f32 %v4354, %v4584
      %v4627 = vadd.f32 %v4359, %v4589
      %v4628 = vadd.f32 %v4364, %v4594
      %s4629 = scalar_lea.vmem %s238, 60
      %v4630 = vld [vmem:[%s4629] sm:$0xf]
      %v4631 = vrot.slane %v308, 2
      %v4632 = vrot.slane %v309, 2
      %v4633 = vsel %vm1643, %v4631, %v4632
      %v4634 = vrot.slane %v310, 2
      %v4635 = vsel %vm1643, %v4632, %v4634
      %v4636 = vsel %vm443, %v4633, 0
      %v4638 = vsel %vm443, %v4635, 0
      %v4641 = vsel %vm508, %v4630, 0
      %4643 = vmatprep.subr.mxu0 0.0
      %4644 = vmatpush1.msra.mxu0 %v4641
      %4645 = vmatprep.subr.mxu0 0.0
      %4646 = vmatpush1.msra.mxu0 0.0
      %4647 = vmatprep.subr.mxu0 0.0
      %4648 = vmatpush1.msra.mxu0 0.0
      %4649 = vmatprep.subr.mxu0 0.0
      %4650 = vmatpush1.msra.mxu0 0.0
      %4651 = vmatprep.subr.mxu0 0.0
      %4652 = vmatpush1.msra.mxu0 0.0
      %4653 = vmatprep.subr.mxu0 0.0
      %4654 = vmatpush1.msra.mxu0 0.0
      %4655 = vmatprep.subr.mxu0 0.0
      %4656 = vmatpush1.msra.mxu0 0.0
      %4657 = vmatprep.subr.mxu0 0.0
      %4658 = vmatpush1.msra.mxu0 0.0
      %4659 = vmatprep.subr.mxu0 0.0
      %4660 = vmatpush1.msra.mxu0 0.0
      %4661 = vmatprep.subr.mxu0 0.0
      %4662 = vmatpush1.msra.mxu0 0.0
      %4663 = vmatprep.subr.mxu0 0.0
      %4664 = vmatpush1.msra.mxu0 0.0
      %4665 = vmatprep.subr.mxu0 0.0
      %4666 = vmatpush1.msra.mxu0 0.0
      %4667 = vmatprep.subr.mxu0 0.0
      %4668 = vmatpush1.msra.mxu0 0.0
      %4669 = vmatprep.subr.mxu0 0.0
      %4670 = vmatpush1.msra.mxu0 0.0
      %4671 = vmatprep.subr.mxu0 0.0
      %4672 = vmatpush1.msra.mxu0 0.0
      %4673 = vmatprep.subr.mxu0 0.0
      %4674 = vmatpush1.msra.mxu0 0.0
      %4675 = vmatprep.subr.mxu0 0.0
      %4676 = vmatpush1.msra.mxu0 0.0
      %4677 = vmatprep.subr.mxu0 0.0
      %4678 = vmatpush1.msra.mxu0 0.0
      %4679 = vmatprep.subr.mxu0 0.0
      %4680 = vmatpush1.msra.mxu0 0.0
      %4681 = vmatprep.subr.mxu0 0.0
      %4682 = vmatpush1.msra.mxu0 0.0
      %4683 = vmatprep.subr.mxu0 0.0
      %4684 = vmatpush1.msra.mxu0 0.0
      %4685 = vmatprep.subr.mxu0 0.0
      %4686 = vmatpush1.msra.mxu0 0.0
      %4687 = vmatprep.subr.mxu0 0.0
      %4688 = vmatpush1.msra.mxu0 0.0
      %4689 = vmatprep.subr.mxu0 0.0
      %4690 = vmatpush1.msra.mxu0 0.0
      %4691 = vmatprep.subr.mxu0 0.0
      %4692 = vmatpush1.msra.mxu0 0.0
      %4693 = vmatprep.subr.mxu0 0.0
      %4694 = vmatpush1.msra.mxu0 0.0
      %4695 = vmatprep.subr.mxu0 0.0
      %4696 = vmatpush1.msra.mxu0 0.0
      %4697 = vmatprep.subr.mxu0 0.0
      %4698 = vmatpush1.msra.mxu0 0.0
      %4699 = vmatprep.subr.mxu0 0.0
      %4700 = vmatpush1.msra.mxu0 0.0
      %4701 = vmatprep.subr.mxu0 0.0
      %4702 = vmatpush1.msra.mxu0 0.0
      %4703 = vmatprep.subr.mxu0 0.0
      %4704 = vmatpush1.msra.mxu0 0.0
      %4705 = vmatprep.subr.mxu0 0.0
      %4706 = vmatpush1.msra.mxu0 0.0
      %4707 = vmatprep.mubr.f32.mxu0 0.0
      %4708 = vmatmul.mubr.f32.gmra.mrb[0].mxu0 %v1732
      %v4709 = vpop.f32.mrb[0].mxu0
      %v4710 = vadd.f32 0.0, %v4709
      %v4711 = vpop.f32.mrb[0].mxu0
      %4712 = vmatprep.mubr.f32.mxu0 0.0
      %4713 = vmatmul.mubr.f32.gmra.mrb[0].mxu0 %v1734
      %v4714 = vpop.f32.mrb[0].mxu0
      %v4715 = vadd.f32 0.0, %v4714
      %v4716 = vpop.f32.mrb[0].mxu0
      %4717 = vmatprep.mubr.f32.mxu0 0.0
      %4718 = vmatmul.mubr.f32.gmra.mrb[0].mxu0 %v1736
      %v4719 = vpop.f32.mrb[0].mxu0
      %v4720 = vadd.f32 0.0, %v4719
      %v4721 = vpop.f32.mrb[0].mxu0
      %4722 = vmatprep.mubr.f32.mxu0 0.0
      %4723 = vmatmul.mubr.f32.gmra.mrb[0].mxu0 %v1738
      %v4724 = vpop.f32.mrb[0].mxu0
      %v4725 = vadd.f32 0.0, %v4724
      %v4726 = vpop.f32.mrb[0].mxu0
      %4727 = vmatprep.mubr.f32.mxu0 0.0
      %4728 = vmatmul.mubr.f32.gmra.mrb[0].mxu0 %v1740
      %v4729 = vpop.f32.mrb[0].mxu0
      %v4730 = vadd.f32 0.0, %v4729
      %v4731 = vpop.f32.mrb[0].mxu0
      %4732 = vmatprep.mubr.f32.mxu0 0.0
      %4733 = vmatmul.mubr.f32.gmra.mrb[0].mxu0 %v1742
      %v4734 = vpop.f32.mrb[0].mxu0
      %v4735 = vadd.f32 0.0, %v4734
      %v4736 = vpop.f32.mrb[0].mxu0
      %4737 = vmatprep.mubr.f32.mxu0 0.0
      %4738 = vmatmul.mubr.f32.gmra.mrb[0].mxu0 %v1744
      %v4739 = vpop.f32.mrb[0].mxu0
      %v4740 = vadd.f32 0.0, %v4739
      %v4741 = vpop.f32.mrb[0].mxu0
      %4742 = vmatprep.mubr.f32.mxu0 0.0
      %4743 = vmatmul.mubr.f32.gmra.mrb[0].mxu0 %v1746
      %v4744 = vpop.f32.mrb[0].mxu0
      %v4745 = vadd.f32 0.0, %v4744
      %v4746 = vpop.f32.mrb[0].mxu0
      %4747 = vmatprep.mubr.f32.mxu0 0.0
      %4748 = vmatmul.mubr.f32.gmra.mrb[0].mxu0 %v1748
      %v4749 = vpop.f32.mrb[0].mxu0
      %v4750 = vadd.f32 0.0, %v4749
      %v4751 = vpop.f32.mrb[0].mxu0
      %4752 = vmatprep.mubr.f32.mxu0 0.0
      %4753 = vmatmul.mubr.f32.gmra.mrb[0].mxu0 %v1750
      %v4754 = vpop.f32.mrb[0].mxu0
      %v4755 = vadd.f32 0.0, %v4754
      %v4756 = vpop.f32.mrb[0].mxu0
      %4757 = vmatprep.mubr.f32.mxu0 0.0
      %4758 = vmatmul.mubr.f32.gmra.mrb[0].mxu0 %v1752
      %v4759 = vpop.f32.mrb[0].mxu0
      %v4760 = vadd.f32 0.0, %v4759
      %v4761 = vpop.f32.mrb[0].mxu0
      %4762 = vmatprep.mubr.f32.mxu0 0.0
      %4763 = vmatmul.mubr.f32.gmra.mrb[0].mxu0 %v1754
      %v4764 = vpop.f32.mrb[0].mxu0
      %v4765 = vadd.f32 0.0, %v4764
      %v4766 = vpop.f32.mrb[0].mxu0
      %4767 = vmatprep.mubr.f32.mxu0 0.0
      %4768 = vmatmul.mubr.f32.gmra.mrb[0].mxu0 %v1756
      %v4769 = vpop.f32.mrb[0].mxu0
      %v4770 = vadd.f32 0.0, %v4769
      %v4771 = vpop.f32.mrb[0].mxu0
      %4772 = vmatprep.mubr.f32.mxu0 0.0
      %4773 = vmatmul.mubr.f32.gmra.mrb[0].mxu0 %v1758
      %v4774 = vpop.f32.mrb[0].mxu0
      %v4775 = vadd.f32 0.0, %v4774
      %v4776 = vpop.f32.mrb[0].mxu0
      %4777 = vmatprep.mubr.f32.mxu0 0.0
      %4778 = vmatmul.mubr.f32.gmra.mrb[0].mxu0 %v1760
      %v4779 = vpop.f32.mrb[0].mxu0
      %v4780 = vadd.f32 0.0, %v4779
      %v4781 = vpop.f32.mrb[0].mxu0
      %4782 = vmatprep.mubr.f32.mxu0 0.0
      %4783 = vmatmul.mubr.f32.gmra.mrb[0].mxu0 %v1762
      %v4784 = vpop.f32.mrb[0].mxu0
      %v4785 = vadd.f32 0.0, %v4784
      %v4786 = vpop.f32.mrb[0].mxu0
      %4787 = vmatprep.mubr.f32.mxu0 0.0
      %4788 = vmatmul.mubr.f32.gmra.mrb[0].mxu0 %v1764
      %v4789 = vpop.f32.mrb[0].mxu0
      %v4790 = vadd.f32 0.0, %v4789
      %v4791 = vpop.f32.mrb[0].mxu0
      %4792 = vmatprep.mubr.f32.mxu0 0.0
      %4793 = vmatmul.mubr.f32.gmra.mrb[0].mxu0 %v1766
      %v4794 = vpop.f32.mrb[0].mxu0
      %v4795 = vadd.f32 0.0, %v4794
      %v4796 = vpop.f32.mrb[0].mxu0
      %4797 = vmatprep.mubr.f32.mxu0 0.0
      %4798 = vmatmul.mubr.f32.gmra.mrb[0].mxu0 %v1768
      %v4799 = vpop.f32.mrb[0].mxu0
      %v4800 = vadd.f32 0.0, %v4799
      %v4801 = vpop.f32.mrb[0].mxu0
      %4802 = vmatprep.mubr.f32.mxu0 0.0
      %4803 = vmatmul.mubr.f32.gmra.mrb[0].mxu0 %v1770
      %v4804 = vpop.f32.mrb[0].mxu0
      %v4805 = vadd.f32 0.0, %v4804
      %v4806 = vpop.f32.mrb[0].mxu0
      %4807 = vmatprep.mubr.f32.mxu0 0.0
      %4808 = vmatmul.mubr.f32.gmra.mrb[0].mxu0 %v1772
      %v4809 = vpop.f32.mrb[0].mxu0
      %v4810 = vadd.f32 0.0, %v4809
      %v4811 = vpop.f32.mrb[0].mxu0
      %4812 = vmatprep.mubr.f32.mxu0 0.0
      %4813 = vmatmul.mubr.f32.gmra.mrb[0].mxu0 %v1774
      %v4814 = vpop.f32.mrb[0].mxu0
      %v4815 = vadd.f32 0.0, %v4814
      %v4816 = vpop.f32.mrb[0].mxu0
      %4817 = vmatprep.mubr.f32.mxu0 0.0
      %4818 = vmatmul.mubr.f32.gmra.mrb[0].mxu0 %v1776
      %v4819 = vpop.f32.mrb[0].mxu0
      %v4820 = vadd.f32 0.0, %v4819
      %v4821 = vpop.f32.mrb[0].mxu0
      %4822 = vmatprep.mubr.f32.mxu0 0.0
      %4823 = vmatmul.mubr.f32.gmra.mrb[0].mxu0 %v1778
      %v4824 = vpop.f32.mrb[0].mxu0
      %v4825 = vadd.f32 0.0, %v4824
      %v4826 = vpop.f32.mrb[0].mxu0
      %4827 = vmatprep.mubr.f32.mxu0 0.0
      %4828 = vmatmul.mubr.f32.gmra.mrb[0].mxu0 %v1780
      %v4829 = vpop.f32.mrb[0].mxu0
      %v4830 = vadd.f32 0.0, %v4829
      %v4831 = vpop.f32.mrb[0].mxu0
      %4832 = vmatprep.mubr.f32.mxu0 0.0
      %4833 = vmatmul.mubr.f32.gmra.mrb[0].mxu0 %v1782
      %v4834 = vpop.f32.mrb[0].mxu0
      %v4835 = vadd.f32 0.0, %v4834
      %v4836 = vpop.f32.mrb[0].mxu0
      %4837 = vmatprep.mubr.f32.mxu0 0.0
      %4838 = vmatmul.mubr.f32.gmra.mrb[0].mxu0 %v1784
      %v4839 = vpop.f32.mrb[0].mxu0
      %v4840 = vadd.f32 0.0, %v4839
      %v4841 = vpop.f32.mrb[0].mxu0
      %4842 = vmatprep.mubr.f32.mxu0 0.0
      %4843 = vmatmul.mubr.f32.gmra.mrb[0].mxu0 %v1786
      %v4844 = vpop.f32.mrb[0].mxu0
      %v4845 = vadd.f32 0.0, %v4844
      %v4846 = vpop.f32.mrb[0].mxu0
      %4847 = vmatprep.mubr.f32.mxu0 0.0
      %4848 = vmatmul.mubr.f32.gmra.mrb[0].mxu0 %v2513
      %v4849 = vpop.f32.mrb[0].mxu0
      %v4850 = vadd.f32 0.0, %v4849
      %v4851 = vpop.f32.mrb[0].mxu0
      %4852 = vmatprep.mubr.f32.mxu0 0.0
      %4853 = vmatmul.mubr.f32.gmra.mrb[0].mxu0 %v2515
      %v4854 = vpop.f32.mrb[0].mxu0
      %v4855 = vadd.f32 0.0, %v4854
      %v4856 = vpop.f32.mrb[0].mxu0
      %4857 = vmatprep.mubr.f32.mxu0 0.0
      %4858 = vmatmul.mubr.f32.gmra.mrb[0].mxu0 %v4636
      %v4859 = vpop.f32.mrb[0].mxu0
      %v4860 = vadd.f32 0.0, %v4859
      %v4861 = vpop.f32.mrb[0].mxu0
      %4862 = vmatprep.mubr.f32.mxu0 0.0
      %4863 = vmatmul.mubr.f32.gmra.mrb[0].mxu0 %v4638
      %v4864 = vpop.f32.mrb[0].mxu0
      %v4865 = vadd.f32 0.0, %v4864
      %v4866 = vpop.f32.mrb[0].mxu0
      %4867 = vdwg.mxu0
      %v4868 = vadd.f32 %v4597, %v4710
      %v4869 = vadd.f32 %v4598, %v4715
      %v4870 = vadd.f32 %v4599, %v4720
      %v4871 = vadd.f32 %v4600, %v4725
      %v4872 = vadd.f32 %v4601, %v4730
      %v4873 = vadd.f32 %v4602, %v4735
      %v4874 = vadd.f32 %v4603, %v4740
      %v4875 = vadd.f32 %v4604, %v4745
      %v4876 = vadd.f32 %v4605, %v4750
      %v4877 = vadd.f32 %v4606, %v4755
      %v4878 = vadd.f32 %v4607, %v4760
      %v4879 = vadd.f32 %v4608, %v4765
      %v4880 = vadd.f32 %v4609, %v4770
      %v4881 = vadd.f32 %v4610, %v4775
      %v4882 = vadd.f32 %v4611, %v4780
      %v4883 = vadd.f32 %v4612, %v4785
      %v4884 = vadd.f32 %v4613, %v4790
      %v4885 = vadd.f32 %v4614, %v4795
      %v4886 = vadd.f32 %v4615, %v4800
      %v4887 = vadd.f32 %v4616, %v4805
      %v4888 = vadd.f32 %v4617, %v4810
      %v4889 = vadd.f32 %v4618, %v4815
      %v4890 = vadd.f32 %v4619, %v4820
      %v4891 = vadd.f32 %v4620, %v4825
      %v4892 = vadd.f32 %v4621, %v4830
      %v4893 = vadd.f32 %v4622, %v4835
      %v4894 = vadd.f32 %v4623, %v4840
      %v4895 = vadd.f32 %v4624, %v4845
      %v4896 = vadd.f32 %v4625, %v4850
      %v4897 = vadd.f32 %v4626, %v4855
      %v4898 = vadd.f32 %v4627, %v4860
      %v4899 = vadd.f32 %v4628, %v4865
      %v4900 = vadd.f32 %v4868, %v1573
      %v4901 = vadd.f32 %v4869, %v1573
      %v4902 = vadd.f32 %v4870, %v1573
      %v4903 = vadd.f32 %v4871, %v1573
      %v4904 = vadd.f32 %v4872, %v1573
      %v4905 = vadd.f32 %v4873, %v1573
      %v4906 = vadd.f32 %v4874, %v1573
      %v4907 = vadd.f32 %v4875, %v1573
      %v4908 = vadd.f32 %v4876, %v1573
      %v4909 = vadd.f32 %v4877, %v1573
      %v4910 = vadd.f32 %v4878, %v1573
      %v4911 = vadd.f32 %v4879, %v1573
      %v4912 = vadd.f32 %v4880, %v1573
      %v4913 = vadd.f32 %v4881, %v1573
      %v4914 = vadd.f32 %v4882, %v1573
      %v4915 = vadd.f32 %v4883, %v1573
      %v4916 = vadd.f32 %v4884, %v1573
      %v4917 = vadd.f32 %v4885, %v1573
      %v4918 = vadd.f32 %v4886, %v1573
      %v4919 = vadd.f32 %v4887, %v1573
      %v4920 = vadd.f32 %v4888, %v1573
      %v4921 = vadd.f32 %v4889, %v1573
      %v4922 = vadd.f32 %v4890, %v1573
      %v4923 = vadd.f32 %v4891, %v1573
      %v4924 = vadd.f32 %v4892, %v1573
      %v4925 = vadd.f32 %v4893, %v1573
      %v4926 = vadd.f32 %v4894, %v1573
      %v4927 = vadd.f32 %v4895, %v1573
      %v4928 = vadd.f32 %v4896, %v1573
      %v4929 = vadd.f32 %v4897, %v1573
      %v4930 = vadd.f32 %v4898, %v1573
      %v4931 = vadd.f32 %v4899, %v1573
      %s4932 = scalar_lea.vmem %s254, 768
      %4933 = vst.msk [vmem:[%s4932] sm:$0xff] %vm443, %v4900
      %4934 = vst.msk [vmem:[%s4932 + $0x8] sm:$0xff] %vm443, %v4901
      %4935 = vst.msk [vmem:[%s4932 + $0x10] sm:$0xff] %vm443, %v4902
      %4936 = vst.msk [vmem:[%s4932 + $0x18] sm:$0xff] %vm443, %v4903
      %4937 = vst.msk [vmem:[%s4932 + $0x20] sm:$0xff] %vm443, %v4904
      %4938 = vst.msk [vmem:[%s4932 + $0x28] sm:$0xff] %vm443, %v4905
      %4939 = vst.msk [vmem:[%s4932 + $0x30] sm:$0xff] %vm443, %v4906
      %4940 = vst.msk [vmem:[%s4932 + $0x38] sm:$0xff] %vm443, %v4907
      %4941 = vst.msk [vmem:[%s4932 + $0x40] sm:$0xff] %vm443, %v4908
      %4942 = vst.msk [vmem:[%s4932 + $0x48] sm:$0xff] %vm443, %v4909
      %4943 = vst.msk [vmem:[%s4932 + $0x50] sm:$0xff] %vm443, %v4910
      %4944 = vst.msk [vmem:[%s4932 + $0x58] sm:$0xff] %vm443, %v4911
      %4945 = vst.msk [vmem:[%s4932 + $0x60] sm:$0xff] %vm443, %v4912
      %4946 = vst.msk [vmem:[%s4932 + $0x68] sm:$0xff] %vm443, %v4913
      %4947 = vst.msk [vmem:[%s4932 + $0x70] sm:$0xff] %vm443, %v4914
      %4948 = vst.msk [vmem:[%s4932 + $0x78] sm:$0xff] %vm443, %v4915
      %4949 = vst.msk [vmem:[%s4932 + $0x80] sm:$0xff] %vm443, %v4916
      %4950 = vst.msk [vmem:[%s4932 + $0x88] sm:$0xff] %vm443, %v4917
      %4951 = vst.msk [vmem:[%s4932 + $0x90] sm:$0xff] %vm443, %v4918
      %4952 = vst.msk [vmem:[%s4932 + $0x98] sm:$0xff] %vm443, %v4919
      %4953 = vst.msk [vmem:[%s4932 + $0xa0] sm:$0xff] %vm443, %v4920
      %4954 = vst.msk [vmem:[%s4932 + $0xa8] sm:$0xff] %vm443, %v4921
      %4955 = vst.msk [vmem:[%s4932 + $0xb0] sm:$0xff] %vm443, %v4922
      %4956 = vst.msk [vmem:[%s4932 + $0xb8] sm:$0xff] %vm443, %v4923
      %4957 = vst.msk [vmem:[%s4932 + $0xc0] sm:$0xff] %vm443, %v4924
      %4958 = vst.msk [vmem:[%s4932 + $0xc8] sm:$0xff] %vm443, %v4925
      %4959 = vst.msk [vmem:[%s4932 + $0xd0] sm:$0xff] %vm443, %v4926
      %4960 = vst.msk [vmem:[%s4932 + $0xd8] sm:$0xff] %vm443, %v4927
      %4961 = vst.msk [vmem:[%s4932 + $0xe0] sm:$0xff] %vm443, %v4928
      %4962 = vst.msk [vmem:[%s4932 + $0xe8] sm:$0xff] %vm443, %v4929
      %4963 = vst.msk [vmem:[%s4932 + $0xf0] sm:$0xff] %vm443, %v4930
      %4964 = vst.msk [vmem:[%s4932 + $0xf8] sm:$0xff] %vm443, %v4931
      %s4965 = smul.u32 16, %s21
      %p4966 = scmp.lt.s32.totalorder %s19, 1
      %s4967 = scalar_select %p4966, %s19, 1
      %p4968 = scmp.lt.s32.totalorder %s4965, 15
      %s4969 = scalar_select %p4968, %s4965, 15
      %p4970 = scmp.lt.s32.totalorder %s20, 0
      %s4971 = scalar_select %p4970, %s20, 0
      %s4972 = smul.addr %s4969, 2
      %s4973 = sadd.s32 %s4971, %s4972
      %s4974 = smul.addr %s4967, 128
      %s4975 = sadd.s32 %s4973, %s4974
      %s4976 = smul.addr %s4975, 8
      %s4977 = scalar_lea.vmem %s3, %s4976
      // Predicated region
      $region33: #{tpu_custom_call.1} parent=31 // pred_check
        %p4978 = pneg %p135
      $region34: #{tpu_custom_call.1} parent=31 // pred_check_branch
        %4980 = sbr.rel (%p4978) target = $region36
      $region35: #{tpu_custom_call.1} parent=31 // pred_region
        %s4981 = smul.u32 16, %s21
      $region36: #{tpu_custom_call.1} parent=31 // pred_fallthru
        _
    $region32: #{tpu_custom_call.1} parent=5 // pred_fallthru
      _
    %p4982 = scmp.le.s32.totalorder 2, %s9
    // Predicated region
    $region37: #{tpu_custom_call.1} parent=5 // pred_check
      %p4983 = pneg %p4982
    $region38: #{tpu_custom_call.1} parent=5 // pred_check_branch
      %4985 = sbr.rel (%p4983) target = $region40
    $region39: #{tpu_custom_call.1} parent=5 // pred_region
      %s4986 = ssub.s32 %s9, 2
      // Predicated region
      $region41: #{tpu_custom_call.1} parent=39 // pred_check
        %p4987 = pneg %p141
      $region42: #{tpu_custom_call.1} parent=39 // pred_check_branch
        %4989 = sbr.rel (%p4987) target = $region44
      $region43: #{tpu_custom_call.1} parent=39 // pred_region
        %s4990 = smul.u32 16, %s24
        %p4991 = scmp.lt.s32.totalorder %s22, 1
        %s4992 = scalar_select %p4991, %s22, 1
        %p4993 = scmp.lt.s32.totalorder %s4990, 15
        %s4994 = scalar_select %p4993, %s4990, 15
        %p4995 = scmp.lt.s32.totalorder %s23, 0
        %s4996 = scalar_select %p4995, %s23, 0
        %s4997 = smul.addr %s4994, 2
        %s4998 = sadd.s32 %s4996, %s4997
        %s4999 = smul.addr %s4992, 128
        %s5000 = sadd.s32 %s4998, %s4999
        %s5001 = smul.addr %s5000, 8
        %s5002 = scalar_lea.vmem %s3, %s5001
      $region44: #{tpu_custom_call.1} parent=39 // pred_fallthru
        _
    $region40: #{tpu_custom_call.1} parent=5 // pred_fallthru
      _
  $region6: #{tpu_custom_call.1} parent=0 // loop_footer
    %s13 = sadd.s32 1, %s9
  $region7: #{tpu_custom_call.1} parent=0 // loop_footer_branch
    %8 = sbr.rel target = $region3
  $region8: #{tpu_custom_call.1} parent=0 // loop_exit
    _

</llo_original>
